<compile_context>
chip_gen: v7x
topology: tpu7x:2x2x1
jax: 0.10.0
libtpu: 0.0.40
codegen_flags: <defaults>
</compile_context>

<pallas_src>
import jax
import jax.numpy as jnp
from jax import lax
from jax.experimental import pallas as pl
from jax.experimental.pallas import tpu as pltpu


# ------------------------------ fused kernel ---------------------------------
def seq2seq_kernel(src2d_ref, trg0_ref,
                   w_ih_enc_ref, w_hh_enc_ref, b_enc_ref,
                   w_ih_dec_ref, w_hh_dec_ref, b_dec_ref,
                   w_fc_ref, b_fc_ref,
                   out_ref,
                   gx_scratch):
    T_trg, B, O = out_ref.shape
    H = w_hh_enc_ref.shape[0]
    TB = src2d_ref.shape[0]
    T_src = TB // B
    bf16 = jnp.bfloat16

    # ---- loop invariants, hoisted once (JAX does not CSE broadcast_in_dim) ----
    w_hh_enc = w_hh_enc_ref[...]                               # bf16 [H, 4H]
    w_ih_dec = w_ih_dec_ref[...]                               # bf16 [O, 4H]
    w_hh_dec = w_hh_dec_ref[...]                               # bf16 [H, 4H]
    w_fc = w_fc_ref[...]                                       # bf16 [H, O]
    b_dec = jnp.broadcast_to(b_dec_ref[...], (B, 4 * H))       # f32 (b_ih + b_hh)
    b_fc = jnp.broadcast_to(b_fc_ref[...], (B, O))             # f32
    iota = lax.broadcasted_iota(jnp.int32, (B, O), 1)

    # ---- encoder input projection hoisted: ONE batched MXU matmul (bias folded)
    gx_all = jnp.dot(src2d_ref[...].astype(bf16), w_ih_enc_ref[...],
                     preferred_element_type=jnp.float32) + b_enc_ref[...]
    gx_scratch[...] = gx_all                                   # [T_src*B, 4H] f32

    def gate_apply(gates, c):
        # PyTorch LSTM gate order: i, f, g, o
        i = jax.nn.sigmoid(gates[:, 0 * H:1 * H])
        f = jax.nn.sigmoid(gates[:, 1 * H:2 * H])
        g = jnp.tanh(gates[:, 2 * H:3 * H])
        o = jax.nn.sigmoid(gates[:, 3 * H:4 * H])
        c_new = f * c + i * g
        h_new = o * jnp.tanh(c_new)
        return h_new, c_new

    # -------------------------------- encoder --------------------------------
    def enc_body(t, carry):
        h, c = carry
        gx = gx_scratch[pl.ds(t * B, B), :]                    # [B, 4H] (x-proj + bias)
        gh = jnp.dot(h.astype(bf16), w_hh_enc, preferred_element_type=jnp.float32)
        return gate_apply(gx + gh, c)

    h0 = jnp.zeros((B, H), jnp.float32)
    c0 = jnp.zeros((B, H), jnp.float32)
    h, c = lax.fori_loop(0, T_src, enc_body, (h0, c0), unroll=True)

    # -------------------------------- decoder --------------------------------
    out_ref[0] = jnp.zeros((B, O), jnp.float32)                # only row 0; t>=1 overwritten

    def dec_body(t, carry):
        h, c, x = carry                                        # x: bf16 [B, O]
        h_b = h.astype(bf16)
        gx = jnp.dot(x, w_ih_dec, preferred_element_type=jnp.float32) + b_dec
        gh = jnp.dot(h_b, w_hh_dec, preferred_element_type=jnp.float32)
        h, c = gate_apply(gx + gh, c)
        logits = jnp.dot(h.astype(bf16), w_fc, preferred_element_type=jnp.float32) + b_fc
        out_ref[t + 1] = logits                                # VMEM-resident block
        # greedy top-1 -> one-hot next input (first-index tie-break = torch.argmax)
        maxv = jnp.max(logits, axis=-1, keepdims=True)
        idx = jnp.min(jnp.where(logits == maxv, iota, O), axis=-1, keepdims=True)
        x_next = (iota == idx).astype(bf16)
        return (h, c, x_next)

    lax.fori_loop(0, T_trg - 1, dec_body,
                  (h, c, trg0_ref[...].astype(bf16)), unroll=True)


# --------------------------------- wrapper -----------------------------------
def lstm_seq2seq_forward(src, trg, params):
    T_src, B, Din = src.shape
    T_trg, _, O = trg.shape
    H = params["w_hh_enc"].shape[0]
    bf16 = jnp.bfloat16

    # Layout plumbing only: flatten time*batch so the encoder input projection is
    # one big MXU matmul inside the kernel.  Weights pre-cast to bf16 once
    # (halves weight DMA; f32 accumulation inside the kernel).
    src2d = src.reshape(T_src * B, Din)

    return pl.pallas_call(
        seq2seq_kernel,
        out_shape=jax.ShapeDtypeStruct((T_trg, B, O), jnp.float32),
        in_specs=[pl.BlockSpec(memory_space=pltpu.MemorySpace.VMEM)] * 10,
        out_specs=pl.BlockSpec(memory_space=pltpu.MemorySpace.VMEM),
        scratch_shapes=[pltpu.VMEM((T_src * B, 4 * H), jnp.float32)],
    )(src2d, trg[0],
      params["w_ih_enc"].astype(bf16), params["w_hh_enc"].astype(bf16), params["b_enc"],
      params["w_ih_dec"].astype(bf16), params["w_hh_dec"].astype(bf16), params["b_dec"],
      params["w_fc"].astype(bf16), params["b_fc"])


# ----------------------------- deterministic init ----------------------------
def init_params(key, input_dim, hidden_dim, output_dim):
    # NOTE: PyTorch nn.LSTM stores weight_{ih,hh} as [4H, in] with two biases;
    # these params are the pre-transposed [in, 4H] form with a single summed bias.
    ks = jax.random.split(key, 8)
    s = 0.1
    return {
        "w_ih_enc": s * jax.random.normal(ks[0], (input_dim, 4 * hidden_dim), jnp.float32),
        "w_hh_enc": s * jax.random.normal(ks[1], (hidden_dim, 4 * hidden_dim), jnp.float32),
        "b_enc":    s * jax.random.normal(ks[2], (1, 4 * hidden_dim), jnp.float32),
        "w_ih_dec": s * jax.random.normal(ks[3], (output_dim, 4 * hidden_dim), jnp.float32),
        "w_hh_dec": s * jax.random.normal(ks[4], (hidden_dim, 4 * hidden_dim), jnp.float32),
        "b_dec":    s * jax.random.normal(ks[5], (1, 4 * hidden_dim), jnp.float32),
        "w_fc":     s * jax.random.normal(ks[6], (hidden_dim, output_dim), jnp.float32),
        "b_fc":     s * jax.random.normal(ks[7], (1, output_dim), jnp.float32),
    }


if __name__ == "__main__":
    B = 2            # batch
    SRC_LEN = 8      # encoder sequence length
    TRG_LEN = 8      # decoder sequence length
    DIN = 16         # encoder input feature dim
    H = 32           # hidden dim (encoder == decoder); 4H = 128 lanes
    O = 16           # decoder output dim (vocab / one-hot size)

    key = jax.random.PRNGKey(0)
    k_src, k_trg, k_par = jax.random.split(key, 3)

    src = jax.random.normal(k_src, (SRC_LEN, B, DIN), jnp.float32)
    # trg holds one-hot target vectors, shape [T, B, O]
    trg_ids = jax.random.randint(k_trg, (TRG_LEN, B), 0, O)
    trg = jax.nn.one_hot(trg_ids, O, dtype=jnp.float32)

    params = init_params(k_par, DIN, H, O)

    outputs = lstm_seq2seq_forward(src, trg, params)
    jax.block_until_ready(outputs)

    assert outputs.shape == (TRG_LEN, B, O)
    assert bool(jnp.all(outputs[0] == 0.0))
    assert bool(jnp.all(jnp.isfinite(outputs)))
    print("KERNEL_OK")
</pallas_src>

<mosaic_0001>
module attributes {stable_mosaic.version = 11 : i64} {
  func.func @seq2seq_kernel(%arg0: memref<16x16xf32, #tpu.memory_space<vmem>>, %arg1: memref<2x16xf32, #tpu.memory_space<vmem>>, %arg2: memref<16x128xbf16, #tpu.memory_space<vmem>>, %arg3: memref<32x128xbf16, #tpu.memory_space<vmem>>, %arg4: memref<1x128xf32, #tpu.memory_space<vmem>>, %arg5: memref<16x128xbf16, #tpu.memory_space<vmem>>, %arg6: memref<32x128xbf16, #tpu.memory_space<vmem>>, %arg7: memref<1x128xf32, #tpu.memory_space<vmem>>, %arg8: memref<32x16xbf16, #tpu.memory_space<vmem>>, %arg9: memref<1x16xf32, #tpu.memory_space<vmem>>, %arg10: memref<8x2x16xf32, #tpu.memory_space<vmem>>, %arg11: memref<16x128xf32, #tpu.memory_space<vmem>>) attributes {dimension_semantics = [], scalar_prefetch = 0 : i64, scratch_operands = 1 : i64, tpu.core_type = #tpu.core_type<tc>} {
    %c0 = arith.constant 0 : index
    %c0_0 = arith.constant 0 : index
    %0 = vector.load %arg3[%c0, %c0_0] : memref<32x128xbf16, #tpu.memory_space<vmem>>, vector<32x128xbf16>
    %c0_1 = arith.constant 0 : index
    %c0_2 = arith.constant 0 : index
    %1 = vector.load %arg5[%c0_1, %c0_2] : memref<16x128xbf16, #tpu.memory_space<vmem>>, vector<16x128xbf16>
    %c0_3 = arith.constant 0 : index
    %c0_4 = arith.constant 0 : index
    %2 = vector.load %arg6[%c0_3, %c0_4] : memref<32x128xbf16, #tpu.memory_space<vmem>>, vector<32x128xbf16>
    %c0_5 = arith.constant 0 : index
    %c0_6 = arith.constant 0 : index
    %3 = vector.load %arg8[%c0_5, %c0_6] : memref<32x16xbf16, #tpu.memory_space<vmem>>, vector<32x16xbf16>
    %c0_7 = arith.constant 0 : index
    %c0_8 = arith.constant 0 : index
    %4 = vector.load %arg7[%c0_7, %c0_8] : memref<1x128xf32, #tpu.memory_space<vmem>>, vector<1x128xf32>
    %5 = vector.shape_cast %4 : vector<1x128xf32> to vector<1x128xf32>
    %6 = vector.broadcast %5 : vector<1x128xf32> to vector<2x128xf32>
    %c0_9 = arith.constant 0 : index
    %c0_10 = arith.constant 0 : index
    %7 = vector.load %arg9[%c0_9, %c0_10] : memref<1x16xf32, #tpu.memory_space<vmem>>, vector<1x16xf32>
    %8 = vector.shape_cast %7 : vector<1x16xf32> to vector<1x16xf32>
    %9 = vector.broadcast %8 : vector<1x16xf32> to vector<2x16xf32>
    %10 = tpu.iota {dimensions = array<i32: 1>} : vector<2x16xi32>
    %c0_11 = arith.constant 0 : index
    %c0_12 = arith.constant 0 : index
    %11 = vector.load %arg0[%c0_11, %c0_12] : memref<16x16xf32, #tpu.memory_space<vmem>>, vector<16x16xf32>
    %12 = arith.truncf %11 : vector<16x16xf32> to vector<16x16xbf16>
    %c0_13 = arith.constant 0 : index
    %c0_14 = arith.constant 0 : index
    %13 = vector.load %arg2[%c0_13, %c0_14] : memref<16x128xbf16, #tpu.memory_space<vmem>>, vector<16x128xbf16>
    %cst = arith.constant dense<0.000000e+00> : vector<16x128xf32>
    %14 = tpu.matmul %12, %13, %cst {dimension_numbers = #tpu.dot_dimension_numbers<[1], [0], [0], [1], [0, 0, 1, 1], [], []>} : vector<16x16xbf16>, vector<16x128xbf16>, vector<16x128xf32> -> vector<16x128xf32>
    %c0_15 = arith.constant 0 : index
    %c0_16 = arith.constant 0 : index
    %15 = vector.load %arg4[%c0_15, %c0_16] : memref<1x128xf32, #tpu.memory_space<vmem>>, vector<1x128xf32>
    %16 = vector.broadcast %15 : vector<1x128xf32> to vector<16x128xf32>
    %17 = arith.addf %14, %16 : vector<16x128xf32>
    %c0_17 = arith.constant 0 : index
    %c0_18 = arith.constant 0 : index
    %18 = vector.load %arg11[%c0_17, %c0_18] : memref<16x128xf32, #tpu.memory_space<vmem>>, vector<16x128xf32>
    tpu.vector_store %arg11[%c0_17, %c0_18], %17 {strides = array<i32>} : memref<16x128xf32, #tpu.memory_space<vmem>>, vector<16x128xf32>,
    %cst_19 = arith.constant 0.000000e+00 : f32
    %19 = vector.broadcast %cst_19 : f32 to vector<2x32xf32>
    %cst_20 = arith.constant 0.000000e+00 : f32
    %20 = vector.broadcast %cst_20 : f32 to vector<2x32xf32>
    %c0_i32 = arith.constant 0 : i32
    %c2_i32 = arith.constant 2 : i32
    %21 = arith.muli %c0_i32, %c2_i32 : i32
    %22 = arith.index_cast %21 : i32 to index
    %c0_21 = arith.constant 0 : index
    %23 = vector.load %arg11[%22, %c0_21] : memref<16x128xf32, #tpu.memory_space<vmem>>, vector<2x128xf32>
    %24 = arith.truncf %19 : vector<2x32xf32> to vector<2x32xbf16>
    %cst_22 = arith.constant dense<0.000000e+00> : vector<2x128xf32>
    %25 = tpu.matmul %24, %0, %cst_22 {dimension_numbers = #tpu.dot_dimension_numbers<[1], [0], [0], [1], [0, 0, 1, 1], [], []>} : vector<2x32xbf16>, vector<32x128xbf16>, vector<2x128xf32> -> vector<2x128xf32>
    %26 = arith.addf %23, %25 : vector<2x128xf32>
    %27 = vector.extract_strided_slice %26 {offsets = [0, 0], sizes = [2, 32], strides = [1, 1]} : vector<2x128xf32> to vector<2x32xf32>
    %28 = arith.negf %27 : vector<2x32xf32>
    %29 = math.exp %28 : vector<2x32xf32>
    %cst_23 = arith.constant 1.000000e+00 : f32
    %30 = vector.broadcast %cst_23 : f32 to vector<2x32xf32>
    %31 = arith.addf %30, %29 : vector<2x32xf32>
    %32 = arith.divf %30, %31 : vector<2x32xf32>
    %33 = vector.extract_strided_slice %26 {offsets = [0, 32], sizes = [2, 32], strides = [1, 1]} : vector<2x128xf32> to vector<2x32xf32>
    %34 = arith.negf %33 : vector<2x32xf32>
    %35 = math.exp %34 : vector<2x32xf32>
    %cst_24 = arith.constant 1.000000e+00 : f32
    %36 = vector.broadcast %cst_24 : f32 to vector<2x32xf32>
    %37 = arith.addf %36, %35 : vector<2x32xf32>
    %38 = arith.divf %36, %37 : vector<2x32xf32>
    %39 = vector.extract_strided_slice %26 {offsets = [0, 64], sizes = [2, 32], strides = [1, 1]} : vector<2x128xf32> to vector<2x32xf32>
    %40 = math.tanh %39 : vector<2x32xf32>
    %41 = vector.extract_strided_slice %26 {offsets = [0, 96], sizes = [2, 32], strides = [1, 1]} : vector<2x128xf32> to vector<2x32xf32>
    %42 = arith.negf %41 : vector<2x32xf32>
    %43 = math.exp %42 : vector<2x32xf32>
    %cst_25 = arith.constant 1.000000e+00 : f32
    %44 = vector.broadcast %cst_25 : f32 to vector<2x32xf32>
    %45 = arith.addf %44, %43 : vector<2x32xf32>
    %46 = arith.divf %44, %45 : vector<2x32xf32>
    %47 = arith.mulf %38, %20 : vector<2x32xf32>
    %48 = arith.mulf %32, %40 : vector<2x32xf32>
    %49 = arith.addf %47, %48 : vector<2x32xf32>
    %50 = math.tanh %49 : vector<2x32xf32>
    %51 = arith.mulf %46, %50 : vector<2x32xf32>
    %c1_i32 = arith.constant 1 : i32
    %c2_i32_26 = arith.constant 2 : i32
    %52 = arith.muli %c1_i32, %c2_i32_26 : i32
    %53 = arith.index_cast %52 : i32 to index
    %c0_27 = arith.constant 0 : index
    %54 = vector.load %arg11[%53, %c0_27] : memref<16x128xf32, #tpu.memory_space<vmem>>, vector<2x128xf32>
    %55 = arith.truncf %51 : vector<2x32xf32> to vector<2x32xbf16>
    %cst_28 = arith.constant dense<0.000000e+00> : vector<2x128xf32>
    %56 = tpu.matmul %55, %0, %cst_28 {dimension_numbers = #tpu.dot_dimension_numbers<[1], [0], [0], [1], [0, 0, 1, 1], [], []>} : vector<2x32xbf16>, vector<32x128xbf16>, vector<2x128xf32> -> vector<2x128xf32>
    %57 = arith.addf %54, %56 : vector<2x128xf32>
    %58 = vector.extract_strided_slice %57 {offsets = [0, 0], sizes = [2, 32], strides = [1, 1]} : vector<2x128xf32> to vector<2x32xf32>
    %59 = arith.negf %58 : vector<2x32xf32>
    %60 = math.exp %59 : vector<2x32xf32>
    %cst_29 = arith.constant 1.000000e+00 : f32
    %61 = vector.broadcast %cst_29 : f32 to vector<2x32xf32>
    %62 = arith.addf %61, %60 : vector<2x32xf32>
    %63 = arith.divf %61, %62 : vector<2x32xf32>
    %64 = vector.extract_strided_slice %57 {offsets = [0, 32], sizes = [2, 32], strides = [1, 1]} : vector<2x128xf32> to vector<2x32xf32>
    %65 = arith.negf %64 : vector<2x32xf32>
    %66 = math.exp %65 : vector<2x32xf32>
    %cst_30 = arith.constant 1.000000e+00 : f32
    %67 = vector.broadcast %cst_30 : f32 to vector<2x32xf32>
    %68 = arith.addf %67, %66 : vector<2x32xf32>
    %69 = arith.divf %67, %68 : vector<2x32xf32>
    %70 = vector.extract_strided_slice %57 {offsets = [0, 64], sizes = [2, 32], strides = [1, 1]} : vector<2x128xf32> to vector<2x32xf32>
    %71 = math.tanh %70 : vector<2x32xf32>
    %72 = vector.extract_strided_slice %57 {offsets = [0, 96], sizes = [2, 32], strides = [1, 1]} : vector<2x128xf32> to vector<2x32xf32>
    %73 = arith.negf %72 : vector<2x32xf32>
    %74 = math.exp %73 : vector<2x32xf32>
    %cst_31 = arith.constant 1.000000e+00 : f32
    %75 = vector.broadcast %cst_31 : f32 to vector<2x32xf32>
    %76 = arith.addf %75, %74 : vector<2x32xf32>
    %77 = arith.divf %75, %76 : vector<2x32xf32>
    %78 = arith.mulf %69, %49 : vector<2x32xf32>
    %79 = arith.mulf %63, %71 : vector<2x32xf32>
    %80 = arith.addf %78, %79 : vector<2x32xf32>
    %81 = math.tanh %80 : vector<2x32xf32>
    %82 = arith.mulf %77, %81 : vector<2x32xf32>
    %c2_i32_32 = arith.constant 2 : i32
    %c2_i32_33 = arith.constant 2 : i32
    %83 = arith.muli %c2_i32_32, %c2_i32_33 : i32
    %84 = arith.index_cast %83 : i32 to index
    %c0_34 = arith.constant 0 : index
    %85 = vector.load %arg11[%84, %c0_34] : memref<16x128xf32, #tpu.memory_space<vmem>>, vector<2x128xf32>
    %86 = arith.truncf %82 : vector<2x32xf32> to vector<2x32xbf16>
    %cst_35 = arith.constant dense<0.000000e+00> : vector<2x128xf32>
    %87 = tpu.matmul %86, %0, %cst_35 {dimension_numbers = #tpu.dot_dimension_numbers<[1], [0], [0], [1], [0, 0, 1, 1], [], []>} : vector<2x32xbf16>, vector<32x128xbf16>, vector<2x128xf32> -> vector<2x128xf32>
    %88 = arith.addf %85, %87 : vector<2x128xf32>
    %89 = vector.extract_strided_slice %88 {offsets = [0, 0], sizes = [2, 32], strides = [1, 1]} : vector<2x128xf32> to vector<2x32xf32>
    %90 = arith.negf %89 : vector<2x32xf32>
    %91 = math.exp %90 : vector<2x32xf32>
    %cst_36 = arith.constant 1.000000e+00 : f32
    %92 = vector.broadcast %cst_36 : f32 to vector<2x32xf32>
    %93 = arith.addf %92, %91 : vector<2x32xf32>
    %94 = arith.divf %92, %93 : vector<2x32xf32>
    %95 = vector.extract_strided_slice %88 {offsets = [0, 32], sizes = [2, 32], strides = [1, 1]} : vector<2x128xf32> to vector<2x32xf32>
    %96 = arith.negf %95 : vector<2x32xf32>
    %97 = math.exp %96 : vector<2x32xf32>
    %cst_37 = arith.constant 1.000000e+00 : f32
    %98 = vector.broadcast %cst_37 : f32 to vector<2x32xf32>
    %99 = arith.addf %98, %97 : vector<2x32xf32>
    %100 = arith.divf %98, %99 : vector<2x32xf32>
    %101 = vector.extract_strided_slice %88 {offsets = [0, 64], sizes = [2, 32], strides = [1, 1]} : vector<2x128xf32> to vector<2x32xf32>
    %102 = math.tanh %101 : vector<2x32xf32>
    %103 = vector.extract_strided_slice %88 {offsets = [0, 96], sizes = [2, 32], strides = [1, 1]} : vector<2x128xf32> to vector<2x32xf32>
    %104 = arith.negf %103 : vector<2x32xf32>
    %105 = math.exp %104 : vector<2x32xf32>
    %cst_38 = arith.constant 1.000000e+00 : f32
    %106 = vector.broadcast %cst_38 : f32 to vector<2x32xf32>
    %107 = arith.addf %106, %105 : vector<2x32xf32>
    %108 = arith.divf %106, %107 : vector<2x32xf32>
    %109 = arith.mulf %100, %80 : vector<2x32xf32>
    %110 = arith.mulf %94, %102 : vector<2x32xf32>
    %111 = arith.addf %109, %110 : vector<2x32xf32>
    %112 = math.tanh %111 : vector<2x32xf32>
    %113 = arith.mulf %108, %112 : vector<2x32xf32>
    %c3_i32 = arith.constant 3 : i32
    %c2_i32_39 = arith.constant 2 : i32
    %114 = arith.muli %c3_i32, %c2_i32_39 : i32
    %115 = arith.index_cast %114 : i32 to index
    %c0_40 = arith.constant 0 : index
    %116 = vector.load %arg11[%115, %c0_40] : memref<16x128xf32, #tpu.memory_space<vmem>>, vector<2x128xf32>
    %117 = arith.truncf %113 : vector<2x32xf32> to vector<2x32xbf16>
    %cst_41 = arith.constant dense<0.000000e+00> : vector<2x128xf32>
    %118 = tpu.matmul %117, %0, %cst_41 {dimension_numbers = #tpu.dot_dimension_numbers<[1], [0], [0], [1], [0, 0, 1, 1], [], []>} : vector<2x32xbf16>, vector<32x128xbf16>, vector<2x128xf32> -> vector<2x128xf32>
    %119 = arith.addf %116, %118 : vector<2x128xf32>
    %120 = vector.extract_strided_slice %119 {offsets = [0, 0], sizes = [2, 32], strides = [1, 1]} : vector<2x128xf32> to vector<2x32xf32>
    %121 = arith.negf %120 : vector<2x32xf32>
    %122 = math.exp %121 : vector<2x32xf32>
    %cst_42 = arith.constant 1.000000e+00 : f32
    %123 = vector.broadcast %cst_42 : f32 to vector<2x32xf32>
    %124 = arith.addf %123, %122 : vector<2x32xf32>
    %125 = arith.divf %123, %124 : vector<2x32xf32>
    %126 = vector.extract_strided_slice %119 {offsets = [0, 32], sizes = [2, 32], strides = [1, 1]} : vector<2x128xf32> to vector<2x32xf32>
    %127 = arith.negf %126 : vector<2x32xf32>
    %128 = math.exp %127 : vector<2x32xf32>
    %cst_43 = arith.constant 1.000000e+00 : f32
    %129 = vector.broadcast %cst_43 : f32 to vector<2x32xf32>
    %130 = arith.addf %129, %128 : vector<2x32xf32>
    %131 = arith.divf %129, %130 : vector<2x32xf32>
    %132 = vector.extract_strided_slice %119 {offsets = [0, 64], sizes = [2, 32], strides = [1, 1]} : vector<2x128xf32> to vector<2x32xf32>
    %133 = math.tanh %132 : vector<2x32xf32>
    %134 = vector.extract_strided_slice %119 {offsets = [0, 96], sizes = [2, 32], strides = [1, 1]} : vector<2x128xf32> to vector<2x32xf32>
    %135 = arith.negf %134 : vector<2x32xf32>
    %136 = math.exp %135 : vector<2x32xf32>
    %cst_44 = arith.constant 1.000000e+00 : f32
    %137 = vector.broadcast %cst_44 : f32 to vector<2x32xf32>
    %138 = arith.addf %137, %136 : vector<2x32xf32>
    %139 = arith.divf %137, %138 : vector<2x32xf32>
    %140 = arith.mulf %131, %111 : vector<2x32xf32>
    %141 = arith.mulf %125, %133 : vector<2x32xf32>
    %142 = arith.addf %140, %141 : vector<2x32xf32>
    %143 = math.tanh %142 : vector<2x32xf32>
    %144 = arith.mulf %139, %143 : vector<2x32xf32>
    %c4_i32 = arith.constant 4 : i32
    %c2_i32_45 = arith.constant 2 : i32
    %145 = arith.muli %c4_i32, %c2_i32_45 : i32
    %146 = arith.index_cast %145 : i32 to index
    %c0_46 = arith.constant 0 : index
    %147 = vector.load %arg11[%146, %c0_46] : memref<16x128xf32, #tpu.memory_space<vmem>>, vector<2x128xf32>
    %148 = arith.truncf %144 : vector<2x32xf32> to vector<2x32xbf16>
    %cst_47 = arith.constant dense<0.000000e+00> : vector<2x128xf32>
    %149 = tpu.matmul %148, %0, %cst_47 {dimension_numbers = #tpu.dot_dimension_numbers<[1], [0], [0], [1], [0, 0, 1, 1], [], []>} : vector<2x32xbf16>, vector<32x128xbf16>, vector<2x128xf32> -> vector<2x128xf32>
    %150 = arith.addf %147, %149 : vector<2x128xf32>
    %151 = vector.extract_strided_slice %150 {offsets = [0, 0], sizes = [2, 32], strides = [1, 1]} : vector<2x128xf32> to vector<2x32xf32>
    %152 = arith.negf %151 : vector<2x32xf32>
    %153 = math.exp %152 : vector<2x32xf32>
    %cst_48 = arith.constant 1.000000e+00 : f32
    %154 = vector.broadcast %cst_48 : f32 to vector<2x32xf32>
    %155 = arith.addf %154, %153 : vector<2x32xf32>
    %156 = arith.divf %154, %155 : vector<2x32xf32>
    %157 = vector.extract_strided_slice %150 {offsets = [0, 32], sizes = [2, 32], strides = [1, 1]} : vector<2x128xf32> to vector<2x32xf32>
    %158 = arith.negf %157 : vector<2x32xf32>
    %159 = math.exp %158 : vector<2x32xf32>
    %cst_49 = arith.constant 1.000000e+00 : f32
    %160 = vector.broadcast %cst_49 : f32 to vector<2x32xf32>
    %161 = arith.addf %160, %159 : vector<2x32xf32>
    %162 = arith.divf %160, %161 : vector<2x32xf32>
    %163 = vector.extract_strided_slice %150 {offsets = [0, 64], sizes = [2, 32], strides = [1, 1]} : vector<2x128xf32> to vector<2x32xf32>
    %164 = math.tanh %163 : vector<2x32xf32>
    %165 = vector.extract_strided_slice %150 {offsets = [0, 96], sizes = [2, 32], strides = [1, 1]} : vector<2x128xf32> to vector<2x32xf32>
    %166 = arith.negf %165 : vector<2x32xf32>
    %167 = math.exp %166 : vector<2x32xf32>
    %cst_50 = arith.constant 1.000000e+00 : f32
    %168 = vector.broadcast %cst_50 : f32 to vector<2x32xf32>
    %169 = arith.addf %168, %167 : vector<2x32xf32>
    %170 = arith.divf %168, %169 : vector<2x32xf32>
    %171 = arith.mulf %162, %142 : vector<2x32xf32>
    %172 = arith.mulf %156, %164 : vector<2x32xf32>
    %173 = arith.addf %171, %172 : vector<2x32xf32>
    %174 = math.tanh %173 : vector<2x32xf32>
    %175 = arith.mulf %170, %174 : vector<2x32xf32>
    %c5_i32 = arith.constant 5 : i32
    %c2_i32_51 = arith.constant 2 : i32
    %176 = arith.muli %c5_i32, %c2_i32_51 : i32
    %177 = arith.index_cast %176 : i32 to index
    %c0_52 = arith.constant 0 : index
    %178 = vector.load %arg11[%177, %c0_52] : memref<16x128xf32, #tpu.memory_space<vmem>>, vector<2x128xf32>
    %179 = arith.truncf %175 : vector<2x32xf32> to vector<2x32xbf16>
    %cst_53 = arith.constant dense<0.000000e+00> : vector<2x128xf32>
    %180 = tpu.matmul %179, %0, %cst_53 {dimension_numbers = #tpu.dot_dimension_numbers<[1], [0], [0], [1], [0, 0, 1, 1], [], []>} : vector<2x32xbf16>, vector<32x128xbf16>, vector<2x128xf32> -> vector<2x128xf32>
    %181 = arith.addf %178, %180 : vector<2x128xf32>
    %182 = vector.extract_strided_slice %181 {offsets = [0, 0], sizes = [2, 32], strides = [1, 1]} : vector<2x128xf32> to vector<2x32xf32>
    %183 = arith.negf %182 : vector<2x32xf32>
    %184 = math.exp %183 : vector<2x32xf32>
    %cst_54 = arith.constant 1.000000e+00 : f32
    %185 = vector.broadcast %cst_54 : f32 to vector<2x32xf32>
    %186 = arith.addf %185, %184 : vector<2x32xf32>
    %187 = arith.divf %185, %186 : vector<2x32xf32>
    %188 = vector.extract_strided_slice %181 {offsets = [0, 32], sizes = [2, 32], strides = [1, 1]} : vector<2x128xf32> to vector<2x32xf32>
    %189 = arith.negf %188 : vector<2x32xf32>
    %190 = math.exp %189 : vector<2x32xf32>
    %cst_55 = arith.constant 1.000000e+00 : f32
    %191 = vector.broadcast %cst_55 : f32 to vector<2x32xf32>
    %192 = arith.addf %191, %190 : vector<2x32xf32>
    %193 = arith.divf %191, %192 : vector<2x32xf32>
    %194 = vector.extract_strided_slice %181 {offsets = [0, 64], sizes = [2, 32], strides = [1, 1]} : vector<2x128xf32> to vector<2x32xf32>
    %195 = math.tanh %194 : vector<2x32xf32>
    %196 = vector.extract_strided_slice %181 {offsets = [0, 96], sizes = [2, 32], strides = [1, 1]} : vector<2x128xf32> to vector<2x32xf32>
    %197 = arith.negf %196 : vector<2x32xf32>
    %198 = math.exp %197 : vector<2x32xf32>
    %cst_56 = arith.constant 1.000000e+00 : f32
    %199 = vector.broadcast %cst_56 : f32 to vector<2x32xf32>
    %200 = arith.addf %199, %198 : vector<2x32xf32>
    %201 = arith.divf %199, %200 : vector<2x32xf32>
    %202 = arith.mulf %193, %173 : vector<2x32xf32>
    %203 = arith.mulf %187, %195 : vector<2x32xf32>
    %204 = arith.addf %202, %203 : vector<2x32xf32>
    %205 = math.tanh %204 : vector<2x32xf32>
    %206 = arith.mulf %201, %205 : vector<2x32xf32>
    %c6_i32 = arith.constant 6 : i32
    %c2_i32_57 = arith.constant 2 : i32
    %207 = arith.muli %c6_i32, %c2_i32_57 : i32
    %208 = arith.index_cast %207 : i32 to index
    %c0_58 = arith.constant 0 : index
    %209 = vector.load %arg11[%208, %c0_58] : memref<16x128xf32, #tpu.memory_space<vmem>>, vector<2x128xf32>
    %210 = arith.truncf %206 : vector<2x32xf32> to vector<2x32xbf16>
    %cst_59 = arith.constant dense<0.000000e+00> : vector<2x128xf32>
    %211 = tpu.matmul %210, %0, %cst_59 {dimension_numbers = #tpu.dot_dimension_numbers<[1], [0], [0], [1], [0, 0, 1, 1], [], []>} : vector<2x32xbf16>, vector<32x128xbf16>, vector<2x128xf32> -> vector<2x128xf32>
    %212 = arith.addf %209, %211 : vector<2x128xf32>
    %213 = vector.extract_strided_slice %212 {offsets = [0, 0], sizes = [2, 32], strides = [1, 1]} : vector<2x128xf32> to vector<2x32xf32>
    %214 = arith.negf %213 : vector<2x32xf32>
    %215 = math.exp %214 : vector<2x32xf32>
    %cst_60 = arith.constant 1.000000e+00 : f32
    %216 = vector.broadcast %cst_60 : f32 to vector<2x32xf32>
    %217 = arith.addf %216, %215 : vector<2x32xf32>
    %218 = arith.divf %216, %217 : vector<2x32xf32>
    %219 = vector.extract_strided_slice %212 {offsets = [0, 32], sizes = [2, 32], strides = [1, 1]} : vector<2x128xf32> to vector<2x32xf32>
    %220 = arith.negf %219 : vector<2x32xf32>
    %221 = math.exp %220 : vector<2x32xf32>
    %cst_61 = arith.constant 1.000000e+00 : f32
    %222 = vector.broadcast %cst_61 : f32 to vector<2x32xf32>
    %223 = arith.addf %222, %221 : vector<2x32xf32>
    %224 = arith.divf %222, %223 : vector<2x32xf32>
    %225 = vector.extract_strided_slice %212 {offsets = [0, 64], sizes = [2, 32], strides = [1, 1]} : vector<2x128xf32> to vector<2x32xf32>
    %226 = math.tanh %225 : vector<2x32xf32>
    %227 = vector.extract_strided_slice %212 {offsets = [0, 96], sizes = [2, 32], strides = [1, 1]} : vector<2x128xf32> to vector<2x32xf32>
    %228 = arith.negf %227 : vector<2x32xf32>
    %229 = math.exp %228 : vector<2x32xf32>
    %cst_62 = arith.constant 1.000000e+00 : f32
    %230 = vector.broadcast %cst_62 : f32 to vector<2x32xf32>
    %231 = arith.addf %230, %229 : vector<2x32xf32>
    %232 = arith.divf %230, %231 : vector<2x32xf32>
    %233 = arith.mulf %224, %204 : vector<2x32xf32>
    %234 = arith.mulf %218, %226 : vector<2x32xf32>
    %235 = arith.addf %233, %234 : vector<2x32xf32>
    %236 = math.tanh %235 : vector<2x32xf32>
    %237 = arith.mulf %232, %236 : vector<2x32xf32>
    %c7_i32 = arith.constant 7 : i32
    %c2_i32_63 = arith.constant 2 : i32
    %238 = arith.muli %c7_i32, %c2_i32_63 : i32
    %239 = arith.index_cast %238 : i32 to index
    %c0_64 = arith.constant 0 : index
    %240 = vector.load %arg11[%239, %c0_64] : memref<16x128xf32, #tpu.memory_space<vmem>>, vector<2x128xf32>
    %241 = arith.truncf %237 : vector<2x32xf32> to vector<2x32xbf16>
    %cst_65 = arith.constant dense<0.000000e+00> : vector<2x128xf32>
    %242 = tpu.matmul %241, %0, %cst_65 {dimension_numbers = #tpu.dot_dimension_numbers<[1], [0], [0], [1], [0, 0, 1, 1], [], []>} : vector<2x32xbf16>, vector<32x128xbf16>, vector<2x128xf32> -> vector<2x128xf32>
    %243 = arith.addf %240, %242 : vector<2x128xf32>
    %244 = vector.extract_strided_slice %243 {offsets = [0, 0], sizes = [2, 32], strides = [1, 1]} : vector<2x128xf32> to vector<2x32xf32>
    %245 = arith.negf %244 : vector<2x32xf32>
    %246 = math.exp %245 : vector<2x32xf32>
    %cst_66 = arith.constant 1.000000e+00 : f32
    %247 = vector.broadcast %cst_66 : f32 to vector<2x32xf32>
    %248 = arith.addf %247, %246 : vector<2x32xf32>
    %249 = arith.divf %247, %248 : vector<2x32xf32>
    %250 = vector.extract_strided_slice %243 {offsets = [0, 32], sizes = [2, 32], strides = [1, 1]} : vector<2x128xf32> to vector<2x32xf32>
    %251 = arith.negf %250 : vector<2x32xf32>
    %252 = math.exp %251 : vector<2x32xf32>
    %cst_67 = arith.constant 1.000000e+00 : f32
    %253 = vector.broadcast %cst_67 : f32 to vector<2x32xf32>
    %254 = arith.addf %253, %252 : vector<2x32xf32>
    %255 = arith.divf %253, %254 : vector<2x32xf32>
    %256 = vector.extract_strided_slice %243 {offsets = [0, 64], sizes = [2, 32], strides = [1, 1]} : vector<2x128xf32> to vector<2x32xf32>
    %257 = math.tanh %256 : vector<2x32xf32>
    %258 = vector.extract_strided_slice %243 {offsets = [0, 96], sizes = [2, 32], strides = [1, 1]} : vector<2x128xf32> to vector<2x32xf32>
    %259 = arith.negf %258 : vector<2x32xf32>
    %260 = math.exp %259 : vector<2x32xf32>
    %cst_68 = arith.constant 1.000000e+00 : f32
    %261 = vector.broadcast %cst_68 : f32 to vector<2x32xf32>
    %262 = arith.addf %261, %260 : vector<2x32xf32>
    %263 = arith.divf %261, %262 : vector<2x32xf32>
    %264 = arith.mulf %255, %235 : vector<2x32xf32>
    %265 = arith.mulf %249, %257 : vector<2x32xf32>
    %266 = arith.addf %264, %265 : vector<2x32xf32>
    %267 = math.tanh %266 : vector<2x32xf32>
    %268 = arith.mulf %263, %267 : vector<2x32xf32>
    %c8_i32 = arith.constant 8 : i32
    %cst_69 = arith.constant 0.000000e+00 : f32
    %269 = vector.broadcast %cst_69 : f32 to vector<2x16xf32>
    %c0_70 = arith.constant 0 : index
    %c0_71 = arith.constant 0 : index
    %c0_72 = arith.constant 0 : index
    %270 = vector.load %arg10[%c0_70, %c0_71, %c0_72] : memref<8x2x16xf32, #tpu.memory_space<vmem>>, vector<1x2x16xf32>
    %271 = vector.shape_cast %270 : vector<1x2x16xf32> to vector<2x16xf32>
    %272 = vector.shape_cast %269 : vector<2x16xf32> to vector<1x2x16xf32>
    tpu.vector_store %arg10[%c0_70, %c0_71, %c0_72], %272 {strides = array<i32>} : memref<8x2x16xf32, #tpu.memory_space<vmem>>, vector<1x2x16xf32>,
    %c0_73 = arith.constant 0 : index
    %c0_74 = arith.constant 0 : index
    %273 = vector.load %arg1[%c0_73, %c0_74] : memref<2x16xf32, #tpu.memory_space<vmem>>, vector<2x16xf32>
    %274 = arith.truncf %273 : vector<2x16xf32> to vector<2x16xbf16>
    %c0_i32_75 = arith.constant 0 : i32
    %275 = arith.truncf %268 : vector<2x32xf32> to vector<2x32xbf16>
    %cst_76 = arith.constant dense<0.000000e+00> : vector<2x128xf32>
    %276 = tpu.matmul %274, %1, %cst_76 {dimension_numbers = #tpu.dot_dimension_numbers<[1], [0], [0], [1], [0, 0, 1, 1], [], []>} : vector<2x16xbf16>, vector<16x128xbf16>, vector<2x128xf32> -> vector<2x128xf32>
    %277 = arith.addf %276, %6 : vector<2x128xf32>
    %cst_77 = arith.constant dense<0.000000e+00> : vector<2x128xf32>
    %278 = tpu.matmul %275, %2, %cst_77 {dimension_numbers = #tpu.dot_dimension_numbers<[1], [0], [0], [1], [0, 0, 1, 1], [], []>} : vector<2x32xbf16>, vector<32x128xbf16>, vector<2x128xf32> -> vector<2x128xf32>
    %279 = arith.addf %277, %278 : vector<2x128xf32>
    %280 = vector.extract_strided_slice %279 {offsets = [0, 0], sizes = [2, 32], strides = [1, 1]} : vector<2x128xf32> to vector<2x32xf32>
    %281 = arith.negf %280 : vector<2x32xf32>
    %282 = math.exp %281 : vector<2x32xf32>
    %cst_78 = arith.constant 1.000000e+00 : f32
    %283 = vector.broadcast %cst_78 : f32 to vector<2x32xf32>
    %284 = arith.addf %283, %282 : vector<2x32xf32>
    %285 = arith.divf %283, %284 : vector<2x32xf32>
    %286 = vector.extract_strided_slice %279 {offsets = [0, 32], sizes = [2, 32], strides = [1, 1]} : vector<2x128xf32> to vector<2x32xf32>
    %287 = arith.negf %286 : vector<2x32xf32>
    %288 = math.exp %287 : vector<2x32xf32>
    %cst_79 = arith.constant 1.000000e+00 : f32
    %289 = vector.broadcast %cst_79 : f32 to vector<2x32xf32>
    %290 = arith.addf %289, %288 : vector<2x32xf32>
    %291 = arith.divf %289, %290 : vector<2x32xf32>
    %292 = vector.extract_strided_slice %279 {offsets = [0, 64], sizes = [2, 32], strides = [1, 1]} : vector<2x128xf32> to vector<2x32xf32>
    %293 = math.tanh %292 : vector<2x32xf32>
    %294 = vector.extract_strided_slice %279 {offsets = [0, 96], sizes = [2, 32], strides = [1, 1]} : vector<2x128xf32> to vector<2x32xf32>
    %295 = arith.negf %294 : vector<2x32xf32>
    %296 = math.exp %295 : vector<2x32xf32>
    %cst_80 = arith.constant 1.000000e+00 : f32
    %297 = vector.broadcast %cst_80 : f32 to vector<2x32xf32>
    %298 = arith.addf %297, %296 : vector<2x32xf32>
    %299 = arith.divf %297, %298 : vector<2x32xf32>
    %300 = arith.mulf %291, %266 : vector<2x32xf32>
    %301 = arith.mulf %285, %293 : vector<2x32xf32>
    %302 = arith.addf %300, %301 : vector<2x32xf32>
    %303 = math.tanh %302 : vector<2x32xf32>
    %304 = arith.mulf %299, %303 : vector<2x32xf32>
    %305 = arith.truncf %304 : vector<2x32xf32> to vector<2x32xbf16>
    %cst_81 = arith.constant dense<0.000000e+00> : vector<2x16xf32>
    %306 = tpu.matmul %305, %3, %cst_81 {dimension_numbers = #tpu.dot_dimension_numbers<[1], [0], [0], [1], [0, 0, 1, 1], [], []>} : vector<2x32xbf16>, vector<32x16xbf16>, vector<2x16xf32> -> vector<2x16xf32>
    %307 = arith.addf %306, %9 : vector<2x16xf32>
    %c1_i32_82 = arith.constant 1 : i32
    %308 = arith.addi %c0_i32_75, %c1_i32_82 : i32
    %309 = arith.index_cast %308 : i32 to index
    %c0_83 = arith.constant 0 : index
    %c0_84 = arith.constant 0 : index
    %310 = vector.load %arg10[%309, %c0_83, %c0_84] : memref<8x2x16xf32, #tpu.memory_space<vmem>>, vector<1x2x16xf32>
    %311 = vector.shape_cast %310 : vector<1x2x16xf32> to vector<2x16xf32>
    %312 = vector.shape_cast %307 : vector<2x16xf32> to vector<1x2x16xf32>
    tpu.vector_store %arg10[%309, %c0_83, %c0_84], %312 {strides = array<i32>} : memref<8x2x16xf32, #tpu.memory_space<vmem>>, vector<1x2x16xf32>,
    %cst_85 = arith.constant dense<0xFF800000> : vector<2xf32>
    %313 = vector.multi_reduction <maximumf>, %307, %cst_85 [1] : vector<2x16xf32> to vector<2xf32>
    %314 = vector.shape_cast %313 : vector<2xf32> to vector<2x1xf32>
    %315 = vector.broadcast %314 : vector<2x1xf32> to vector<2x16xf32>
    %316 = arith.cmpf oeq, %307, %315 : vector<2x16xf32>
    %c16_i32 = arith.constant 16 : i32
    %317 = vector.broadcast %c16_i32 : i32 to vector<2x16xi32>
    %318 = arith.select %316, %10, %317 : vector<2x16xi1>, vector<2x16xi32>
    %cst_86 = arith.constant dense<2147483647> : vector<2xi32>
    %319 = vector.multi_reduction <minsi>, %318, %cst_86 [1] : vector<2x16xi32> to vector<2xi32>
    %320 = vector.shape_cast %319 : vector<2xi32> to vector<2x1xi32>
    %321 = vector.broadcast %320 : vector<2x1xi32> to vector<2x16xi32>
    %322 = arith.cmpi eq, %10, %321 : vector<2x16xi32>
    %323 = arith.extui %322 : vector<2x16xi1> to vector<2x16xi32>
    %324 = arith.sitofp %323 : vector<2x16xi32> to vector<2x16xf32>
    %325 = arith.truncf %324 : vector<2x16xf32> to vector<2x16xbf16>
    %c1_i32_87 = arith.constant 1 : i32
    %326 = arith.truncf %304 : vector<2x32xf32> to vector<2x32xbf16>
    %cst_88 = arith.constant dense<0.000000e+00> : vector<2x128xf32>
    %327 = tpu.matmul %325, %1, %cst_88 {dimension_numbers = #tpu.dot_dimension_numbers<[1], [0], [0], [1], [0, 0, 1, 1], [], []>} : vector<2x16xbf16>, vector<16x128xbf16>, vector<2x128xf32> -> vector<2x128xf32>
    %328 = arith.addf %327, %6 : vector<2x128xf32>
    %cst_89 = arith.constant dense<0.000000e+00> : vector<2x128xf32>
    %329 = tpu.matmul %326, %2, %cst_89 {dimension_numbers = #tpu.dot_dimension_numbers<[1], [0], [0], [1], [0, 0, 1, 1], [], []>} : vector<2x32xbf16>, vector<32x128xbf16>, vector<2x128xf32> -> vector<2x128xf32>
    %330 = arith.addf %328, %329 : vector<2x128xf32>
    %331 = vector.extract_strided_slice %330 {offsets = [0, 0], sizes = [2, 32], strides = [1, 1]} : vector<2x128xf32> to vector<2x32xf32>
    %332 = arith.negf %331 : vector<2x32xf32>
    %333 = math.exp %332 : vector<2x32xf32>
    %cst_90 = arith.constant 1.000000e+00 : f32
    %334 = vector.broadcast %cst_90 : f32 to vector<2x32xf32>
    %335 = arith.addf %334, %333 : vector<2x32xf32>
    %336 = arith.divf %334, %335 : vector<2x32xf32>
    %337 = vector.extract_strided_slice %330 {offsets = [0, 32], sizes = [2, 32], strides = [1, 1]} : vector<2x128xf32> to vector<2x32xf32>
    %338 = arith.negf %337 : vector<2x32xf32>
    %339 = math.exp %338 : vector<2x32xf32>
    %cst_91 = arith.constant 1.000000e+00 : f32
    %340 = vector.broadcast %cst_91 : f32 to vector<2x32xf32>
    %341 = arith.addf %340, %339 : vector<2x32xf32>
    %342 = arith.divf %340, %341 : vector<2x32xf32>
    %343 = vector.extract_strided_slice %330 {offsets = [0, 64], sizes = [2, 32], strides = [1, 1]} : vector<2x128xf32> to vector<2x32xf32>
    %344 = math.tanh %343 : vector<2x32xf32>
    %345 = vector.extract_strided_slice %330 {offsets = [0, 96], sizes = [2, 32], strides = [1, 1]} : vector<2x128xf32> to vector<2x32xf32>
    %346 = arith.negf %345 : vector<2x32xf32>
    %347 = math.exp %346 : vector<2x32xf32>
    %cst_92 = arith.constant 1.000000e+00 : f32
    %348 = vector.broadcast %cst_92 : f32 to vector<2x32xf32>
    %349 = arith.addf %348, %347 : vector<2x32xf32>
    %350 = arith.divf %348, %349 : vector<2x32xf32>
    %351 = arith.mulf %342, %302 : vector<2x32xf32>
    %352 = arith.mulf %336, %344 : vector<2x32xf32>
    %353 = arith.addf %351, %352 : vector<2x32xf32>
    %354 = math.tanh %353 : vector<2x32xf32>
    %355 = arith.mulf %350, %354 : vector<2x32xf32>
    %356 = arith.truncf %355 : vector<2x32xf32> to vector<2x32xbf16>
    %cst_93 = arith.constant dense<0.000000e+00> : vector<2x16xf32>
    %357 = tpu.matmul %356, %3, %cst_93 {dimension_numbers = #tpu.dot_dimension_numbers<[1], [0], [0], [1], [0, 0, 1, 1], [], []>} : vector<2x32xbf16>, vector<32x16xbf16>, vector<2x16xf32> -> vector<2x16xf32>
    %358 = arith.addf %357, %9 : vector<2x16xf32>
    %c1_i32_94 = arith.constant 1 : i32
    %359 = arith.addi %c1_i32_87, %c1_i32_94 : i32
    %360 = arith.index_cast %359 : i32 to index
    %c0_95 = arith.constant 0 : index
    %c0_96 = arith.constant 0 : index
    %361 = vector.load %arg10[%360, %c0_95, %c0_96] : memref<8x2x16xf32, #tpu.memory_space<vmem>>, vector<1x2x16xf32>
    %362 = vector.shape_cast %361 : vector<1x2x16xf32> to vector<2x16xf32>
    %363 = vector.shape_cast %358 : vector<2x16xf32> to vector<1x2x16xf32>
    tpu.vector_store %arg10[%360, %c0_95, %c0_96], %363 {strides = array<i32>} : memref<8x2x16xf32, #tpu.memory_space<vmem>>, vector<1x2x16xf32>,
    %cst_97 = arith.constant dense<0xFF800000> : vector<2xf32>
    %364 = vector.multi_reduction <maximumf>, %358, %cst_97 [1] : vector<2x16xf32> to vector<2xf32>
    %365 = vector.shape_cast %364 : vector<2xf32> to vector<2x1xf32>
    %366 = vector.broadcast %365 : vector<2x1xf32> to vector<2x16xf32>
    %367 = arith.cmpf oeq, %358, %366 : vector<2x16xf32>
    %c16_i32_98 = arith.constant 16 : i32
    %368 = vector.broadcast %c16_i32_98 : i32 to vector<2x16xi32>
    %369 = arith.select %367, %10, %368 : vector<2x16xi1>, vector<2x16xi32>
    %cst_99 = arith.constant dense<2147483647> : vector<2xi32>
    %370 = vector.multi_reduction <minsi>, %369, %cst_99 [1] : vector<2x16xi32> to vector<2xi32>
    %371 = vector.shape_cast %370 : vector<2xi32> to vector<2x1xi32>
    %372 = vector.broadcast %371 : vector<2x1xi32> to vector<2x16xi32>
    %373 = arith.cmpi eq, %10, %372 : vector<2x16xi32>
    %374 = arith.extui %373 : vector<2x16xi1> to vector<2x16xi32>
    %375 = arith.sitofp %374 : vector<2x16xi32> to vector<2x16xf32>
    %376 = arith.truncf %375 : vector<2x16xf32> to vector<2x16xbf16>
    %c2_i32_100 = arith.constant 2 : i32
    %377 = arith.truncf %355 : vector<2x32xf32> to vector<2x32xbf16>
    %cst_101 = arith.constant dense<0.000000e+00> : vector<2x128xf32>
    %378 = tpu.matmul %376, %1, %cst_101 {dimension_numbers = #tpu.dot_dimension_numbers<[1], [0], [0], [1], [0, 0, 1, 1], [], []>} : vector<2x16xbf16>, vector<16x128xbf16>, vector<2x128xf32> -> vector<2x128xf32>
    %379 = arith.addf %378, %6 : vector<2x128xf32>
    %cst_102 = arith.constant dense<0.000000e+00> : vector<2x128xf32>
    %380 = tpu.matmul %377, %2, %cst_102 {dimension_numbers = #tpu.dot_dimension_numbers<[1], [0], [0], [1], [0, 0, 1, 1], [], []>} : vector<2x32xbf16>, vector<32x128xbf16>, vector<2x128xf32> -> vector<2x128xf32>
    %381 = arith.addf %379, %380 : vector<2x128xf32>
    %382 = vector.extract_strided_slice %381 {offsets = [0, 0], sizes = [2, 32], strides = [1, 1]} : vector<2x128xf32> to vector<2x32xf32>
    %383 = arith.negf %382 : vector<2x32xf32>
    %384 = math.exp %383 : vector<2x32xf32>
    %cst_103 = arith.constant 1.000000e+00 : f32
    %385 = vector.broadcast %cst_103 : f32 to vector<2x32xf32>
    %386 = arith.addf %385, %384 : vector<2x32xf32>
    %387 = arith.divf %385, %386 : vector<2x32xf32>
    %388 = vector.extract_strided_slice %381 {offsets = [0, 32], sizes = [2, 32], strides = [1, 1]} : vector<2x128xf32> to vector<2x32xf32>
    %389 = arith.negf %388 : vector<2x32xf32>
    %390 = math.exp %389 : vector<2x32xf32>
    %cst_104 = arith.constant 1.000000e+00 : f32
    %391 = vector.broadcast %cst_104 : f32 to vector<2x32xf32>
    %392 = arith.addf %391, %390 : vector<2x32xf32>
    %393 = arith.divf %391, %392 : vector<2x32xf32>
    %394 = vector.extract_strided_slice %381 {offsets = [0, 64], sizes = [2, 32], strides = [1, 1]} : vector<2x128xf32> to vector<2x32xf32>
    %395 = math.tanh %394 : vector<2x32xf32>
    %396 = vector.extract_strided_slice %381 {offsets = [0, 96], sizes = [2, 32], strides = [1, 1]} : vector<2x128xf32> to vector<2x32xf32>
    %397 = arith.negf %396 : vector<2x32xf32>
    %398 = math.exp %397 : vector<2x32xf32>
    %cst_105 = arith.constant 1.000000e+00 : f32
    %399 = vector.broadcast %cst_105 : f32 to vector<2x32xf32>
    %400 = arith.addf %399, %398 : vector<2x32xf32>
    %401 = arith.divf %399, %400 : vector<2x32xf32>
    %402 = arith.mulf %393, %353 : vector<2x32xf32>
    %403 = arith.mulf %387, %395 : vector<2x32xf32>
    %404 = arith.addf %402, %403 : vector<2x32xf32>
    %405 = math.tanh %404 : vector<2x32xf32>
    %406 = arith.mulf %401, %405 : vector<2x32xf32>
    %407 = arith.truncf %406 : vector<2x32xf32> to vector<2x32xbf16>
    %cst_106 = arith.constant dense<0.000000e+00> : vector<2x16xf32>
    %408 = tpu.matmul %407, %3, %cst_106 {dimension_numbers = #tpu.dot_dimension_numbers<[1], [0], [0], [1], [0, 0, 1, 1], [], []>} : vector<2x32xbf16>, vector<32x16xbf16>, vector<2x16xf32> -> vector<2x16xf32>
    %409 = arith.addf %408, %9 : vector<2x16xf32>
    %c1_i32_107 = arith.constant 1 : i32
    %410 = arith.addi %c2_i32_100, %c1_i32_107 : i32
    %411 = arith.index_cast %410 : i32 to index
    %c0_108 = arith.constant 0 : index
    %c0_109 = arith.constant 0 : index
    %412 = vector.load %arg10[%411, %c0_108, %c0_109] : memref<8x2x16xf32, #tpu.memory_space<vmem>>, vector<1x2x16xf32>
    %413 = vector.shape_cast %412 : vector<1x2x16xf32> to vector<2x16xf32>
    %414 = vector.shape_cast %409 : vector<2x16xf32> to vector<1x2x16xf32>
    tpu.vector_store %arg10[%411, %c0_108, %c0_109], %414 {strides = array<i32>} : memref<8x2x16xf32, #tpu.memory_space<vmem>>, vector<1x2x16xf32>,
    %cst_110 = arith.constant dense<0xFF800000> : vector<2xf32>
    %415 = vector.multi_reduction <maximumf>, %409, %cst_110 [1] : vector<2x16xf32> to vector<2xf32>
    %416 = vector.shape_cast %415 : vector<2xf32> to vector<2x1xf32>
    %417 = vector.broadcast %416 : vector<2x1xf32> to vector<2x16xf32>
    %418 = arith.cmpf oeq, %409, %417 : vector<2x16xf32>
    %c16_i32_111 = arith.constant 16 : i32
    %419 = vector.broadcast %c16_i32_111 : i32 to vector<2x16xi32>
    %420 = arith.select %418, %10, %419 : vector<2x16xi1>, vector<2x16xi32>
    %cst_112 = arith.constant dense<2147483647> : vector<2xi32>
    %421 = vector.multi_reduction <minsi>, %420, %cst_112 [1] : vector<2x16xi32> to vector<2xi32>
    %422 = vector.shape_cast %421 : vector<2xi32> to vector<2x1xi32>
    %423 = vector.broadcast %422 : vector<2x1xi32> to vector<2x16xi32>
    %424 = arith.cmpi eq, %10, %423 : vector<2x16xi32>
    %425 = arith.extui %424 : vector<2x16xi1> to vector<2x16xi32>
    %426 = arith.sitofp %425 : vector<2x16xi32> to vector<2x16xf32>
    %427 = arith.truncf %426 : vector<2x16xf32> to vector<2x16xbf16>
    %c3_i32_113 = arith.constant 3 : i32
    %428 = arith.truncf %406 : vector<2x32xf32> to vector<2x32xbf16>
    %cst_114 = arith.constant dense<0.000000e+00> : vector<2x128xf32>
    %429 = tpu.matmul %427, %1, %cst_114 {dimension_numbers = #tpu.dot_dimension_numbers<[1], [0], [0], [1], [0, 0, 1, 1], [], []>} : vector<2x16xbf16>, vector<16x128xbf16>, vector<2x128xf32> -> vector<2x128xf32>
    %430 = arith.addf %429, %6 : vector<2x128xf32>
    %cst_115 = arith.constant dense<0.000000e+00> : vector<2x128xf32>
    %431 = tpu.matmul %428, %2, %cst_115 {dimension_numbers = #tpu.dot_dimension_numbers<[1], [0], [0], [1], [0, 0, 1, 1], [], []>} : vector<2x32xbf16>, vector<32x128xbf16>, vector<2x128xf32> -> vector<2x128xf32>
    %432 = arith.addf %430, %431 : vector<2x128xf32>
    %433 = vector.extract_strided_slice %432 {offsets = [0, 0], sizes = [2, 32], strides = [1, 1]} : vector<2x128xf32> to vector<2x32xf32>
    %434 = arith.negf %433 : vector<2x32xf32>
    %435 = math.exp %434 : vector<2x32xf32>
    %cst_116 = arith.constant 1.000000e+00 : f32
    %436 = vector.broadcast %cst_116 : f32 to vector<2x32xf32>
    %437 = arith.addf %436, %435 : vector<2x32xf32>
    %438 = arith.divf %436, %437 : vector<2x32xf32>
    %439 = vector.extract_strided_slice %432 {offsets = [0, 32], sizes = [2, 32], strides = [1, 1]} : vector<2x128xf32> to vector<2x32xf32>
    %440 = arith.negf %439 : vector<2x32xf32>
    %441 = math.exp %440 : vector<2x32xf32>
    %cst_117 = arith.constant 1.000000e+00 : f32
    %442 = vector.broadcast %cst_117 : f32 to vector<2x32xf32>
    %443 = arith.addf %442, %441 : vector<2x32xf32>
    %444 = arith.divf %442, %443 : vector<2x32xf32>
    %445 = vector.extract_strided_slice %432 {offsets = [0, 64], sizes = [2, 32], strides = [1, 1]} : vector<2x128xf32> to vector<2x32xf32>
    %446 = math.tanh %445 : vector<2x32xf32>
    %447 = vector.extract_strided_slice %432 {offsets = [0, 96], sizes = [2, 32], strides = [1, 1]} : vector<2x128xf32> to vector<2x32xf32>
    %448 = arith.negf %447 : vector<2x32xf32>
    %449 = math.exp %448 : vector<2x32xf32>
    %cst_118 = arith.constant 1.000000e+00 : f32
    %450 = vector.broadcast %cst_118 : f32 to vector<2x32xf32>
    %451 = arith.addf %450, %449 : vector<2x32xf32>
    %452 = arith.divf %450, %451 : vector<2x32xf32>
    %453 = arith.mulf %444, %404 : vector<2x32xf32>
    %454 = arith.mulf %438, %446 : vector<2x32xf32>
    %455 = arith.addf %453, %454 : vector<2x32xf32>
    %456 = math.tanh %455 : vector<2x32xf32>
    %457 = arith.mulf %452, %456 : vector<2x32xf32>
    %458 = arith.truncf %457 : vector<2x32xf32> to vector<2x32xbf16>
    %cst_119 = arith.constant dense<0.000000e+00> : vector<2x16xf32>
    %459 = tpu.matmul %458, %3, %cst_119 {dimension_numbers = #tpu.dot_dimension_numbers<[1], [0], [0], [1], [0, 0, 1, 1], [], []>} : vector<2x32xbf16>, vector<32x16xbf16>, vector<2x16xf32> -> vector<2x16xf32>
    %460 = arith.addf %459, %9 : vector<2x16xf32>
    %c1_i32_120 = arith.constant 1 : i32
    %461 = arith.addi %c3_i32_113, %c1_i32_120 : i32
    %462 = arith.index_cast %461 : i32 to index
    %c0_121 = arith.constant 0 : index
    %c0_122 = arith.constant 0 : index
    %463 = vector.load %arg10[%462, %c0_121, %c0_122] : memref<8x2x16xf32, #tpu.memory_space<vmem>>, vector<1x2x16xf32>
    %464 = vector.shape_cast %463 : vector<1x2x16xf32> to vector<2x16xf32>
    %465 = vector.shape_cast %460 : vector<2x16xf32> to vector<1x2x16xf32>
    tpu.vector_store %arg10[%462, %c0_121, %c0_122], %465 {strides = array<i32>} : memref<8x2x16xf32, #tpu.memory_space<vmem>>, vector<1x2x16xf32>,
    %cst_123 = arith.constant dense<0xFF800000> : vector<2xf32>
    %466 = vector.multi_reduction <maximumf>, %460, %cst_123 [1] : vector<2x16xf32> to vector<2xf32>
    %467 = vector.shape_cast %466 : vector<2xf32> to vector<2x1xf32>
    %468 = vector.broadcast %467 : vector<2x1xf32> to vector<2x16xf32>
    %469 = arith.cmpf oeq, %460, %468 : vector<2x16xf32>
    %c16_i32_124 = arith.constant 16 : i32
    %470 = vector.broadcast %c16_i32_124 : i32 to vector<2x16xi32>
    %471 = arith.select %469, %10, %470 : vector<2x16xi1>, vector<2x16xi32>
    %cst_125 = arith.constant dense<2147483647> : vector<2xi32>
    %472 = vector.multi_reduction <minsi>, %471, %cst_125 [1] : vector<2x16xi32> to vector<2xi32>
    %473 = vector.shape_cast %472 : vector<2xi32> to vector<2x1xi32>
    %474 = vector.broadcast %473 : vector<2x1xi32> to vector<2x16xi32>
    %475 = arith.cmpi eq, %10, %474 : vector<2x16xi32>
    %476 = arith.extui %475 : vector<2x16xi1> to vector<2x16xi32>
    %477 = arith.sitofp %476 : vector<2x16xi32> to vector<2x16xf32>
    %478 = arith.truncf %477 : vector<2x16xf32> to vector<2x16xbf16>
    %c4_i32_126 = arith.constant 4 : i32
    %479 = arith.truncf %457 : vector<2x32xf32> to vector<2x32xbf16>
    %cst_127 = arith.constant dense<0.000000e+00> : vector<2x128xf32>
    %480 = tpu.matmul %478, %1, %cst_127 {dimension_numbers = #tpu.dot_dimension_numbers<[1], [0], [0], [1], [0, 0, 1, 1], [], []>} : vector<2x16xbf16>, vector<16x128xbf16>, vector<2x128xf32> -> vector<2x128xf32>
    %481 = arith.addf %480, %6 : vector<2x128xf32>
    %cst_128 = arith.constant dense<0.000000e+00> : vector<2x128xf32>
    %482 = tpu.matmul %479, %2, %cst_128 {dimension_numbers = #tpu.dot_dimension_numbers<[1], [0], [0], [1], [0, 0, 1, 1], [], []>} : vector<2x32xbf16>, vector<32x128xbf16>, vector<2x128xf32> -> vector<2x128xf32>
    %483 = arith.addf %481, %482 : vector<2x128xf32>
    %484 = vector.extract_strided_slice %483 {offsets = [0, 0], sizes = [2, 32], strides = [1, 1]} : vector<2x128xf32> to vector<2x32xf32>
    %485 = arith.negf %484 : vector<2x32xf32>
    %486 = math.exp %485 : vector<2x32xf32>
    %cst_129 = arith.constant 1.000000e+00 : f32
    %487 = vector.broadcast %cst_129 : f32 to vector<2x32xf32>
    %488 = arith.addf %487, %486 : vector<2x32xf32>
    %489 = arith.divf %487, %488 : vector<2x32xf32>
    %490 = vector.extract_strided_slice %483 {offsets = [0, 32], sizes = [2, 32], strides = [1, 1]} : vector<2x128xf32> to vector<2x32xf32>
    %491 = arith.negf %490 : vector<2x32xf32>
    %492 = math.exp %491 : vector<2x32xf32>
    %cst_130 = arith.constant 1.000000e+00 : f32
    %493 = vector.broadcast %cst_130 : f32 to vector<2x32xf32>
    %494 = arith.addf %493, %492 : vector<2x32xf32>
    %495 = arith.divf %493, %494 : vector<2x32xf32>
    %496 = vector.extract_strided_slice %483 {offsets = [0, 64], sizes = [2, 32], strides = [1, 1]} : vector<2x128xf32> to vector<2x32xf32>
    %497 = math.tanh %496 : vector<2x32xf32>
    %498 = vector.extract_strided_slice %483 {offsets = [0, 96], sizes = [2, 32], strides = [1, 1]} : vector<2x128xf32> to vector<2x32xf32>
    %499 = arith.negf %498 : vector<2x32xf32>
    %500 = math.exp %499 : vector<2x32xf32>
    %cst_131 = arith.constant 1.000000e+00 : f32
    %501 = vector.broadcast %cst_131 : f32 to vector<2x32xf32>
    %502 = arith.addf %501, %500 : vector<2x32xf32>
    %503 = arith.divf %501, %502 : vector<2x32xf32>
    %504 = arith.mulf %495, %455 : vector<2x32xf32>
    %505 = arith.mulf %489, %497 : vector<2x32xf32>
    %506 = arith.addf %504, %505 : vector<2x32xf32>
    %507 = math.tanh %506 : vector<2x32xf32>
    %508 = arith.mulf %503, %507 : vector<2x32xf32>
    %509 = arith.truncf %508 : vector<2x32xf32> to vector<2x32xbf16>
    %cst_132 = arith.constant dense<0.000000e+00> : vector<2x16xf32>
    %510 = tpu.matmul %509, %3, %cst_132 {dimension_numbers = #tpu.dot_dimension_numbers<[1], [0], [0], [1], [0, 0, 1, 1], [], []>} : vector<2x32xbf16>, vector<32x16xbf16>, vector<2x16xf32> -> vector<2x16xf32>
    %511 = arith.addf %510, %9 : vector<2x16xf32>
    %c1_i32_133 = arith.constant 1 : i32
    %512 = arith.addi %c4_i32_126, %c1_i32_133 : i32
    %513 = arith.index_cast %512 : i32 to index
    %c0_134 = arith.constant 0 : index
    %c0_135 = arith.constant 0 : index
    %514 = vector.load %arg10[%513, %c0_134, %c0_135] : memref<8x2x16xf32, #tpu.memory_space<vmem>>, vector<1x2x16xf32>
    %515 = vector.shape_cast %514 : vector<1x2x16xf32> to vector<2x16xf32>
    %516 = vector.shape_cast %511 : vector<2x16xf32> to vector<1x2x16xf32>
    tpu.vector_store %arg10[%513, %c0_134, %c0_135], %516 {strides = array<i32>} : memref<8x2x16xf32, #tpu.memory_space<vmem>>, vector<1x2x16xf32>,
    %cst_136 = arith.constant dense<0xFF800000> : vector<2xf32>
    %517 = vector.multi_reduction <maximumf>, %511, %cst_136 [1] : vector<2x16xf32> to vector<2xf32>
    %518 = vector.shape_cast %517 : vector<2xf32> to vector<2x1xf32>
    %519 = vector.broadcast %518 : vector<2x1xf32> to vector<2x16xf32>
    %520 = arith.cmpf oeq, %511, %519 : vector<2x16xf32>
    %c16_i32_137 = arith.constant 16 : i32
    %521 = vector.broadcast %c16_i32_137 : i32 to vector<2x16xi32>
    %522 = arith.select %520, %10, %521 : vector<2x16xi1>, vector<2x16xi32>
    %cst_138 = arith.constant dense<2147483647> : vector<2xi32>
    %523 = vector.multi_reduction <minsi>, %522, %cst_138 [1] : vector<2x16xi32> to vector<2xi32>
    %524 = vector.shape_cast %523 : vector<2xi32> to vector<2x1xi32>
    %525 = vector.broadcast %524 : vector<2x1xi32> to vector<2x16xi32>
    %526 = arith.cmpi eq, %10, %525 : vector<2x16xi32>
    %527 = arith.extui %526 : vector<2x16xi1> to vector<2x16xi32>
    %528 = arith.sitofp %527 : vector<2x16xi32> to vector<2x16xf32>
    %529 = arith.truncf %528 : vector<2x16xf32> to vector<2x16xbf16>
    %c5_i32_139 = arith.constant 5 : i32
    %530 = arith.truncf %508 : vector<2x32xf32> to vector<2x32xbf16>
    %cst_140 = arith.constant dense<0.000000e+00> : vector<2x128xf32>
    %531 = tpu.matmul %529, %1, %cst_140 {dimension_numbers = #tpu.dot_dimension_numbers<[1], [0], [0], [1], [0, 0, 1, 1], [], []>} : vector<2x16xbf16>, vector<16x128xbf16>, vector<2x128xf32> -> vector<2x128xf32>
    %532 = arith.addf %531, %6 : vector<2x128xf32>
    %cst_141 = arith.constant dense<0.000000e+00> : vector<2x128xf32>
    %533 = tpu.matmul %530, %2, %cst_141 {dimension_numbers = #tpu.dot_dimension_numbers<[1], [0], [0], [1], [0, 0, 1, 1], [], []>} : vector<2x32xbf16>, vector<32x128xbf16>, vector<2x128xf32> -> vector<2x128xf32>
    %534 = arith.addf %532, %533 : vector<2x128xf32>
    %535 = vector.extract_strided_slice %534 {offsets = [0, 0], sizes = [2, 32], strides = [1, 1]} : vector<2x128xf32> to vector<2x32xf32>
    %536 = arith.negf %535 : vector<2x32xf32>
    %537 = math.exp %536 : vector<2x32xf32>
    %cst_142 = arith.constant 1.000000e+00 : f32
    %538 = vector.broadcast %cst_142 : f32 to vector<2x32xf32>
    %539 = arith.addf %538, %537 : vector<2x32xf32>
    %540 = arith.divf %538, %539 : vector<2x32xf32>
    %541 = vector.extract_strided_slice %534 {offsets = [0, 32], sizes = [2, 32], strides = [1, 1]} : vector<2x128xf32> to vector<2x32xf32>
    %542 = arith.negf %541 : vector<2x32xf32>
    %543 = math.exp %542 : vector<2x32xf32>
    %cst_143 = arith.constant 1.000000e+00 : f32
    %544 = vector.broadcast %cst_143 : f32 to vector<2x32xf32>
    %545 = arith.addf %544, %543 : vector<2x32xf32>
    %546 = arith.divf %544, %545 : vector<2x32xf32>
    %547 = vector.extract_strided_slice %534 {offsets = [0, 64], sizes = [2, 32], strides = [1, 1]} : vector<2x128xf32> to vector<2x32xf32>
    %548 = math.tanh %547 : vector<2x32xf32>
    %549 = vector.extract_strided_slice %534 {offsets = [0, 96], sizes = [2, 32], strides = [1, 1]} : vector<2x128xf32> to vector<2x32xf32>
    %550 = arith.negf %549 : vector<2x32xf32>
    %551 = math.exp %550 : vector<2x32xf32>
    %cst_144 = arith.constant 1.000000e+00 : f32
    %552 = vector.broadcast %cst_144 : f32 to vector<2x32xf32>
    %553 = arith.addf %552, %551 : vector<2x32xf32>
    %554 = arith.divf %552, %553 : vector<2x32xf32>
    %555 = arith.mulf %546, %506 : vector<2x32xf32>
    %556 = arith.mulf %540, %548 : vector<2x32xf32>
    %557 = arith.addf %555, %556 : vector<2x32xf32>
    %558 = math.tanh %557 : vector<2x32xf32>
    %559 = arith.mulf %554, %558 : vector<2x32xf32>
    %560 = arith.truncf %559 : vector<2x32xf32> to vector<2x32xbf16>
    %cst_145 = arith.constant dense<0.000000e+00> : vector<2x16xf32>
    %561 = tpu.matmul %560, %3, %cst_145 {dimension_numbers = #tpu.dot_dimension_numbers<[1], [0], [0], [1], [0, 0, 1, 1], [], []>} : vector<2x32xbf16>, vector<32x16xbf16>, vector<2x16xf32> -> vector<2x16xf32>
    %562 = arith.addf %561, %9 : vector<2x16xf32>
    %c1_i32_146 = arith.constant 1 : i32
    %563 = arith.addi %c5_i32_139, %c1_i32_146 : i32
    %564 = arith.index_cast %563 : i32 to index
    %c0_147 = arith.constant 0 : index
    %c0_148 = arith.constant 0 : index
    %565 = vector.load %arg10[%564, %c0_147, %c0_148] : memref<8x2x16xf32, #tpu.memory_space<vmem>>, vector<1x2x16xf32>
    %566 = vector.shape_cast %565 : vector<1x2x16xf32> to vector<2x16xf32>
    %567 = vector.shape_cast %562 : vector<2x16xf32> to vector<1x2x16xf32>
    tpu.vector_store %arg10[%564, %c0_147, %c0_148], %567 {strides = array<i32>} : memref<8x2x16xf32, #tpu.memory_space<vmem>>, vector<1x2x16xf32>,
    %cst_149 = arith.constant dense<0xFF800000> : vector<2xf32>
    %568 = vector.multi_reduction <maximumf>, %562, %cst_149 [1] : vector<2x16xf32> to vector<2xf32>
    %569 = vector.shape_cast %568 : vector<2xf32> to vector<2x1xf32>
    %570 = vector.broadcast %569 : vector<2x1xf32> to vector<2x16xf32>
    %571 = arith.cmpf oeq, %562, %570 : vector<2x16xf32>
    %c16_i32_150 = arith.constant 16 : i32
    %572 = vector.broadcast %c16_i32_150 : i32 to vector<2x16xi32>
    %573 = arith.select %571, %10, %572 : vector<2x16xi1>, vector<2x16xi32>
    %cst_151 = arith.constant dense<2147483647> : vector<2xi32>
    %574 = vector.multi_reduction <minsi>, %573, %cst_151 [1] : vector<2x16xi32> to vector<2xi32>
    %575 = vector.shape_cast %574 : vector<2xi32> to vector<2x1xi32>
    %576 = vector.broadcast %575 : vector<2x1xi32> to vector<2x16xi32>
    %577 = arith.cmpi eq, %10, %576 : vector<2x16xi32>
    %578 = arith.extui %577 : vector<2x16xi1> to vector<2x16xi32>
    %579 = arith.sitofp %578 : vector<2x16xi32> to vector<2x16xf32>
    %580 = arith.truncf %579 : vector<2x16xf32> to vector<2x16xbf16>
    %c6_i32_152 = arith.constant 6 : i32
    %581 = arith.truncf %559 : vector<2x32xf32> to vector<2x32xbf16>
    %cst_153 = arith.constant dense<0.000000e+00> : vector<2x128xf32>
    %582 = tpu.matmul %580, %1, %cst_153 {dimension_numbers = #tpu.dot_dimension_numbers<[1], [0], [0], [1], [0, 0, 1, 1], [], []>} : vector<2x16xbf16>, vector<16x128xbf16>, vector<2x128xf32> -> vector<2x128xf32>
    %583 = arith.addf %582, %6 : vector<2x128xf32>
    %cst_154 = arith.constant dense<0.000000e+00> : vector<2x128xf32>
    %584 = tpu.matmul %581, %2, %cst_154 {dimension_numbers = #tpu.dot_dimension_numbers<[1], [0], [0], [1], [0, 0, 1, 1], [], []>} : vector<2x32xbf16>, vector<32x128xbf16>, vector<2x128xf32> -> vector<2x128xf32>
    %585 = arith.addf %583, %584 : vector<2x128xf32>
    %586 = vector.extract_strided_slice %585 {offsets = [0, 0], sizes = [2, 32], strides = [1, 1]} : vector<2x128xf32> to vector<2x32xf32>
    %587 = arith.negf %586 : vector<2x32xf32>
    %588 = math.exp %587 : vector<2x32xf32>
    %cst_155 = arith.constant 1.000000e+00 : f32
    %589 = vector.broadcast %cst_155 : f32 to vector<2x32xf32>
    %590 = arith.addf %589, %588 : vector<2x32xf32>
    %591 = arith.divf %589, %590 : vector<2x32xf32>
    %592 = vector.extract_strided_slice %585 {offsets = [0, 32], sizes = [2, 32], strides = [1, 1]} : vector<2x128xf32> to vector<2x32xf32>
    %593 = arith.negf %592 : vector<2x32xf32>
    %594 = math.exp %593 : vector<2x32xf32>
    %cst_156 = arith.constant 1.000000e+00 : f32
    %595 = vector.broadcast %cst_156 : f32 to vector<2x32xf32>
    %596 = arith.addf %595, %594 : vector<2x32xf32>
    %597 = arith.divf %595, %596 : vector<2x32xf32>
    %598 = vector.extract_strided_slice %585 {offsets = [0, 64], sizes = [2, 32], strides = [1, 1]} : vector<2x128xf32> to vector<2x32xf32>
    %599 = math.tanh %598 : vector<2x32xf32>
    %600 = vector.extract_strided_slice %585 {offsets = [0, 96], sizes = [2, 32], strides = [1, 1]} : vector<2x128xf32> to vector<2x32xf32>
    %601 = arith.negf %600 : vector<2x32xf32>
    %602 = math.exp %601 : vector<2x32xf32>
    %cst_157 = arith.constant 1.000000e+00 : f32
    %603 = vector.broadcast %cst_157 : f32 to vector<2x32xf32>
    %604 = arith.addf %603, %602 : vector<2x32xf32>
    %605 = arith.divf %603, %604 : vector<2x32xf32>
    %606 = arith.mulf %597, %557 : vector<2x32xf32>
    %607 = arith.mulf %591, %599 : vector<2x32xf32>
    %608 = arith.addf %606, %607 : vector<2x32xf32>
    %609 = math.tanh %608 : vector<2x32xf32>
    %610 = arith.mulf %605, %609 : vector<2x32xf32>
    %611 = arith.truncf %610 : vector<2x32xf32> to vector<2x32xbf16>
    %cst_158 = arith.constant dense<0.000000e+00> : vector<2x16xf32>
    %612 = tpu.matmul %611, %3, %cst_158 {dimension_numbers = #tpu.dot_dimension_numbers<[1], [0], [0], [1], [0, 0, 1, 1], [], []>} : vector<2x32xbf16>, vector<32x16xbf16>, vector<2x16xf32> -> vector<2x16xf32>
    %613 = arith.addf %612, %9 : vector<2x16xf32>
    %c1_i32_159 = arith.constant 1 : i32
    %614 = arith.addi %c6_i32_152, %c1_i32_159 : i32
    %615 = arith.index_cast %614 : i32 to index
    %c0_160 = arith.constant 0 : index
    %c0_161 = arith.constant 0 : index
    %616 = vector.load %arg10[%615, %c0_160, %c0_161] : memref<8x2x16xf32, #tpu.memory_space<vmem>>, vector<1x2x16xf32>
    %617 = vector.shape_cast %616 : vector<1x2x16xf32> to vector<2x16xf32>
    %618 = vector.shape_cast %613 : vector<2x16xf32> to vector<1x2x16xf32>
    tpu.vector_store %arg10[%615, %c0_160, %c0_161], %618 {strides = array<i32>} : memref<8x2x16xf32, #tpu.memory_space<vmem>>, vector<1x2x16xf32>,
    %cst_162 = arith.constant dense<0xFF800000> : vector<2xf32>
    %619 = vector.multi_reduction <maximumf>, %613, %cst_162 [1] : vector<2x16xf32> to vector<2xf32>
    %620 = vector.shape_cast %619 : vector<2xf32> to vector<2x1xf32>
    %621 = vector.broadcast %620 : vector<2x1xf32> to vector<2x16xf32>
    %622 = arith.cmpf oeq, %613, %621 : vector<2x16xf32>
    %c16_i32_163 = arith.constant 16 : i32
    %623 = vector.broadcast %c16_i32_163 : i32 to vector<2x16xi32>
    %624 = arith.select %622, %10, %623 : vector<2x16xi1>, vector<2x16xi32>
    %cst_164 = arith.constant dense<2147483647> : vector<2xi32>
    %625 = vector.multi_reduction <minsi>, %624, %cst_164 [1] : vector<2x16xi32> to vector<2xi32>
    %626 = vector.shape_cast %625 : vector<2xi32> to vector<2x1xi32>
    %627 = vector.broadcast %626 : vector<2x1xi32> to vector<2x16xi32>
    %628 = arith.cmpi eq, %10, %627 : vector<2x16xi32>
    %629 = arith.extui %628 : vector<2x16xi1> to vector<2x16xi32>
    %630 = arith.sitofp %629 : vector<2x16xi32> to vector<2x16xf32>
    %631 = arith.truncf %630 : vector<2x16xf32> to vector<2x16xbf16>
    %c7_i32_165 = arith.constant 7 : i32
    return
  }
}

</mosaic_0001>

<llo_original>
// kernel: tpu_custom_call.1
$region0: #{tpu_custom_call.1}
  #allocation0 [shape = 'u32[]', space=smem, size = 0x4, offset = 0x4, fixed_abs, tag = 'smem constant byte address 0x4 - core index']
  #allocation1 [shape = 'u32[144,128]{1,0:T(1,128)}', space=vmem, size = 0x12000, scoped, tag = 'internal scratch']
  #allocation2 [shape = 'f32[16,128]{1,0:T(8,128)}', space=vmem, size = 0x2000, scoped, tag = 'scratch operand']
  %s0 = inlined_call_operand.vmem [shape: f32[16,16], index: 0, kind: input, shape index: {}]
  %s1 = inlined_call_operand.vmem [shape: f32[2,16], index: 1, kind: input, shape index: {}]
  %s2 = inlined_call_operand.hbm [shape: bf16[16,128], index: 2, kind: input, shape index: {}]
  %s3 = inlined_call_operand.vmem [shape: bf16[32,128], index: 3, kind: input, shape index: {}]
  %s4 = inlined_call_operand.hbm [shape: f32[1,128], index: 4, kind: input, shape index: {}]
  %s5 = inlined_call_operand.hbm [shape: bf16[16,128], index: 5, kind: input, shape index: {}]
  %s6 = inlined_call_operand.hbm [shape: bf16[32,128], index: 6, kind: input, shape index: {}]
  %s7 = inlined_call_operand.vmem [shape: f32[1,128], index: 7, kind: input, shape index: {}]
  %s8 = inlined_call_operand.vmem [shape: bf16[32,16], index: 8, kind: input, shape index: {}]
  %s9 = inlined_call_operand.vmem [shape: f32[1,16], index: 9, kind: input, shape index: {}]
  %s10 = inlined_call_operand.hbm [shape: f32[8,2,16], index: 10, kind: output, shape index: {}]
  %s11 = sld [smem:[#allocation0]]
  $region66: #{tpu_custom_call.1} parent=0
    _
  %s13 = ssub.s32 1, %s11
  %s14 = scalar_select 0, %s13, %s11
  $region1: #{tpu_custom_call.1} parent=0
    #allocation3 [shape = 'u8[4096]{0}', space=vmem, size = 0x1000, scoped, tag = 'input window, operand 2, single buffered']
    #allocation4 [shape = 's32[1]{0}', space=sflag, size = 0x4, scoped, tag = 'scoped memory for tpu_custom_call.1']
    #allocation5 [shape = 's32[1]{0}', space=sflag, size = 0x4, scoped, tag = 'scoped memory for tpu_custom_call.1']
    #allocation6 [shape = 'u8[512]{0}', space=vmem, size = 0x400, scoped, tag = 'input window, operand 4, single buffered']
    #allocation7 [shape = 's32[1]{0}', space=sflag, size = 0x4, scoped, tag = 'scoped memory for tpu_custom_call.1']
    #allocation8 [shape = 'u8[4096]{0}', space=vmem, size = 0x1000, scoped, tag = 'input window, operand 5, single buffered']
    #allocation9 [shape = 'u8[8192]{0}', space=vmem, size = 0x2000, scoped, tag = 'input window, operand 6, single buffered']
    #allocation10 [shape = 's32[1]{0}', space=sflag, size = 0x4, scoped, tag = 'scoped memory for tpu_custom_call.1']
    #allocation11 [shape = 'u8[8192]{0}', space=vmem, size = 0x2000, scoped, tag = 'output window, operand 0, single buffered']
    %15 = vsyncpa [#allocation4], 0
    %16 = vsyncpa [#allocation7], 0
    %17 = vsyncpa [#allocation10], 0
    %18 = vsyncpa [#allocation5], 0
    // Predicated region
    $region2: #{tpu_custom_call.1} parent=1 // pred_check
      _
    $region3: #{tpu_custom_call.1} parent=1 // pred_check_branch
      %20 = sbr.rel (0) target = $region5
    $region4: #{tpu_custom_call.1} parent=1 // pred_region
      _
    $region5: #{tpu_custom_call.1} parent=1 // pred_fallthru
      _
    // Predicated region
    $region6: #{tpu_custom_call.1} parent=1 // pred_check
      _
    $region7: #{tpu_custom_call.1} parent=1 // pred_check_branch
      %22 = sbr.rel (0) target = $region9
    $region8: #{tpu_custom_call.1} parent=1 // pred_region
      _
    $region9: #{tpu_custom_call.1} parent=1 // pred_fallthru
      _
    // Predicated region
    $region10: #{tpu_custom_call.1} parent=1 // pred_check
      _
    $region11: #{tpu_custom_call.1} parent=1 // pred_check_branch
      %24 = sbr.rel (0) target = $region13
    $region12: #{tpu_custom_call.1} parent=1 // pred_region
      %s26 = ssub.s32 128, 128
      %27 = vsyncadd [#allocation4], %s26
      %s28 = sshll.u32 [#allocation3], 4
      %s29 = int_to_ptr.vmem [resolvable:$true] %s28
      %34 = dma.hbm_to_vmem [thread:$0]  %s2, 128, %s29, [#allocation4], 64, 64, 4
    $region13: #{tpu_custom_call.1} parent=1 // pred_fallthru
      _
    // Predicated region
    $region14: #{tpu_custom_call.1} parent=1 // pred_check
      _
    $region15: #{tpu_custom_call.1} parent=1 // pred_check_branch
      %36 = sbr.rel (0) target = $region17
    $region16: #{tpu_custom_call.1} parent=1 // pred_region
      _
    $region17: #{tpu_custom_call.1} parent=1 // pred_fallthru
      _
    // Predicated region
    $region18: #{tpu_custom_call.1} parent=1 // pred_check
      _
    $region19: #{tpu_custom_call.1} parent=1 // pred_check_branch
      %38 = sbr.rel (0) target = $region21
    $region20: #{tpu_custom_call.1} parent=1 // pred_region
      %s40 = ssub.s32 16, 16
      %41 = vsyncadd [#allocation7], %s40
      %s43 = sshll.u32 [#allocation6], 4
      %s44 = int_to_ptr.vmem [resolvable:$true] %s43
      %46 = dma.hbm_to_vmem [thread:$0]  %s4, 16, %s44, [#allocation7]
    $region21: #{tpu_custom_call.1} parent=1 // pred_fallthru
      _
    // Predicated region
    $region22: #{tpu_custom_call.1} parent=1 // pred_check
      _
    $region23: #{tpu_custom_call.1} parent=1 // pred_check_branch
      %48 = sbr.rel (0) target = $region25
    $region24: #{tpu_custom_call.1} parent=1 // pred_region
      %s50 = ssub.s32 128, 128
      %51 = vsyncadd [#allocation7], %s50
      %s52 = sshll.u32 [#allocation8], 4
      %s53 = int_to_ptr.vmem [resolvable:$true] %s52
      %58 = dma.hbm_to_vmem [thread:$0]  %s5, 128, %s53, [#allocation7], 64, 64, 4
    $region25: #{tpu_custom_call.1} parent=1 // pred_fallthru
      _
    // Predicated region
    $region26: #{tpu_custom_call.1} parent=1 // pred_check
      _
    $region27: #{tpu_custom_call.1} parent=1 // pred_check_branch
      %60 = sbr.rel (0) target = $region29
    $region28: #{tpu_custom_call.1} parent=1 // pred_region
      %s62 = ssub.s32 256, 256
      %63 = vsyncadd [#allocation10], %s62
      %s64 = sshll.u32 [#allocation9], 4
      %s65 = int_to_ptr.vmem [resolvable:$true] %s64
      %70 = dma.hbm_to_vmem [thread:$0]  %s6, 256, %s65, [#allocation10], 64, 64, 4
    $region29: #{tpu_custom_call.1} parent=1 // pred_fallthru
      _
    // Predicated region
    $region30: #{tpu_custom_call.1} parent=1 // pred_check
      _
    $region31: #{tpu_custom_call.1} parent=1 // pred_check_branch
      %72 = sbr.rel (0) target = $region33
    $region32: #{tpu_custom_call.1} parent=1 // pred_region
      _
    $region33: #{tpu_custom_call.1} parent=1 // pred_fallthru
      _
    // Predicated region
    $region34: #{tpu_custom_call.1} parent=1 // pred_check
      _
    $region35: #{tpu_custom_call.1} parent=1 // pred_check_branch
      %74 = sbr.rel (0) target = $region37
    $region36: #{tpu_custom_call.1} parent=1 // pred_region
      _
    $region37: #{tpu_custom_call.1} parent=1 // pred_fallthru
      _
    // Predicated region
    $region38: #{tpu_custom_call.1} parent=1 // pred_check
      _
    $region39: #{tpu_custom_call.1} parent=1 // pred_check_branch
      %76 = sbr.rel (0) target = $region41
    $region40: #{tpu_custom_call.1} parent=1 // pred_region
      _
    $region41: #{tpu_custom_call.1} parent=1 // pred_fallthru
      _
    // Predicated region
    $region42: #{tpu_custom_call.1} parent=1 // pred_check
      _
    $region43: #{tpu_custom_call.1} parent=1 // pred_check_branch
      %78 = sbr.rel (0) target = $region45
    $region44: #{tpu_custom_call.1} parent=1 // pred_region
      %79 = dma.done [#allocation4], 128
    $region45: #{tpu_custom_call.1} parent=1 // pred_fallthru
      _
    // Predicated region
    $region46: #{tpu_custom_call.1} parent=1 // pred_check
      _
    $region47: #{tpu_custom_call.1} parent=1 // pred_check_branch
      %81 = sbr.rel (0) target = $region49
    $region48: #{tpu_custom_call.1} parent=1 // pred_region
      %82 = dma.done [#allocation7], 16
    $region49: #{tpu_custom_call.1} parent=1 // pred_fallthru
      _
    // Predicated region
    $region50: #{tpu_custom_call.1} parent=1 // pred_check
      _
    $region51: #{tpu_custom_call.1} parent=1 // pred_check_branch
      %84 = sbr.rel (0) target = $region53
    $region52: #{tpu_custom_call.1} parent=1 // pred_region
      %85 = dma.done [#allocation7], 128
    $region53: #{tpu_custom_call.1} parent=1 // pred_fallthru
      _
    // Predicated region
    $region54: #{tpu_custom_call.1} parent=1 // pred_check
      _
    $region55: #{tpu_custom_call.1} parent=1 // pred_check_branch
      %87 = sbr.rel (0) target = $region57
    $region56: #{tpu_custom_call.1} parent=1 // pred_region
      %88 = dma.done [#allocation10], 256
    $region57: #{tpu_custom_call.1} parent=1 // pred_fallthru
      _
    %v90 = vld [vmem:[%s3] sm:$0xf]
    %v91 = vld [vmem:[%s3 + $0x4] sm:$0xf]
    %v92 = vld [vmem:[%s3 + $0x8] sm:$0xf]
    %v93 = vld [vmem:[%s3 + $0xc] sm:$0xf]
    %v94 = vld [vmem:[#allocation8] sm:$0xf]
    %v95 = vld [vmem:[#allocation8 + $0x4] sm:$0xf]
    %v96 = vld [vmem:[#allocation9] sm:$0xf]
    %v97 = vld [vmem:[#allocation9 + $0x4] sm:$0xf]
    %v98 = vld [vmem:[#allocation9 + $0x8] sm:$0xf]
    %v99 = vld [vmem:[#allocation9 + $0xc] sm:$0xf]
    %v100 = vld [vmem:[%s8] sm:$0xf]
    %v101 = vld [vmem:[%s8 + $0x4] sm:$0xf]
    %v102 = vld [vmem:[%s8 + $0x8] sm:$0xf]
    %v103 = vld [vmem:[%s8 + $0xc] sm:$0xf]
    %v104 = vld [vmem:[%s7] sm:$0x1]
    %v106 = vlaneseq
    %v107 = vshrl.u32 %v106, 7
    %v108 = vsub.s32 0, %v107
    %v109 = vrot.slane %v104, %v108
    %v111 = vld [vmem:[%s9] sm:$0x1]
    %v113 = vlaneseq
    %v114 = vshrl.u32 %v113, 7
    %v115 = vsub.s32 0, %v114
    %v116 = vrot.slane %v111, %v115
    %v118 = vlaneseq
    %v119 = vand.u32 %v118, 127
    %v120 = vld [vmem:[%s0] sm:$0xff]
    %v121 = vld [vmem:[%s0 + $0x8] sm:$0xff]
    %v122 = vpack.c.bf16 %v121, %v120
    %v123 = vld [vmem:[#allocation3] sm:$0xf]
    %v124 = vld [vmem:[#allocation3 + $0x4] sm:$0xf]
    %v125 = vld [vmem:[#allocation6] sm:$0x1]
    %v127 = vlaneseq
    %v128 = vshrl.u32 %v127, 7
    %v129 = vsub.s32 0, %v128
    %v130 = vrot.slane %v125, %v129
    %v134 = vunpack.c.l.b16 %v123
    %v135 = vunpack.c.l.b16 %v124
    %v136 = vpack.c.b16 %v135, %v134
    %vm138 = vcmask 130048
    %v140 = vsel %vm138, %v122, 0
    %142 = vmatprep.subr.bf16.mxu0 0
    %143 = vmatpush1.bf16.msra.mxu0 %v136
    %144 = vmatprep.subr.bf16.mxu0 0
    %145 = vmatpush1.bf16.msra.mxu0 0
    %146 = vmatprep.subr.bf16.mxu0 0
    %147 = vmatpush1.bf16.msra.mxu0 0
    %148 = vmatprep.subr.bf16.mxu0 0
    %149 = vmatpush1.bf16.msra.mxu0 0
    %150 = vmatprep.subr.bf16.mxu0 0
    %151 = vmatpush1.bf16.msra.mxu0 0
    %152 = vmatprep.subr.bf16.mxu0 0
    %153 = vmatpush1.bf16.msra.mxu0 0
    %154 = vmatprep.subr.bf16.mxu0 0
    %155 = vmatpush1.bf16.msra.mxu0 0
    %156 = vmatprep.subr.bf16.mxu0 0
    %157 = vmatpush1.bf16.msra.mxu0 0
    %158 = vmatprep.subr.bf16.mxu0 0
    %159 = vmatpush1.bf16.msra.mxu0 0
    %160 = vmatprep.subr.bf16.mxu0 0
    %161 = vmatpush1.bf16.msra.mxu0 0
    %162 = vmatprep.subr.bf16.mxu0 0
    %163 = vmatpush1.bf16.msra.mxu0 0
    %164 = vmatprep.subr.bf16.mxu0 0
    %165 = vmatpush1.bf16.msra.mxu0 0
    %166 = vmatprep.subr.bf16.mxu0 0
    %167 = vmatpush1.bf16.msra.mxu0 0
    %168 = vmatprep.subr.bf16.mxu0 0
    %169 = vmatpush1.bf16.msra.mxu0 0
    %170 = vmatprep.subr.bf16.mxu0 0
    %171 = vmatpush1.bf16.msra.mxu0 0
    %172 = vmatprep.subr.bf16.mxu0 0
    %173 = vmatpush1.bf16.msra.mxu0 0
    %174 = vmatprep.mubr.bf16.mxu0 0
    %175 = vmatmul.mubr.bf16.gmra.mrb[0].mxu0 %v140
    %v176 = vpop.f32.mrb[0].mxu0
    %v177 = vadd.f32 %v130, %v176
    %v178 = vpop.f32.mrb[0].mxu0
    %v179 = vpop.f32.mrb[0].mxu0
    %v180 = vadd.f32 %v130, %v179
    %v181 = vpop.f32.mrb[0].mxu0
    %182 = vdwg.mxu0
    %183 = vst [vmem:[#allocation2] sm:$0xff] %v177
    %184 = vst [vmem:[#allocation2 + $0x8] sm:$0xff] %v180
    %v185 = vld [vmem:[#allocation2] sm:$0x3]
    %v190 = vunpack.c.l.b16 %v90
    %v191 = vunpack.c.l.b16 %v91
    %v192 = vunpack.c.l.b16 %v92
    %v193 = vunpack.c.l.b16 %v93
    %v194 = vpack.c.b16 %v191, %v190
    %v195 = vpack.c.b16 %v193, %v192
    %vm198 = vcmask 261120
    %v200 = vsel %vm198, 0, 0
    %202 = vmatprep.subr.bf16.mxu0 0
    %203 = vmatpush1.bf16.msra.mxu0 %v194
    %204 = vmatprep.subr.bf16.mxu0 0
    %205 = vmatpush1.bf16.msra.mxu0 %v195
    %206 = vmatprep.subr.bf16.mxu0 0
    %207 = vmatpush1.bf16.msra.mxu0 0
    %208 = vmatprep.subr.bf16.mxu0 0
    %209 = vmatpush1.bf16.msra.mxu0 0
    %210 = vmatprep.subr.bf16.mxu0 0
    %211 = vmatpush1.bf16.msra.mxu0 0
    %212 = vmatprep.subr.bf16.mxu0 0
    %213 = vmatpush1.bf16.msra.mxu0 0
    %214 = vmatprep.subr.bf16.mxu0 0
    %215 = vmatpush1.bf16.msra.mxu0 0
    %216 = vmatprep.subr.bf16.mxu0 0
    %217 = vmatpush1.bf16.msra.mxu0 0
    %218 = vmatprep.subr.bf16.mxu0 0
    %219 = vmatpush1.bf16.msra.mxu0 0
    %220 = vmatprep.subr.bf16.mxu0 0
    %221 = vmatpush1.bf16.msra.mxu0 0
    %222 = vmatprep.subr.bf16.mxu0 0
    %223 = vmatpush1.bf16.msra.mxu0 0
    %224 = vmatprep.subr.bf16.mxu0 0
    %225 = vmatpush1.bf16.msra.mxu0 0
    %226 = vmatprep.subr.bf16.mxu0 0
    %227 = vmatpush1.bf16.msra.mxu0 0
    %228 = vmatprep.subr.bf16.mxu0 0
    %229 = vmatpush1.bf16.msra.mxu0 0
    %230 = vmatprep.subr.bf16.mxu0 0
    %231 = vmatpush1.bf16.msra.mxu0 0
    %232 = vmatprep.subr.bf16.mxu0 0
    %233 = vmatpush1.bf16.msra.mxu0 0
    %234 = vmatprep.mubr.bf16.mxu0 0
    %235 = vmatmul.mubr.bf16.gmra.mrb[0].mxu0 %v200
    %v236 = vpop.f32.mrb[0].mxu0
    %v237 = vadd.f32 0.0, %v236
    %v238 = vpop.f32.mrb[0].mxu0
    %v239 = vpop.f32.mrb[0].mxu0
    %v240 = vpop.f32.mrb[0].mxu0
    %241 = vdwg.mxu0
    %v242 = vadd.f32 %v185, %v237
    %v243 = vxor.u32 %v242, 2147483648
    %v244 = vmul.f32 %v243, 1.442695
    %v245 = vpow.pop %v244
    %v246 = vadd.f32 %v245, 1.0
    %v247 = vrcp.pop %v246
    %v248 = vmul.f32 1.0, %v247
    %v249 = vtanh.pop %v242
    %v250 = vmul.f32 %v248, 0.0
    %252 = vrot.lane.b32.xlu0 %v249, 64
    %v253 = vpop.permute.xlu0 %252
    %v255 = vmul.f32 %v248, %v253
    %257 = vrot.lane.b32.xlu0 %v255, 32
    %v258 = vpop.permute.xlu0 %257
    %v260 = vadd.f32 %v250, %v258
    %v261 = vtanh.pop %v260
    %263 = vrot.lane.b32.xlu0 %v261, 64
    %v264 = vpop.permute.xlu0 %263
    %v266 = vmul.f32 %v248, %v264
    %v267 = vld [vmem:[#allocation2 + $0x2] sm:$0x3]
    %v268 = vpack.c.bf16 %v266, %v266
    %270 = vrot.lane.b32.xlu0 %v268, 32
    %v271 = vpop.permute.xlu0 %270
    %v273 = vsel %vm198, %v271, 0
    %275 = vmatprep.subr.bf16.mxu0 0
    %276 = vmatpush1.bf16.msra.mxu0 %v194
    %277 = vmatprep.subr.bf16.mxu0 0
    %278 = vmatpush1.bf16.msra.mxu0 %v195
    %279 = vmatprep.subr.bf16.mxu0 0
    %280 = vmatpush1.bf16.msra.mxu0 0
    %281 = vmatprep.subr.bf16.mxu0 0
    %282 = vmatpush1.bf16.msra.mxu0 0
    %283 = vmatprep.subr.bf16.mxu0 0
    %284 = vmatpush1.bf16.msra.mxu0 0
    %285 = vmatprep.subr.bf16.mxu0 0
    %286 = vmatpush1.bf16.msra.mxu0 0
    %287 = vmatprep.subr.bf16.mxu0 0
    %288 = vmatpush1.bf16.msra.mxu0 0
    %289 = vmatprep.subr.bf16.mxu0 0
    %290 = vmatpush1.bf16.msra.mxu0 0
    %291 = vmatprep.subr.bf16.mxu0 0
    %292 = vmatpush1.bf16.msra.mxu0 0
    %293 = vmatprep.subr.bf16.mxu0 0
    %294 = vmatpush1.bf16.msra.mxu0 0
    %295 = vmatprep.subr.bf16.mxu0 0
    %296 = vmatpush1.bf16.msra.mxu0 0
    %297 = vmatprep.subr.bf16.mxu0 0
    %298 = vmatpush1.bf16.msra.mxu0 0
    %299 = vmatprep.subr.bf16.mxu0 0
    %300 = vmatpush1.bf16.msra.mxu0 0
    %301 = vmatprep.subr.bf16.mxu0 0
    %302 = vmatpush1.bf16.msra.mxu0 0
    %303 = vmatprep.subr.bf16.mxu0 0
    %304 = vmatpush1.bf16.msra.mxu0 0
    %305 = vmatprep.subr.bf16.mxu0 0
    %306 = vmatpush1.bf16.msra.mxu0 0
    %307 = vmatprep.mubr.bf16.mxu0 0
    %308 = vmatmul.mubr.bf16.gmra.mrb[0].mxu0 %v273
    %v309 = vpop.f32.mrb[0].mxu0
    %v310 = vadd.f32 0.0, %v309
    %v311 = vpop.f32.mrb[0].mxu0
    %v312 = vpop.f32.mrb[0].mxu0
    %v313 = vpop.f32.mrb[0].mxu0
    %314 = vdwg.mxu0
    %v315 = vadd.f32 %v267, %v310
    %v316 = vxor.u32 %v315, 2147483648
    %v317 = vmul.f32 %v316, 1.442695
    %v318 = vpow.pop %v317
    %v319 = vadd.f32 %v318, 1.0
    %v320 = vrcp.pop %v319
    %v321 = vmul.f32 1.0, %v320
    %v322 = vtanh.pop %v315
    %v323 = vmul.f32 %v321, %v260
    %325 = vrot.lane.b32.xlu0 %v322, 64
    %v326 = vpop.permute.xlu0 %325
    %v328 = vmul.f32 %v321, %v326
    %330 = vrot.lane.b32.xlu0 %v328, 32
    %v331 = vpop.permute.xlu0 %330
    %v333 = vadd.f32 %v323, %v331
    %v334 = vtanh.pop %v333
    %336 = vrot.lane.b32.xlu0 %v334, 64
    %v337 = vpop.permute.xlu0 %336
    %v339 = vmul.f32 %v321, %v337
    %v340 = vld [vmem:[#allocation2 + $0x4] sm:$0x3]
    %v341 = vpack.c.bf16 %v339, %v339
    %343 = vrot.lane.b32.xlu0 %v341, 32
    %v344 = vpop.permute.xlu0 %343
    %v346 = vsel %vm198, %v344, 0
    %348 = vmatprep.subr.bf16.mxu0 0
    %349 = vmatpush1.bf16.msra.mxu0 %v194
    %350 = vmatprep.subr.bf16.mxu0 0
    %351 = vmatpush1.bf16.msra.mxu0 %v195
    %352 = vmatprep.subr.bf16.mxu0 0
    %353 = vmatpush1.bf16.msra.mxu0 0
    %354 = vmatprep.subr.bf16.mxu0 0
    %355 = vmatpush1.bf16.msra.mxu0 0
    %356 = vmatprep.subr.bf16.mxu0 0
    %357 = vmatpush1.bf16.msra.mxu0 0
    %358 = vmatprep.subr.bf16.mxu0 0
    %359 = vmatpush1.bf16.msra.mxu0 0
    %360 = vmatprep.subr.bf16.mxu0 0
    %361 = vmatpush1.bf16.msra.mxu0 0
    %362 = vmatprep.subr.bf16.mxu0 0
    %363 = vmatpush1.bf16.msra.mxu0 0
    %364 = vmatprep.subr.bf16.mxu0 0
    %365 = vmatpush1.bf16.msra.mxu0 0
    %366 = vmatprep.subr.bf16.mxu0 0
    %367 = vmatpush1.bf16.msra.mxu0 0
    %368 = vmatprep.subr.bf16.mxu0 0
    %369 = vmatpush1.bf16.msra.mxu0 0
    %370 = vmatprep.subr.bf16.mxu0 0
    %371 = vmatpush1.bf16.msra.mxu0 0
    %372 = vmatprep.subr.bf16.mxu0 0
    %373 = vmatpush1.bf16.msra.mxu0 0
    %374 = vmatprep.subr.bf16.mxu0 0
    %375 = vmatpush1.bf16.msra.mxu0 0
    %376 = vmatprep.subr.bf16.mxu0 0
    %377 = vmatpush1.bf16.msra.mxu0 0
    %378 = vmatprep.subr.bf16.mxu0 0
    %379 = vmatpush1.bf16.msra.mxu0 0
    %380 = vmatprep.mubr.bf16.mxu0 0
    %381 = vmatmul.mubr.bf16.gmra.mrb[0].mxu0 %v346
    %v382 = vpop.f32.mrb[0].mxu0
    %v383 = vadd.f32 0.0, %v382
    %v384 = vpop.f32.mrb[0].mxu0
    %v385 = vpop.f32.mrb[0].mxu0
    %v386 = vpop.f32.mrb[0].mxu0
    %387 = vdwg.mxu0
    %v388 = vadd.f32 %v340, %v383
    %v389 = vxor.u32 %v388, 2147483648
    %v390 = vmul.f32 %v389, 1.442695
    %v391 = vpow.pop %v390
    %v392 = vadd.f32 %v391, 1.0
    %v393 = vrcp.pop %v392
    %v394 = vmul.f32 1.0, %v393
    %v395 = vtanh.pop %v388
    %v396 = vmul.f32 %v394, %v333
    %398 = vrot.lane.b32.xlu0 %v395, 64
    %v399 = vpop.permute.xlu0 %398
    %v401 = vmul.f32 %v394, %v399
    %403 = vrot.lane.b32.xlu0 %v401, 32
    %v404 = vpop.permute.xlu0 %403
    %v406 = vadd.f32 %v396, %v404
    %v407 = vtanh.pop %v406
    %409 = vrot.lane.b32.xlu0 %v407, 64
    %v410 = vpop.permute.xlu0 %409
    %v412 = vmul.f32 %v394, %v410
    %v413 = vld [vmem:[#allocation2 + $0x6] sm:$0x3]
    %v414 = vpack.c.bf16 %v412, %v412
    %416 = vrot.lane.b32.xlu0 %v414, 32
    %v417 = vpop.permute.xlu0 %416
    %v419 = vsel %vm198, %v417, 0
    %421 = vmatprep.subr.bf16.mxu0 0
    %422 = vmatpush1.bf16.msra.mxu0 %v194
    %423 = vmatprep.subr.bf16.mxu0 0
    %424 = vmatpush1.bf16.msra.mxu0 %v195
    %425 = vmatprep.subr.bf16.mxu0 0
    %426 = vmatpush1.bf16.msra.mxu0 0
    %427 = vmatprep.subr.bf16.mxu0 0
    %428 = vmatpush1.bf16.msra.mxu0 0
    %429 = vmatprep.subr.bf16.mxu0 0
    %430 = vmatpush1.bf16.msra.mxu0 0
    %431 = vmatprep.subr.bf16.mxu0 0
    %432 = vmatpush1.bf16.msra.mxu0 0
    %433 = vmatprep.subr.bf16.mxu0 0
    %434 = vmatpush1.bf16.msra.mxu0 0
    %435 = vmatprep.subr.bf16.mxu0 0
    %436 = vmatpush1.bf16.msra.mxu0 0
    %437 = vmatprep.subr.bf16.mxu0 0
    %438 = vmatpush1.bf16.msra.mxu0 0
    %439 = vmatprep.subr.bf16.mxu0 0
    %440 = vmatpush1.bf16.msra.mxu0 0
    %441 = vmatprep.subr.bf16.mxu0 0
    %442 = vmatpush1.bf16.msra.mxu0 0
    %443 = vmatprep.subr.bf16.mxu0 0
    %444 = vmatpush1.bf16.msra.mxu0 0
    %445 = vmatprep.subr.bf16.mxu0 0
    %446 = vmatpush1.bf16.msra.mxu0 0
    %447 = vmatprep.subr.bf16.mxu0 0
    %448 = vmatpush1.bf16.msra.mxu0 0
    %449 = vmatprep.subr.bf16.mxu0 0
    %450 = vmatpush1.bf16.msra.mxu0 0
    %451 = vmatprep.subr.bf16.mxu0 0
    %452 = vmatpush1.bf16.msra.mxu0 0
    %453 = vmatprep.mubr.bf16.mxu0 0
    %454 = vmatmul.mubr.bf16.gmra.mrb[0].mxu0 %v419
    %v455 = vpop.f32.mrb[0].mxu0
    %v456 = vadd.f32 0.0, %v455
    %v457 = vpop.f32.mrb[0].mxu0
    %v458 = vpop.f32.mrb[0].mxu0
    %v459 = vpop.f32.mrb[0].mxu0
    %460 = vdwg.mxu0
    %v461 = vadd.f32 %v413, %v456
    %v462 = vxor.u32 %v461, 2147483648
    %v463 = vmul.f32 %v462, 1.442695
    %v464 = vpow.pop %v463
    %v465 = vadd.f32 %v464, 1.0
    %v466 = vrcp.pop %v465
    %v467 = vmul.f32 1.0, %v466
    %v468 = vtanh.pop %v461
    %v469 = vmul.f32 %v467, %v406
    %471 = vrot.lane.b32.xlu0 %v468, 64
    %v472 = vpop.permute.xlu0 %471
    %v474 = vmul.f32 %v467, %v472
    %476 = vrot.lane.b32.xlu0 %v474, 32
    %v477 = vpop.permute.xlu0 %476
    %v479 = vadd.f32 %v469, %v477
    %v480 = vtanh.pop %v479
    %482 = vrot.lane.b32.xlu0 %v480, 64
    %v483 = vpop.permute.xlu0 %482
    %v485 = vmul.f32 %v467, %v483
    %v486 = vld [vmem:[#allocation2 + $0x8] sm:$0x3]
    %v487 = vpack.c.bf16 %v485, %v485
    %489 = vrot.lane.b32.xlu0 %v487, 32
    %v490 = vpop.permute.xlu0 %489
    %v492 = vsel %vm198, %v490, 0
    %494 = vmatprep.subr.bf16.mxu0 0
    %495 = vmatpush1.bf16.msra.mxu0 %v194
    %496 = vmatprep.subr.bf16.mxu0 0
    %497 = vmatpush1.bf16.msra.mxu0 %v195
    %498 = vmatprep.subr.bf16.mxu0 0
    %499 = vmatpush1.bf16.msra.mxu0 0
    %500 = vmatprep.subr.bf16.mxu0 0
    %501 = vmatpush1.bf16.msra.mxu0 0
    %502 = vmatprep.subr.bf16.mxu0 0
    %503 = vmatpush1.bf16.msra.mxu0 0
    %504 = vmatprep.subr.bf16.mxu0 0
    %505 = vmatpush1.bf16.msra.mxu0 0
    %506 = vmatprep.subr.bf16.mxu0 0
    %507 = vmatpush1.bf16.msra.mxu0 0
    %508 = vmatprep.subr.bf16.mxu0 0
    %509 = vmatpush1.bf16.msra.mxu0 0
    %510 = vmatprep.subr.bf16.mxu0 0
    %511 = vmatpush1.bf16.msra.mxu0 0
    %512 = vmatprep.subr.bf16.mxu0 0
    %513 = vmatpush1.bf16.msra.mxu0 0
    %514 = vmatprep.subr.bf16.mxu0 0
    %515 = vmatpush1.bf16.msra.mxu0 0
    %516 = vmatprep.subr.bf16.mxu0 0
    %517 = vmatpush1.bf16.msra.mxu0 0
    %518 = vmatprep.subr.bf16.mxu0 0
    %519 = vmatpush1.bf16.msra.mxu0 0
    %520 = vmatprep.subr.bf16.mxu0 0
    %521 = vmatpush1.bf16.msra.mxu0 0
    %522 = vmatprep.subr.bf16.mxu0 0
    %523 = vmatpush1.bf16.msra.mxu0 0
    %524 = vmatprep.subr.bf16.mxu0 0
    %525 = vmatpush1.bf16.msra.mxu0 0
    %526 = vmatprep.mubr.bf16.mxu0 0
    %527 = vmatmul.mubr.bf16.gmra.mrb[0].mxu0 %v492
    %v528 = vpop.f32.mrb[0].mxu0
    %v529 = vadd.f32 0.0, %v528
    %v530 = vpop.f32.mrb[0].mxu0
    %v531 = vpop.f32.mrb[0].mxu0
    %v532 = vpop.f32.mrb[0].mxu0
    %533 = vdwg.mxu0
    %v534 = vadd.f32 %v486, %v529
    %v535 = vxor.u32 %v534, 2147483648
    %v536 = vmul.f32 %v535, 1.442695
    %v537 = vpow.pop %v536
    %v538 = vadd.f32 %v537, 1.0
    %v539 = vrcp.pop %v538
    %v540 = vmul.f32 1.0, %v539
    %v541 = vtanh.pop %v534
    %v542 = vmul.f32 %v540, %v479
    %544 = vrot.lane.b32.xlu0 %v541, 64
    %v545 = vpop.permute.xlu0 %544
    %v547 = vmul.f32 %v540, %v545
    %549 = vrot.lane.b32.xlu0 %v547, 32
    %v550 = vpop.permute.xlu0 %549
    %v552 = vadd.f32 %v542, %v550
    %v553 = vtanh.pop %v552
    %555 = vrot.lane.b32.xlu0 %v553, 64
    %v556 = vpop.permute.xlu0 %555
    %v558 = vmul.f32 %v540, %v556
    %v559 = vld [vmem:[#allocation2 + $0xa] sm:$0x3]
    %v560 = vpack.c.bf16 %v558, %v558
    %562 = vrot.lane.b32.xlu0 %v560, 32
    %v563 = vpop.permute.xlu0 %562
    %v565 = vsel %vm198, %v563, 0
    %567 = vmatprep.subr.bf16.mxu0 0
    %568 = vmatpush1.bf16.msra.mxu0 %v194
    %569 = vmatprep.subr.bf16.mxu0 0
    %570 = vmatpush1.bf16.msra.mxu0 %v195
    %571 = vmatprep.subr.bf16.mxu0 0
    %572 = vmatpush1.bf16.msra.mxu0 0
    %573 = vmatprep.subr.bf16.mxu0 0
    %574 = vmatpush1.bf16.msra.mxu0 0
    %575 = vmatprep.subr.bf16.mxu0 0
    %576 = vmatpush1.bf16.msra.mxu0 0
    %577 = vmatprep.subr.bf16.mxu0 0
    %578 = vmatpush1.bf16.msra.mxu0 0
    %579 = vmatprep.subr.bf16.mxu0 0
    %580 = vmatpush1.bf16.msra.mxu0 0
    %581 = vmatprep.subr.bf16.mxu0 0
    %582 = vmatpush1.bf16.msra.mxu0 0
    %583 = vmatprep.subr.bf16.mxu0 0
    %584 = vmatpush1.bf16.msra.mxu0 0
    %585 = vmatprep.subr.bf16.mxu0 0
    %586 = vmatpush1.bf16.msra.mxu0 0
    %587 = vmatprep.subr.bf16.mxu0 0
    %588 = vmatpush1.bf16.msra.mxu0 0
    %589 = vmatprep.subr.bf16.mxu0 0
    %590 = vmatpush1.bf16.msra.mxu0 0
    %591 = vmatprep.subr.bf16.mxu0 0
    %592 = vmatpush1.bf16.msra.mxu0 0
    %593 = vmatprep.subr.bf16.mxu0 0
    %594 = vmatpush1.bf16.msra.mxu0 0
    %595 = vmatprep.subr.bf16.mxu0 0
    %596 = vmatpush1.bf16.msra.mxu0 0
    %597 = vmatprep.subr.bf16.mxu0 0
    %598 = vmatpush1.bf16.msra.mxu0 0
    %599 = vmatprep.mubr.bf16.mxu0 0
    %600 = vmatmul.mubr.bf16.gmra.mrb[0].mxu0 %v565
    %v601 = vpop.f32.mrb[0].mxu0
    %v602 = vadd.f32 0.0, %v601
    %v603 = vpop.f32.mrb[0].mxu0
    %v604 = vpop.f32.mrb[0].mxu0
    %v605 = vpop.f32.mrb[0].mxu0
    %606 = vdwg.mxu0
    %v607 = vadd.f32 %v559, %v602
    %v608 = vxor.u32 %v607, 2147483648
    %v609 = vmul.f32 %v608, 1.442695
    %v610 = vpow.pop %v609
    %v611 = vadd.f32 %v610, 1.0
    %v612 = vrcp.pop %v611
    %v613 = vmul.f32 1.0, %v612
    %v614 = vtanh.pop %v607
    %v615 = vmul.f32 %v613, %v552
    %617 = vrot.lane.b32.xlu0 %v614, 64
    %v618 = vpop.permute.xlu0 %617
    %v620 = vmul.f32 %v613, %v618
    %622 = vrot.lane.b32.xlu0 %v620, 32
    %v623 = vpop.permute.xlu0 %622
    %v625 = vadd.f32 %v615, %v623
    %v626 = vtanh.pop %v625
    %628 = vrot.lane.b32.xlu0 %v626, 64
    %v629 = vpop.permute.xlu0 %628
    %v631 = vmul.f32 %v613, %v629
    %v632 = vld [vmem:[#allocation2 + $0xc] sm:$0x3]
    %v633 = vpack.c.bf16 %v631, %v631
    %635 = vrot.lane.b32.xlu0 %v633, 32
    %v636 = vpop.permute.xlu0 %635
    %v638 = vsel %vm198, %v636, 0
    %640 = vmatprep.subr.bf16.mxu0 0
    %641 = vmatpush1.bf16.msra.mxu0 %v194
    %642 = vmatprep.subr.bf16.mxu0 0
    %643 = vmatpush1.bf16.msra.mxu0 %v195
    %644 = vmatprep.subr.bf16.mxu0 0
    %645 = vmatpush1.bf16.msra.mxu0 0
    %646 = vmatprep.subr.bf16.mxu0 0
    %647 = vmatpush1.bf16.msra.mxu0 0
    %648 = vmatprep.subr.bf16.mxu0 0
    %649 = vmatpush1.bf16.msra.mxu0 0
    %650 = vmatprep.subr.bf16.mxu0 0
    %651 = vmatpush1.bf16.msra.mxu0 0
    %652 = vmatprep.subr.bf16.mxu0 0
    %653 = vmatpush1.bf16.msra.mxu0 0
    %654 = vmatprep.subr.bf16.mxu0 0
    %655 = vmatpush1.bf16.msra.mxu0 0
    %656 = vmatprep.subr.bf16.mxu0 0
    %657 = vmatpush1.bf16.msra.mxu0 0
    %658 = vmatprep.subr.bf16.mxu0 0
    %659 = vmatpush1.bf16.msra.mxu0 0
    %660 = vmatprep.subr.bf16.mxu0 0
    %661 = vmatpush1.bf16.msra.mxu0 0
    %662 = vmatprep.subr.bf16.mxu0 0
    %663 = vmatpush1.bf16.msra.mxu0 0
    %664 = vmatprep.subr.bf16.mxu0 0
    %665 = vmatpush1.bf16.msra.mxu0 0
    %666 = vmatprep.subr.bf16.mxu0 0
    %667 = vmatpush1.bf16.msra.mxu0 0
    %668 = vmatprep.subr.bf16.mxu0 0
    %669 = vmatpush1.bf16.msra.mxu0 0
    %670 = vmatprep.subr.bf16.mxu0 0
    %671 = vmatpush1.bf16.msra.mxu0 0
    %672 = vmatprep.mubr.bf16.mxu0 0
    %673 = vmatmul.mubr.bf16.gmra.mrb[0].mxu0 %v638
    %v674 = vpop.f32.mrb[0].mxu0
    %v675 = vadd.f32 0.0, %v674
    %v676 = vpop.f32.mrb[0].mxu0
    %v677 = vpop.f32.mrb[0].mxu0
    %v678 = vpop.f32.mrb[0].mxu0
    %679 = vdwg.mxu0
    %v680 = vadd.f32 %v632, %v675
    %v681 = vxor.u32 %v680, 2147483648
    %v682 = vmul.f32 %v681, 1.442695
    %v683 = vpow.pop %v682
    %v684 = vadd.f32 %v683, 1.0
    %v685 = vrcp.pop %v684
    %v686 = vmul.f32 1.0, %v685
    %v687 = vtanh.pop %v680
    %v688 = vmul.f32 %v686, %v625
    %690 = vrot.lane.b32.xlu0 %v687, 64
    %v691 = vpop.permute.xlu0 %690
    %v693 = vmul.f32 %v686, %v691
    %695 = vrot.lane.b32.xlu0 %v693, 32
    %v696 = vpop.permute.xlu0 %695
    %v698 = vadd.f32 %v688, %v696
    %v699 = vtanh.pop %v698
    %701 = vrot.lane.b32.xlu0 %v699, 64
    %v702 = vpop.permute.xlu0 %701
    %v704 = vmul.f32 %v686, %v702
    %v705 = vld [vmem:[#allocation2 + $0xe] sm:$0x3]
    %v706 = vpack.c.bf16 %v704, %v704
    %708 = vrot.lane.b32.xlu0 %v706, 32
    %v709 = vpop.permute.xlu0 %708
    %v711 = vsel %vm198, %v709, 0
    %713 = vmatprep.subr.bf16.mxu0 0
    %714 = vmatpush1.bf16.msra.mxu0 %v194
    %715 = vmatprep.subr.bf16.mxu0 0
    %716 = vmatpush1.bf16.msra.mxu0 %v195
    %717 = vmatprep.subr.bf16.mxu0 0
    %718 = vmatpush1.bf16.msra.mxu0 0
    %719 = vmatprep.subr.bf16.mxu0 0
    %720 = vmatpush1.bf16.msra.mxu0 0
    %721 = vmatprep.subr.bf16.mxu0 0
    %722 = vmatpush1.bf16.msra.mxu0 0
    %723 = vmatprep.subr.bf16.mxu0 0
    %724 = vmatpush1.bf16.msra.mxu0 0
    %725 = vmatprep.subr.bf16.mxu0 0
    %726 = vmatpush1.bf16.msra.mxu0 0
    %727 = vmatprep.subr.bf16.mxu0 0
    %728 = vmatpush1.bf16.msra.mxu0 0
    %729 = vmatprep.subr.bf16.mxu0 0
    %730 = vmatpush1.bf16.msra.mxu0 0
    %731 = vmatprep.subr.bf16.mxu0 0
    %732 = vmatpush1.bf16.msra.mxu0 0
    %733 = vmatprep.subr.bf16.mxu0 0
    %734 = vmatpush1.bf16.msra.mxu0 0
    %735 = vmatprep.subr.bf16.mxu0 0
    %736 = vmatpush1.bf16.msra.mxu0 0
    %737 = vmatprep.subr.bf16.mxu0 0
    %738 = vmatpush1.bf16.msra.mxu0 0
    %739 = vmatprep.subr.bf16.mxu0 0
    %740 = vmatpush1.bf16.msra.mxu0 0
    %741 = vmatprep.subr.bf16.mxu0 0
    %742 = vmatpush1.bf16.msra.mxu0 0
    %743 = vmatprep.subr.bf16.mxu0 0
    %744 = vmatpush1.bf16.msra.mxu0 0
    %745 = vmatprep.mubr.bf16.mxu0 0
    %746 = vmatmul.mubr.bf16.gmra.mrb[0].mxu0 %v711
    %v747 = vpop.f32.mrb[0].mxu0
    %v748 = vadd.f32 0.0, %v747
    %v749 = vpop.f32.mrb[0].mxu0
    %v750 = vpop.f32.mrb[0].mxu0
    %v751 = vpop.f32.mrb[0].mxu0
    %752 = vdwg.mxu0
    %v753 = vadd.f32 %v705, %v748
    %v754 = vxor.u32 %v753, 2147483648
    %v755 = vmul.f32 %v754, 1.442695
    %v756 = vpow.pop %v755
    %v757 = vadd.f32 %v756, 1.0
    %v758 = vrcp.pop %v757
    %v759 = vmul.f32 1.0, %v758
    %v760 = vtanh.pop %v753
    %v761 = vmul.f32 %v759, %v698
    %763 = vrot.lane.b32.xlu0 %v760, 64
    %v764 = vpop.permute.xlu0 %763
    %v766 = vmul.f32 %v759, %v764
    %768 = vrot.lane.b32.xlu0 %v766, 32
    %v769 = vpop.permute.xlu0 %768
    %v771 = vadd.f32 %v761, %v769
    %v772 = vtanh.pop %v771
    %774 = vrot.lane.b32.xlu0 %v772, 64
    %v775 = vpop.permute.xlu0 %774
    %v777 = vmul.f32 %v759, %v775
    %vm778 = vcmask 123904
    %779 = vst.msk [vmem:[#allocation11] sm:$0x3] %vm778, 0.0
    %v780 = vld [vmem:[%s1] sm:$0x3]
    %v781 = vpack.c.bf16 %v780, %v780
    %v782 = vpack.c.bf16 %v777, %v777
    %v785 = vunpack.c.l.b16 %v94
    %v786 = vunpack.c.l.b16 %v95
    %v787 = vpack.c.b16 %v786, %v785
    %v790 = vsel %vm138, %v781, 0
    %792 = vmatprep.subr.bf16.mxu0 0
    %793 = vmatpush1.bf16.msra.mxu0 %v787
    %794 = vmatprep.subr.bf16.mxu0 0
    %795 = vmatpush1.bf16.msra.mxu0 0
    %796 = vmatprep.subr.bf16.mxu0 0
    %797 = vmatpush1.bf16.msra.mxu0 0
    %798 = vmatprep.subr.bf16.mxu0 0
    %799 = vmatpush1.bf16.msra.mxu0 0
    %800 = vmatprep.subr.bf16.mxu0 0
    %801 = vmatpush1.bf16.msra.mxu0 0
    %802 = vmatprep.subr.bf16.mxu0 0
    %803 = vmatpush1.bf16.msra.mxu0 0
    %804 = vmatprep.subr.bf16.mxu0 0
    %805 = vmatpush1.bf16.msra.mxu0 0
    %806 = vmatprep.subr.bf16.mxu0 0
    %807 = vmatpush1.bf16.msra.mxu0 0
    %808 = vmatprep.subr.bf16.mxu0 0
    %809 = vmatpush1.bf16.msra.mxu0 0
    %810 = vmatprep.subr.bf16.mxu0 0
    %811 = vmatpush1.bf16.msra.mxu0 0
    %812 = vmatprep.subr.bf16.mxu0 0
    %813 = vmatpush1.bf16.msra.mxu0 0
    %814 = vmatprep.subr.bf16.mxu0 0
    %815 = vmatpush1.bf16.msra.mxu0 0
    %816 = vmatprep.subr.bf16.mxu0 0
    %817 = vmatpush1.bf16.msra.mxu0 0
    %818 = vmatprep.subr.bf16.mxu0 0
    %819 = vmatpush1.bf16.msra.mxu0 0
    %820 = vmatprep.subr.bf16.mxu0 0
    %821 = vmatpush1.bf16.msra.mxu0 0
    %822 = vmatprep.subr.bf16.mxu0 0
    %823 = vmatpush1.bf16.msra.mxu0 0
    %824 = vmatprep.mubr.bf16.mxu0 0
    %825 = vmatmul.mubr.bf16.gmra.mrb[0].mxu0 %v790
    %v826 = vpop.f32.mrb[0].mxu0
    %v827 = vadd.f32 %v109, %v826
    %v828 = vpop.f32.mrb[0].mxu0
    %v829 = vpop.f32.mrb[0].mxu0
    %v830 = vpop.f32.mrb[0].mxu0
    %831 = vdwg.mxu0
    %833 = vrot.lane.b32.xlu0 %v782, 32
    %v834 = vpop.permute.xlu0 %833
    %v839 = vunpack.c.l.b16 %v96
    %v840 = vunpack.c.l.b16 %v97
    %v841 = vunpack.c.l.b16 %v98
    %v842 = vunpack.c.l.b16 %v99
    %v843 = vpack.c.b16 %v840, %v839
    %v844 = vpack.c.b16 %v842, %v841
    %v848 = vsel %vm198, %v834, 0
    %850 = vmatprep.subr.bf16.mxu0 0
    %851 = vmatpush1.bf16.msra.mxu0 %v843
    %852 = vmatprep.subr.bf16.mxu0 0
    %853 = vmatpush1.bf16.msra.mxu0 %v844
    %854 = vmatprep.subr.bf16.mxu0 0
    %855 = vmatpush1.bf16.msra.mxu0 0
    %856 = vmatprep.subr.bf16.mxu0 0
    %857 = vmatpush1.bf16.msra.mxu0 0
    %858 = vmatprep.subr.bf16.mxu0 0
    %859 = vmatpush1.bf16.msra.mxu0 0
    %860 = vmatprep.subr.bf16.mxu0 0
    %861 = vmatpush1.bf16.msra.mxu0 0
    %862 = vmatprep.subr.bf16.mxu0 0
    %863 = vmatpush1.bf16.msra.mxu0 0
    %864 = vmatprep.subr.bf16.mxu0 0
    %865 = vmatpush1.bf16.msra.mxu0 0
    %866 = vmatprep.subr.bf16.mxu0 0
    %867 = vmatpush1.bf16.msra.mxu0 0
    %868 = vmatprep.subr.bf16.mxu0 0
    %869 = vmatpush1.bf16.msra.mxu0 0
    %870 = vmatprep.subr.bf16.mxu0 0
    %871 = vmatpush1.bf16.msra.mxu0 0
    %872 = vmatprep.subr.bf16.mxu0 0
    %873 = vmatpush1.bf16.msra.mxu0 0
    %874 = vmatprep.subr.bf16.mxu0 0
    %875 = vmatpush1.bf16.msra.mxu0 0
    %876 = vmatprep.subr.bf16.mxu0 0
    %877 = vmatpush1.bf16.msra.mxu0 0
    %878 = vmatprep.subr.bf16.mxu0 0
    %879 = vmatpush1.bf16.msra.mxu0 0
    %880 = vmatprep.subr.bf16.mxu0 0
    %881 = vmatpush1.bf16.msra.mxu0 0
    %882 = vmatprep.mubr.bf16.mxu0 0
    %883 = vmatmul.mubr.bf16.gmra.mrb[0].mxu0 %v848
    %v884 = vpop.f32.mrb[0].mxu0
    %v885 = vadd.f32 0.0, %v884
    %v886 = vpop.f32.mrb[0].mxu0
    %v887 = vpop.f32.mrb[0].mxu0
    %v888 = vpop.f32.mrb[0].mxu0
    %889 = vdwg.mxu0
    %v890 = vadd.f32 %v827, %v885
    %v891 = vxor.u32 %v890, 2147483648
    %v892 = vmul.f32 %v891, 1.442695
    %v893 = vpow.pop %v892
    %v894 = vadd.f32 %v893, 1.0
    %v895 = vrcp.pop %v894
    %v896 = vmul.f32 1.0, %v895
    %v897 = vtanh.pop %v890
    %v898 = vmul.f32 %v896, %v771
    %900 = vrot.lane.b32.xlu0 %v897, 64
    %v901 = vpop.permute.xlu0 %900
    %v903 = vmul.f32 %v896, %v901
    %905 = vrot.lane.b32.xlu0 %v903, 32
    %v906 = vpop.permute.xlu0 %905
    %v908 = vadd.f32 %v898, %v906
    %v909 = vtanh.pop %v908
    %911 = vrot.lane.b32.xlu0 %v909, 64
    %v912 = vpop.permute.xlu0 %911
    %v914 = vmul.f32 %v896, %v912
    %v915 = vpack.c.bf16 %v914, %v914
    %917 = vrot.lane.b32.xlu0 %v915, 32
    %v918 = vpop.permute.xlu0 %917
    %v923 = vunpack.c.l.b16 %v100
    %v924 = vunpack.c.l.b16 %v101
    %v925 = vunpack.c.l.b16 %v102
    %v926 = vunpack.c.l.b16 %v103
    %v927 = vpack.c.b16 %v924, %v923
    %v928 = vpack.c.b16 %v926, %v925
    %v932 = vsel %vm198, %v918, 0
    %934 = vmatprep.subr.bf16.mxu0 0
    %935 = vmatpush1.bf16.msra.mxu0 %v927
    %936 = vmatprep.subr.bf16.mxu0 0
    %937 = vmatpush1.bf16.msra.mxu0 %v928
    %938 = vmatprep.subr.bf16.mxu0 0
    %939 = vmatpush1.bf16.msra.mxu0 0
    %940 = vmatprep.subr.bf16.mxu0 0
    %941 = vmatpush1.bf16.msra.mxu0 0
    %942 = vmatprep.subr.bf16.mxu0 0
    %943 = vmatpush1.bf16.msra.mxu0 0
    %944 = vmatprep.subr.bf16.mxu0 0
    %945 = vmatpush1.bf16.msra.mxu0 0
    %946 = vmatprep.subr.bf16.mxu0 0
    %947 = vmatpush1.bf16.msra.mxu0 0
    %948 = vmatprep.subr.bf16.mxu0 0
    %949 = vmatpush1.bf16.msra.mxu0 0
    %950 = vmatprep.subr.bf16.mxu0 0
    %951 = vmatpush1.bf16.msra.mxu0 0
    %952 = vmatprep.subr.bf16.mxu0 0
    %953 = vmatpush1.bf16.msra.mxu0 0
    %954 = vmatprep.subr.bf16.mxu0 0
    %955 = vmatpush1.bf16.msra.mxu0 0
    %956 = vmatprep.subr.bf16.mxu0 0
    %957 = vmatpush1.bf16.msra.mxu0 0
    %958 = vmatprep.subr.bf16.mxu0 0
    %959 = vmatpush1.bf16.msra.mxu0 0
    %960 = vmatprep.subr.bf16.mxu0 0
    %961 = vmatpush1.bf16.msra.mxu0 0
    %962 = vmatprep.subr.bf16.mxu0 0
    %963 = vmatpush1.bf16.msra.mxu0 0
    %964 = vmatprep.subr.bf16.mxu0 0
    %965 = vmatpush1.bf16.msra.mxu0 0
    %966 = vmatprep.mubr.bf16.mxu0 0
    %967 = vmatmul.mubr.bf16.gmra.mrb[0].mxu0 %v932
    %v968 = vpop.f32.mrb[0].mxu0
    %v969 = vadd.f32 %v116, %v968
    %v970 = vpop.f32.mrb[0].mxu0
    %v971 = vpop.f32.mrb[0].mxu0
    %v972 = vpop.f32.mrb[0].mxu0
    %973 = vdwg.mxu0
    %s974 = scalar_lea.vmem [#allocation11], 2
    %975 = vst.msk [vmem:[%s974] sm:$0x3] %vm778, %v969
    %v976 = vsel %vm778, %v969, -inf
    %977 = vmax.xlane.f32.xlu0 %v976
    %v978 = vpop.xlane.xlu0 %977
    %vm979 = vcmp.eq.f32.partialorder %v969, %v978
    %v980 = vsel %vm979, %v119, 16
    %v981 = vsel %vm778, %v980, 2147483647
    %v982 = vand.u32 %v981, 65535
    %v983 = vshra.s32 %v981, 16
    %v984 = vcvt.s32.f32 %v982
    %v985 = vcvt.s32.f32 %v983
    %986 = vmin.xlane.f32.xlu0 %v985
    %v987 = vpop.xlane.xlu0 %986
    %vm988 = vcmp.eq.f32.partialorder %v985, %v987
    %v989 = vsel %vm988, %v984, inf
    %990 = vmin.xlane.f32.xlu0 %v989
    %v991 = vpop.xlane.xlu0 %990
    %v992 = vcvt.f32.s32 %v991
    %v993 = vcvt.f32.s32 %v987
    %v994 = vshll.u32 %v993, 16
    %v995 = vadd.s32 %v994, %v992
    %vm996 = vcmp.eq.s32.totalorder %v119, %v995
    %v997 = vsel %vm996, 1, 0
    %v998 = vcvt.s32.f32 %v997
    %v999 = vpack.c.bf16 %v998, %v998
    %v1001 = vsel %vm138, %v999, 0
    %1003 = vmatprep.subr.bf16.mxu0 0
    %1004 = vmatpush1.bf16.msra.mxu0 %v787
    %1005 = vmatprep.subr.bf16.mxu0 0
    %1006 = vmatpush1.bf16.msra.mxu0 0
    %1007 = vmatprep.subr.bf16.mxu0 0
    %1008 = vmatpush1.bf16.msra.mxu0 0
    %1009 = vmatprep.subr.bf16.mxu0 0
    %1010 = vmatpush1.bf16.msra.mxu0 0
    %1011 = vmatprep.subr.bf16.mxu0 0
    %1012 = vmatpush1.bf16.msra.mxu0 0
    %1013 = vmatprep.subr.bf16.mxu0 0
    %1014 = vmatpush1.bf16.msra.mxu0 0
    %1015 = vmatprep.subr.bf16.mxu0 0
    %1016 = vmatpush1.bf16.msra.mxu0 0
    %1017 = vmatprep.subr.bf16.mxu0 0
    %1018 = vmatpush1.bf16.msra.mxu0 0
    %1019 = vmatprep.subr.bf16.mxu0 0
    %1020 = vmatpush1.bf16.msra.mxu0 0
    %1021 = vmatprep.subr.bf16.mxu0 0
    %1022 = vmatpush1.bf16.msra.mxu0 0
    %1023 = vmatprep.subr.bf16.mxu0 0
    %1024 = vmatpush1.bf16.msra.mxu0 0
    %1025 = vmatprep.subr.bf16.mxu0 0
    %1026 = vmatpush1.bf16.msra.mxu0 0
    %1027 = vmatprep.subr.bf16.mxu0 0
    %1028 = vmatpush1.bf16.msra.mxu0 0
    %1029 = vmatprep.subr.bf16.mxu0 0
    %1030 = vmatpush1.bf16.msra.mxu0 0
    %1031 = vmatprep.subr.bf16.mxu0 0
    %1032 = vmatpush1.bf16.msra.mxu0 0
    %1033 = vmatprep.subr.bf16.mxu0 0
    %1034 = vmatpush1.bf16.msra.mxu0 0
    %1035 = vmatprep.mubr.bf16.mxu0 0
    %1036 = vmatmul.mubr.bf16.gmra.mrb[0].mxu0 %v1001
    %v1037 = vpop.f32.mrb[0].mxu0
    %v1038 = vadd.f32 %v109, %v1037
    %v1039 = vpop.f32.mrb[0].mxu0
    %v1040 = vpop.f32.mrb[0].mxu0
    %v1041 = vpop.f32.mrb[0].mxu0
    %1042 = vdwg.mxu0
    %1043 = vmatprep.subr.bf16.mxu0 0
    %1044 = vmatpush1.bf16.msra.mxu0 %v843
    %1045 = vmatprep.subr.bf16.mxu0 0
    %1046 = vmatpush1.bf16.msra.mxu0 %v844
    %1047 = vmatprep.subr.bf16.mxu0 0
    %1048 = vmatpush1.bf16.msra.mxu0 0
    %1049 = vmatprep.subr.bf16.mxu0 0
    %1050 = vmatpush1.bf16.msra.mxu0 0
    %1051 = vmatprep.subr.bf16.mxu0 0
    %1052 = vmatpush1.bf16.msra.mxu0 0
    %1053 = vmatprep.subr.bf16.mxu0 0
    %1054 = vmatpush1.bf16.msra.mxu0 0
    %1055 = vmatprep.subr.bf16.mxu0 0
    %1056 = vmatpush1.bf16.msra.mxu0 0
    %1057 = vmatprep.subr.bf16.mxu0 0
    %1058 = vmatpush1.bf16.msra.mxu0 0
    %1059 = vmatprep.subr.bf16.mxu0 0
    %1060 = vmatpush1.bf16.msra.mxu0 0
    %1061 = vmatprep.subr.bf16.mxu0 0
    %1062 = vmatpush1.bf16.msra.mxu0 0
    %1063 = vmatprep.subr.bf16.mxu0 0
    %1064 = vmatpush1.bf16.msra.mxu0 0
    %1065 = vmatprep.subr.bf16.mxu0 0
    %1066 = vmatpush1.bf16.msra.mxu0 0
    %1067 = vmatprep.subr.bf16.mxu0 0
    %1068 = vmatpush1.bf16.msra.mxu0 0
    %1069 = vmatprep.subr.bf16.mxu0 0
    %1070 = vmatpush1.bf16.msra.mxu0 0
    %1071 = vmatprep.subr.bf16.mxu0 0
    %1072 = vmatpush1.bf16.msra.mxu0 0
    %1073 = vmatprep.subr.bf16.mxu0 0
    %1074 = vmatpush1.bf16.msra.mxu0 0
    %1075 = vmatprep.mubr.bf16.mxu0 0
    %1076 = vmatmul.mubr.bf16.gmra.mrb[0].mxu0 %v932
    %v1077 = vpop.f32.mrb[0].mxu0
    %v1078 = vadd.f32 0.0, %v1077
    %v1079 = vpop.f32.mrb[0].mxu0
    %v1080 = vpop.f32.mrb[0].mxu0
    %v1081 = vpop.f32.mrb[0].mxu0
    %1082 = vdwg.mxu0
    %v1083 = vadd.f32 %v1038, %v1078
    %v1084 = vxor.u32 %v1083, 2147483648
    %v1085 = vmul.f32 %v1084, 1.442695
    %v1086 = vpow.pop %v1085
    %v1087 = vadd.f32 %v1086, 1.0
    %v1088 = vrcp.pop %v1087
    %v1089 = vmul.f32 1.0, %v1088
    %v1090 = vtanh.pop %v1083
    %v1091 = vmul.f32 %v1089, %v908
    %1093 = vrot.lane.b32.xlu0 %v1090, 64
    %v1094 = vpop.permute.xlu0 %1093
    %v1096 = vmul.f32 %v1089, %v1094
    %1098 = vrot.lane.b32.xlu0 %v1096, 32
    %v1099 = vpop.permute.xlu0 %1098
    %v1101 = vadd.f32 %v1091, %v1099
    %v1102 = vtanh.pop %v1101
    %1104 = vrot.lane.b32.xlu0 %v1102, 64
    %v1105 = vpop.permute.xlu0 %1104
    %v1107 = vmul.f32 %v1089, %v1105
    %v1108 = vpack.c.bf16 %v1107, %v1107
    %1110 = vrot.lane.b32.xlu0 %v1108, 32
    %v1111 = vpop.permute.xlu0 %1110
    %v1113 = vsel %vm198, %v1111, 0
    %1115 = vmatprep.subr.bf16.mxu0 0
    %1116 = vmatpush1.bf16.msra.mxu0 %v927
    %1117 = vmatprep.subr.bf16.mxu0 0
    %1118 = vmatpush1.bf16.msra.mxu0 %v928
    %1119 = vmatprep.subr.bf16.mxu0 0
    %1120 = vmatpush1.bf16.msra.mxu0 0
    %1121 = vmatprep.subr.bf16.mxu0 0
    %1122 = vmatpush1.bf16.msra.mxu0 0
    %1123 = vmatprep.subr.bf16.mxu0 0
    %1124 = vmatpush1.bf16.msra.mxu0 0
    %1125 = vmatprep.subr.bf16.mxu0 0
    %1126 = vmatpush1.bf16.msra.mxu0 0
    %1127 = vmatprep.subr.bf16.mxu0 0
    %1128 = vmatpush1.bf16.msra.mxu0 0
    %1129 = vmatprep.subr.bf16.mxu0 0
    %1130 = vmatpush1.bf16.msra.mxu0 0
    %1131 = vmatprep.subr.bf16.mxu0 0
    %1132 = vmatpush1.bf16.msra.mxu0 0
    %1133 = vmatprep.subr.bf16.mxu0 0
    %1134 = vmatpush1.bf16.msra.mxu0 0
    %1135 = vmatprep.subr.bf16.mxu0 0
    %1136 = vmatpush1.bf16.msra.mxu0 0
    %1137 = vmatprep.subr.bf16.mxu0 0
    %1138 = vmatpush1.bf16.msra.mxu0 0
    %1139 = vmatprep.subr.bf16.mxu0 0
    %1140 = vmatpush1.bf16.msra.mxu0 0
    %1141 = vmatprep.subr.bf16.mxu0 0
    %1142 = vmatpush1.bf16.msra.mxu0 0
    %1143 = vmatprep.subr.bf16.mxu0 0
    %1144 = vmatpush1.bf16.msra.mxu0 0
    %1145 = vmatprep.subr.bf16.mxu0 0
    %1146 = vmatpush1.bf16.msra.mxu0 0
    %1147 = vmatprep.mubr.bf16.mxu0 0
    %1148 = vmatmul.mubr.bf16.gmra.mrb[0].mxu0 %v1113
    %v1149 = vpop.f32.mrb[0].mxu0
    %v1150 = vadd.f32 %v116, %v1149
    %v1151 = vpop.f32.mrb[0].mxu0
    %v1152 = vpop.f32.mrb[0].mxu0
    %v1153 = vpop.f32.mrb[0].mxu0
    %1154 = vdwg.mxu0
    %s1155 = scalar_lea.vmem [#allocation11], 4
    %1156 = vst.msk [vmem:[%s1155] sm:$0x3] %vm778, %v1150
    %v1157 = vsel %vm778, %v1150, -inf
    %1158 = vmax.xlane.f32.xlu0 %v1157
    %v1159 = vpop.xlane.xlu0 %1158
    %vm1160 = vcmp.eq.f32.partialorder %v1150, %v1159
    %v1161 = vsel %vm1160, %v119, 16
    %v1162 = vsel %vm778, %v1161, 2147483647
    %v1163 = vand.u32 %v1162, 65535
    %v1164 = vshra.s32 %v1162, 16
    %v1165 = vcvt.s32.f32 %v1163
    %v1166 = vcvt.s32.f32 %v1164
    %1167 = vmin.xlane.f32.xlu0 %v1166
    %v1168 = vpop.xlane.xlu0 %1167
    %vm1169 = vcmp.eq.f32.partialorder %v1166, %v1168
    %v1170 = vsel %vm1169, %v1165, inf
    %1171 = vmin.xlane.f32.xlu0 %v1170
    %v1172 = vpop.xlane.xlu0 %1171
    %v1173 = vcvt.f32.s32 %v1172
    %v1174 = vcvt.f32.s32 %v1168
    %v1175 = vshll.u32 %v1174, 16
    %v1176 = vadd.s32 %v1175, %v1173
    %vm1177 = vcmp.eq.s32.totalorder %v119, %v1176
    %v1178 = vsel %vm1177, 1, 0
    %v1179 = vcvt.s32.f32 %v1178
    %v1180 = vpack.c.bf16 %v1179, %v1179
    %v1182 = vsel %vm138, %v1180, 0
    %1184 = vmatprep.subr.bf16.mxu0 0
    %1185 = vmatpush1.bf16.msra.mxu0 %v787
    %1186 = vmatprep.subr.bf16.mxu0 0
    %1187 = vmatpush1.bf16.msra.mxu0 0
    %1188 = vmatprep.subr.bf16.mxu0 0
    %1189 = vmatpush1.bf16.msra.mxu0 0
    %1190 = vmatprep.subr.bf16.mxu0 0
    %1191 = vmatpush1.bf16.msra.mxu0 0
    %1192 = vmatprep.subr.bf16.mxu0 0
    %1193 = vmatpush1.bf16.msra.mxu0 0
    %1194 = vmatprep.subr.bf16.mxu0 0
    %1195 = vmatpush1.bf16.msra.mxu0 0
    %1196 = vmatprep.subr.bf16.mxu0 0
    %1197 = vmatpush1.bf16.msra.mxu0 0
    %1198 = vmatprep.subr.bf16.mxu0 0
    %1199 = vmatpush1.bf16.msra.mxu0 0
    %1200 = vmatprep.subr.bf16.mxu0 0
    %1201 = vmatpush1.bf16.msra.mxu0 0
    %1202 = vmatprep.subr.bf16.mxu0 0
    %1203 = vmatpush1.bf16.msra.mxu0 0
    %1204 = vmatprep.subr.bf16.mxu0 0
    %1205 = vmatpush1.bf16.msra.mxu0 0
    %1206 = vmatprep.subr.bf16.mxu0 0
    %1207 = vmatpush1.bf16.msra.mxu0 0
    %1208 = vmatprep.subr.bf16.mxu0 0
    %1209 = vmatpush1.bf16.msra.mxu0 0
    %1210 = vmatprep.subr.bf16.mxu0 0
    %1211 = vmatpush1.bf16.msra.mxu0 0
    %1212 = vmatprep.subr.bf16.mxu0 0
    %1213 = vmatpush1.bf16.msra.mxu0 0
    %1214 = vmatprep.subr.bf16.mxu0 0
    %1215 = vmatpush1.bf16.msra.mxu0 0
    %1216 = vmatprep.mubr.bf16.mxu0 0
    %1217 = vmatmul.mubr.bf16.gmra.mrb[0].mxu0 %v1182
    %v1218 = vpop.f32.mrb[0].mxu0
    %v1219 = vadd.f32 %v109, %v1218
    %v1220 = vpop.f32.mrb[0].mxu0
    %v1221 = vpop.f32.mrb[0].mxu0
    %v1222 = vpop.f32.mrb[0].mxu0
    %1223 = vdwg.mxu0
    %1224 = vmatprep.subr.bf16.mxu0 0
    %1225 = vmatpush1.bf16.msra.mxu0 %v843
    %1226 = vmatprep.subr.bf16.mxu0 0
    %1227 = vmatpush1.bf16.msra.mxu0 %v844
    %1228 = vmatprep.subr.bf16.mxu0 0
    %1229 = vmatpush1.bf16.msra.mxu0 0
    %1230 = vmatprep.subr.bf16.mxu0 0
    %1231 = vmatpush1.bf16.msra.mxu0 0
    %1232 = vmatprep.subr.bf16.mxu0 0
    %1233 = vmatpush1.bf16.msra.mxu0 0
    %1234 = vmatprep.subr.bf16.mxu0 0
    %1235 = vmatpush1.bf16.msra.mxu0 0
    %1236 = vmatprep.subr.bf16.mxu0 0
    %1237 = vmatpush1.bf16.msra.mxu0 0
    %1238 = vmatprep.subr.bf16.mxu0 0
    %1239 = vmatpush1.bf16.msra.mxu0 0
    %1240 = vmatprep.subr.bf16.mxu0 0
    %1241 = vmatpush1.bf16.msra.mxu0 0
    %1242 = vmatprep.subr.bf16.mxu0 0
    %1243 = vmatpush1.bf16.msra.mxu0 0
    %1244 = vmatprep.subr.bf16.mxu0 0
    %1245 = vmatpush1.bf16.msra.mxu0 0
    %1246 = vmatprep.subr.bf16.mxu0 0
    %1247 = vmatpush1.bf16.msra.mxu0 0
    %1248 = vmatprep.subr.bf16.mxu0 0
    %1249 = vmatpush1.bf16.msra.mxu0 0
    %1250 = vmatprep.subr.bf16.mxu0 0
    %1251 = vmatpush1.bf16.msra.mxu0 0
    %1252 = vmatprep.subr.bf16.mxu0 0
    %1253 = vmatpush1.bf16.msra.mxu0 0
    %1254 = vmatprep.subr.bf16.mxu0 0
    %1255 = vmatpush1.bf16.msra.mxu0 0
    %1256 = vmatprep.mubr.bf16.mxu0 0
    %1257 = vmatmul.mubr.bf16.gmra.mrb[0].mxu0 %v1113
    %v1258 = vpop.f32.mrb[0].mxu0
    %v1259 = vadd.f32 0.0, %v1258
    %v1260 = vpop.f32.mrb[0].mxu0
    %v1261 = vpop.f32.mrb[0].mxu0
    %v1262 = vpop.f32.mrb[0].mxu0
    %1263 = vdwg.mxu0
    %v1264 = vadd.f32 %v1219, %v1259
    %v1265 = vxor.u32 %v1264, 2147483648
    %v1266 = vmul.f32 %v1265, 1.442695
    %v1267 = vpow.pop %v1266
    %v1268 = vadd.f32 %v1267, 1.0
    %v1269 = vrcp.pop %v1268
    %v1270 = vmul.f32 1.0, %v1269
    %v1271 = vtanh.pop %v1264
    %v1272 = vmul.f32 %v1270, %v1101
    %1274 = vrot.lane.b32.xlu0 %v1271, 64
    %v1275 = vpop.permute.xlu0 %1274
    %v1277 = vmul.f32 %v1270, %v1275
    %1279 = vrot.lane.b32.xlu0 %v1277, 32
    %v1280 = vpop.permute.xlu0 %1279
    %v1282 = vadd.f32 %v1272, %v1280
    %v1283 = vtanh.pop %v1282
    %1285 = vrot.lane.b32.xlu0 %v1283, 64
    %v1286 = vpop.permute.xlu0 %1285
    %v1288 = vmul.f32 %v1270, %v1286
    %v1289 = vpack.c.bf16 %v1288, %v1288
    %1291 = vrot.lane.b32.xlu0 %v1289, 32
    %v1292 = vpop.permute.xlu0 %1291
    %v1294 = vsel %vm198, %v1292, 0
    %1296 = vmatprep.subr.bf16.mxu0 0
    %1297 = vmatpush1.bf16.msra.mxu0 %v927
    %1298 = vmatprep.subr.bf16.mxu0 0
    %1299 = vmatpush1.bf16.msra.mxu0 %v928
    %1300 = vmatprep.subr.bf16.mxu0 0
    %1301 = vmatpush1.bf16.msra.mxu0 0
    %1302 = vmatprep.subr.bf16.mxu0 0
    %1303 = vmatpush1.bf16.msra.mxu0 0
    %1304 = vmatprep.subr.bf16.mxu0 0
    %1305 = vmatpush1.bf16.msra.mxu0 0
    %1306 = vmatprep.subr.bf16.mxu0 0
    %1307 = vmatpush1.bf16.msra.mxu0 0
    %1308 = vmatprep.subr.bf16.mxu0 0
    %1309 = vmatpush1.bf16.msra.mxu0 0
    %1310 = vmatprep.subr.bf16.mxu0 0
    %1311 = vmatpush1.bf16.msra.mxu0 0
    %1312 = vmatprep.subr.bf16.mxu0 0
    %1313 = vmatpush1.bf16.msra.mxu0 0
    %1314 = vmatprep.subr.bf16.mxu0 0
    %1315 = vmatpush1.bf16.msra.mxu0 0
    %1316 = vmatprep.subr.bf16.mxu0 0
    %1317 = vmatpush1.bf16.msra.mxu0 0
    %1318 = vmatprep.subr.bf16.mxu0 0
    %1319 = vmatpush1.bf16.msra.mxu0 0
    %1320 = vmatprep.subr.bf16.mxu0 0
    %1321 = vmatpush1.bf16.msra.mxu0 0
    %1322 = vmatprep.subr.bf16.mxu0 0
    %1323 = vmatpush1.bf16.msra.mxu0 0
    %1324 = vmatprep.subr.bf16.mxu0 0
    %1325 = vmatpush1.bf16.msra.mxu0 0
    %1326 = vmatprep.subr.bf16.mxu0 0
    %1327 = vmatpush1.bf16.msra.mxu0 0
    %1328 = vmatprep.mubr.bf16.mxu0 0
    %1329 = vmatmul.mubr.bf16.gmra.mrb[0].mxu0 %v1294
    %v1330 = vpop.f32.mrb[0].mxu0
    %v1331 = vadd.f32 %v116, %v1330
    %v1332 = vpop.f32.mrb[0].mxu0
    %v1333 = vpop.f32.mrb[0].mxu0
    %v1334 = vpop.f32.mrb[0].mxu0
    %1335 = vdwg.mxu0
    %s1336 = scalar_lea.vmem [#allocation11], 6
    %1337 = vst.msk [vmem:[%s1336] sm:$0x3] %vm778, %v1331
    %v1338 = vsel %vm778, %v1331, -inf
    %1339 = vmax.xlane.f32.xlu0 %v1338
    %v1340 = vpop.xlane.xlu0 %1339
    %vm1341 = vcmp.eq.f32.partialorder %v1331, %v1340
    %v1342 = vsel %vm1341, %v119, 16
    %v1343 = vsel %vm778, %v1342, 2147483647
    %v1344 = vand.u32 %v1343, 65535
    %v1345 = vshra.s32 %v1343, 16
    %v1346 = vcvt.s32.f32 %v1344
    %v1347 = vcvt.s32.f32 %v1345
    %1348 = vmin.xlane.f32.xlu0 %v1347
    %v1349 = vpop.xlane.xlu0 %1348
    %vm1350 = vcmp.eq.f32.partialorder %v1347, %v1349
    %v1351 = vsel %vm1350, %v1346, inf
    %1352 = vmin.xlane.f32.xlu0 %v1351
    %v1353 = vpop.xlane.xlu0 %1352
    %v1354 = vcvt.f32.s32 %v1353
    %v1355 = vcvt.f32.s32 %v1349
    %v1356 = vshll.u32 %v1355, 16
    %v1357 = vadd.s32 %v1356, %v1354
    %vm1358 = vcmp.eq.s32.totalorder %v119, %v1357
    %v1359 = vsel %vm1358, 1, 0
    %v1360 = vcvt.s32.f32 %v1359
    %v1361 = vpack.c.bf16 %v1360, %v1360
    %v1363 = vsel %vm138, %v1361, 0
    %1365 = vmatprep.subr.bf16.mxu0 0
    %1366 = vmatpush1.bf16.msra.mxu0 %v787
    %1367 = vmatprep.subr.bf16.mxu0 0
    %1368 = vmatpush1.bf16.msra.mxu0 0
    %1369 = vmatprep.subr.bf16.mxu0 0
    %1370 = vmatpush1.bf16.msra.mxu0 0
    %1371 = vmatprep.subr.bf16.mxu0 0
    %1372 = vmatpush1.bf16.msra.mxu0 0
    %1373 = vmatprep.subr.bf16.mxu0 0
    %1374 = vmatpush1.bf16.msra.mxu0 0
    %1375 = vmatprep.subr.bf16.mxu0 0
    %1376 = vmatpush1.bf16.msra.mxu0 0
    %1377 = vmatprep.subr.bf16.mxu0 0
    %1378 = vmatpush1.bf16.msra.mxu0 0
    %1379 = vmatprep.subr.bf16.mxu0 0
    %1380 = vmatpush1.bf16.msra.mxu0 0
    %1381 = vmatprep.subr.bf16.mxu0 0
    %1382 = vmatpush1.bf16.msra.mxu0 0
    %1383 = vmatprep.subr.bf16.mxu0 0
    %1384 = vmatpush1.bf16.msra.mxu0 0
    %1385 = vmatprep.subr.bf16.mxu0 0
    %1386 = vmatpush1.bf16.msra.mxu0 0
    %1387 = vmatprep.subr.bf16.mxu0 0
    %1388 = vmatpush1.bf16.msra.mxu0 0
    %1389 = vmatprep.subr.bf16.mxu0 0
    %1390 = vmatpush1.bf16.msra.mxu0 0
    %1391 = vmatprep.subr.bf16.mxu0 0
    %1392 = vmatpush1.bf16.msra.mxu0 0
    %1393 = vmatprep.subr.bf16.mxu0 0
    %1394 = vmatpush1.bf16.msra.mxu0 0
    %1395 = vmatprep.subr.bf16.mxu0 0
    %1396 = vmatpush1.bf16.msra.mxu0 0
    %1397 = vmatprep.mubr.bf16.mxu0 0
    %1398 = vmatmul.mubr.bf16.gmra.mrb[0].mxu0 %v1363
    %v1399 = vpop.f32.mrb[0].mxu0
    %v1400 = vadd.f32 %v109, %v1399
    %v1401 = vpop.f32.mrb[0].mxu0
    %v1402 = vpop.f32.mrb[0].mxu0
    %v1403 = vpop.f32.mrb[0].mxu0
    %1404 = vdwg.mxu0
    %1405 = vmatprep.subr.bf16.mxu0 0
    %1406 = vmatpush1.bf16.msra.mxu0 %v843
    %1407 = vmatprep.subr.bf16.mxu0 0
    %1408 = vmatpush1.bf16.msra.mxu0 %v844
    %1409 = vmatprep.subr.bf16.mxu0 0
    %1410 = vmatpush1.bf16.msra.mxu0 0
    %1411 = vmatprep.subr.bf16.mxu0 0
    %1412 = vmatpush1.bf16.msra.mxu0 0
    %1413 = vmatprep.subr.bf16.mxu0 0
    %1414 = vmatpush1.bf16.msra.mxu0 0
    %1415 = vmatprep.subr.bf16.mxu0 0
    %1416 = vmatpush1.bf16.msra.mxu0 0
    %1417 = vmatprep.subr.bf16.mxu0 0
    %1418 = vmatpush1.bf16.msra.mxu0 0
    %1419 = vmatprep.subr.bf16.mxu0 0
    %1420 = vmatpush1.bf16.msra.mxu0 0
    %1421 = vmatprep.subr.bf16.mxu0 0
    %1422 = vmatpush1.bf16.msra.mxu0 0
    %1423 = vmatprep.subr.bf16.mxu0 0
    %1424 = vmatpush1.bf16.msra.mxu0 0
    %1425 = vmatprep.subr.bf16.mxu0 0
    %1426 = vmatpush1.bf16.msra.mxu0 0
    %1427 = vmatprep.subr.bf16.mxu0 0
    %1428 = vmatpush1.bf16.msra.mxu0 0
    %1429 = vmatprep.subr.bf16.mxu0 0
    %1430 = vmatpush1.bf16.msra.mxu0 0
    %1431 = vmatprep.subr.bf16.mxu0 0
    %1432 = vmatpush1.bf16.msra.mxu0 0
    %1433 = vmatprep.subr.bf16.mxu0 0
    %1434 = vmatpush1.bf16.msra.mxu0 0
    %1435 = vmatprep.subr.bf16.mxu0 0
    %1436 = vmatpush1.bf16.msra.mxu0 0
    %1437 = vmatprep.mubr.bf16.mxu0 0
    %1438 = vmatmul.mubr.bf16.gmra.mrb[0].mxu0 %v1294
    %v1439 = vpop.f32.mrb[0].mxu0
    %v1440 = vadd.f32 0.0, %v1439
    %v1441 = vpop.f32.mrb[0].mxu0
    %v1442 = vpop.f32.mrb[0].mxu0
    %v1443 = vpop.f32.mrb[0].mxu0
    %1444 = vdwg.mxu0
    %v1445 = vadd.f32 %v1400, %v1440
    %v1446 = vxor.u32 %v1445, 2147483648
    %v1447 = vmul.f32 %v1446, 1.442695
    %v1448 = vpow.pop %v1447
    %v1449 = vadd.f32 %v1448, 1.0
    %v1450 = vrcp.pop %v1449
    %v1451 = vmul.f32 1.0, %v1450
    %v1452 = vtanh.pop %v1445
    %v1453 = vmul.f32 %v1451, %v1282
    %1455 = vrot.lane.b32.xlu0 %v1452, 64
    %v1456 = vpop.permute.xlu0 %1455
    %v1458 = vmul.f32 %v1451, %v1456
    %1460 = vrot.lane.b32.xlu0 %v1458, 32
    %v1461 = vpop.permute.xlu0 %1460
    %v1463 = vadd.f32 %v1453, %v1461
    %v1464 = vtanh.pop %v1463
    %1466 = vrot.lane.b32.xlu0 %v1464, 64
    %v1467 = vpop.permute.xlu0 %1466
    %v1469 = vmul.f32 %v1451, %v1467
    %v1470 = vpack.c.bf16 %v1469, %v1469
    %1472 = vrot.lane.b32.xlu0 %v1470, 32
    %v1473 = vpop.permute.xlu0 %1472
    %v1475 = vsel %vm198, %v1473, 0
    %1477 = vmatprep.subr.bf16.mxu0 0
    %1478 = vmatpush1.bf16.msra.mxu0 %v927
    %1479 = vmatprep.subr.bf16.mxu0 0
    %1480 = vmatpush1.bf16.msra.mxu0 %v928
    %1481 = vmatprep.subr.bf16.mxu0 0
    %1482 = vmatpush1.bf16.msra.mxu0 0
    %1483 = vmatprep.subr.bf16.mxu0 0
    %1484 = vmatpush1.bf16.msra.mxu0 0
    %1485 = vmatprep.subr.bf16.mxu0 0
    %1486 = vmatpush1.bf16.msra.mxu0 0
    %1487 = vmatprep.subr.bf16.mxu0 0
    %1488 = vmatpush1.bf16.msra.mxu0 0
    %1489 = vmatprep.subr.bf16.mxu0 0
    %1490 = vmatpush1.bf16.msra.mxu0 0
    %1491 = vmatprep.subr.bf16.mxu0 0
    %1492 = vmatpush1.bf16.msra.mxu0 0
    %1493 = vmatprep.subr.bf16.mxu0 0
    %1494 = vmatpush1.bf16.msra.mxu0 0
    %1495 = vmatprep.subr.bf16.mxu0 0
    %1496 = vmatpush1.bf16.msra.mxu0 0
    %1497 = vmatprep.subr.bf16.mxu0 0
    %1498 = vmatpush1.bf16.msra.mxu0 0
    %1499 = vmatprep.subr.bf16.mxu0 0
    %1500 = vmatpush1.bf16.msra.mxu0 0
    %1501 = vmatprep.subr.bf16.mxu0 0
    %1502 = vmatpush1.bf16.msra.mxu0 0
    %1503 = vmatprep.subr.bf16.mxu0 0
    %1504 = vmatpush1.bf16.msra.mxu0 0
    %1505 = vmatprep.subr.bf16.mxu0 0
    %1506 = vmatpush1.bf16.msra.mxu0 0
    %1507 = vmatprep.subr.bf16.mxu0 0
    %1508 = vmatpush1.bf16.msra.mxu0 0
    %1509 = vmatprep.mubr.bf16.mxu0 0
    %1510 = vmatmul.mubr.bf16.gmra.mrb[0].mxu0 %v1475
    %v1511 = vpop.f32.mrb[0].mxu0
    %v1512 = vadd.f32 %v116, %v1511
    %v1513 = vpop.f32.mrb[0].mxu0
    %v1514 = vpop.f32.mrb[0].mxu0
    %v1515 = vpop.f32.mrb[0].mxu0
    %1516 = vdwg.mxu0
    %s1517 = scalar_lea.vmem [#allocation11], 8
    %1518 = vst.msk [vmem:[%s1517] sm:$0x3] %vm778, %v1512
    %v1519 = vsel %vm778, %v1512, -inf
    %1520 = vmax.xlane.f32.xlu0 %v1519
    %v1521 = vpop.xlane.xlu0 %1520
    %vm1522 = vcmp.eq.f32.partialorder %v1512, %v1521
    %v1523 = vsel %vm1522, %v119, 16
    %v1524 = vsel %vm778, %v1523, 2147483647
    %v1525 = vand.u32 %v1524, 65535
    %v1526 = vshra.s32 %v1524, 16
    %v1527 = vcvt.s32.f32 %v1525
    %v1528 = vcvt.s32.f32 %v1526
    %1529 = vmin.xlane.f32.xlu0 %v1528
    %v1530 = vpop.xlane.xlu0 %1529
    %vm1531 = vcmp.eq.f32.partialorder %v1528, %v1530
    %v1532 = vsel %vm1531, %v1527, inf
    %1533 = vmin.xlane.f32.xlu0 %v1532
    %v1534 = vpop.xlane.xlu0 %1533
    %v1535 = vcvt.f32.s32 %v1534
    %v1536 = vcvt.f32.s32 %v1530
    %v1537 = vshll.u32 %v1536, 16
    %v1538 = vadd.s32 %v1537, %v1535
    %vm1539 = vcmp.eq.s32.totalorder %v119, %v1538
    %v1540 = vsel %vm1539, 1, 0
    %v1541 = vcvt.s32.f32 %v1540
    %v1542 = vpack.c.bf16 %v1541, %v1541
    %v1544 = vsel %vm138, %v1542, 0
    %1546 = vmatprep.subr.bf16.mxu0 0
    %1547 = vmatpush1.bf16.msra.mxu0 %v787
    %1548 = vmatprep.subr.bf16.mxu0 0
    %1549 = vmatpush1.bf16.msra.mxu0 0
    %1550 = vmatprep.subr.bf16.mxu0 0
    %1551 = vmatpush1.bf16.msra.mxu0 0
    %1552 = vmatprep.subr.bf16.mxu0 0
    %1553 = vmatpush1.bf16.msra.mxu0 0
    %1554 = vmatprep.subr.bf16.mxu0 0
    %1555 = vmatpush1.bf16.msra.mxu0 0
    %1556 = vmatprep.subr.bf16.mxu0 0
    %1557 = vmatpush1.bf16.msra.mxu0 0
    %1558 = vmatprep.subr.bf16.mxu0 0
    %1559 = vmatpush1.bf16.msra.mxu0 0
    %1560 = vmatprep.subr.bf16.mxu0 0
    %1561 = vmatpush1.bf16.msra.mxu0 0
    %1562 = vmatprep.subr.bf16.mxu0 0
    %1563 = vmatpush1.bf16.msra.mxu0 0
    %1564 = vmatprep.subr.bf16.mxu0 0
    %1565 = vmatpush1.bf16.msra.mxu0 0
    %1566 = vmatprep.subr.bf16.mxu0 0
    %1567 = vmatpush1.bf16.msra.mxu0 0
    %1568 = vmatprep.subr.bf16.mxu0 0
    %1569 = vmatpush1.bf16.msra.mxu0 0
    %1570 = vmatprep.subr.bf16.mxu0 0
    %1571 = vmatpush1.bf16.msra.mxu0 0
    %1572 = vmatprep.subr.bf16.mxu0 0
    %1573 = vmatpush1.bf16.msra.mxu0 0
    %1574 = vmatprep.subr.bf16.mxu0 0
    %1575 = vmatpush1.bf16.msra.mxu0 0
    %1576 = vmatprep.subr.bf16.mxu0 0
    %1577 = vmatpush1.bf16.msra.mxu0 0
    %1578 = vmatprep.mubr.bf16.mxu0 0
    %1579 = vmatmul.mubr.bf16.gmra.mrb[0].mxu0 %v1544
    %v1580 = vpop.f32.mrb[0].mxu0
    %v1581 = vadd.f32 %v109, %v1580
    %v1582 = vpop.f32.mrb[0].mxu0
    %v1583 = vpop.f32.mrb[0].mxu0
    %v1584 = vpop.f32.mrb[0].mxu0
    %1585 = vdwg.mxu0
    %1586 = vmatprep.subr.bf16.mxu0 0
    %1587 = vmatpush1.bf16.msra.mxu0 %v843
    %1588 = vmatprep.subr.bf16.mxu0 0
    %1589 = vmatpush1.bf16.msra.mxu0 %v844
    %1590 = vmatprep.subr.bf16.mxu0 0
    %1591 = vmatpush1.bf16.msra.mxu0 0
    %1592 = vmatprep.subr.bf16.mxu0 0
    %1593 = vmatpush1.bf16.msra.mxu0 0
    %1594 = vmatprep.subr.bf16.mxu0 0
    %1595 = vmatpush1.bf16.msra.mxu0 0
    %1596 = vmatprep.subr.bf16.mxu0 0
    %1597 = vmatpush1.bf16.msra.mxu0 0
    %1598 = vmatprep.subr.bf16.mxu0 0
    %1599 = vmatpush1.bf16.msra.mxu0 0
    %1600 = vmatprep.subr.bf16.mxu0 0
    %1601 = vmatpush1.bf16.msra.mxu0 0
    %1602 = vmatprep.subr.bf16.mxu0 0
    %1603 = vmatpush1.bf16.msra.mxu0 0
    %1604 = vmatprep.subr.bf16.mxu0 0
    %1605 = vmatpush1.bf16.msra.mxu0 0
    %1606 = vmatprep.subr.bf16.mxu0 0
    %1607 = vmatpush1.bf16.msra.mxu0 0
    %1608 = vmatprep.subr.bf16.mxu0 0
    %1609 = vmatpush1.bf16.msra.mxu0 0
    %1610 = vmatprep.subr.bf16.mxu0 0
    %1611 = vmatpush1.bf16.msra.mxu0 0
    %1612 = vmatprep.subr.bf16.mxu0 0
    %1613 = vmatpush1.bf16.msra.mxu0 0
    %1614 = vmatprep.subr.bf16.mxu0 0
    %1615 = vmatpush1.bf16.msra.mxu0 0
    %1616 = vmatprep.subr.bf16.mxu0 0
    %1617 = vmatpush1.bf16.msra.mxu0 0
    %1618 = vmatprep.mubr.bf16.mxu0 0
    %1619 = vmatmul.mubr.bf16.gmra.mrb[0].mxu0 %v1475
    %v1620 = vpop.f32.mrb[0].mxu0
    %v1621 = vadd.f32 0.0, %v1620
    %v1622 = vpop.f32.mrb[0].mxu0
    %v1623 = vpop.f32.mrb[0].mxu0
    %v1624 = vpop.f32.mrb[0].mxu0
    %1625 = vdwg.mxu0
    %v1626 = vadd.f32 %v1581, %v1621
    %v1627 = vxor.u32 %v1626, 2147483648
    %v1628 = vmul.f32 %v1627, 1.442695
    %v1629 = vpow.pop %v1628
    %v1630 = vadd.f32 %v1629, 1.0
    %v1631 = vrcp.pop %v1630
    %v1632 = vmul.f32 1.0, %v1631
    %v1633 = vtanh.pop %v1626
    %v1634 = vmul.f32 %v1632, %v1463
    %1636 = vrot.lane.b32.xlu0 %v1633, 64
    %v1637 = vpop.permute.xlu0 %1636
    %v1639 = vmul.f32 %v1632, %v1637
    %1641 = vrot.lane.b32.xlu0 %v1639, 32
    %v1642 = vpop.permute.xlu0 %1641
    %v1644 = vadd.f32 %v1634, %v1642
    %v1645 = vtanh.pop %v1644
    %1647 = vrot.lane.b32.xlu0 %v1645, 64
    %v1648 = vpop.permute.xlu0 %1647
    %v1650 = vmul.f32 %v1632, %v1648
    %v1651 = vpack.c.bf16 %v1650, %v1650
    %1653 = vrot.lane.b32.xlu0 %v1651, 32
    %v1654 = vpop.permute.xlu0 %1653
    %v1656 = vsel %vm198, %v1654, 0
    %1658 = vmatprep.subr.bf16.mxu0 0
    %1659 = vmatpush1.bf16.msra.mxu0 %v927
    %1660 = vmatprep.subr.bf16.mxu0 0
    %1661 = vmatpush1.bf16.msra.mxu0 %v928
    %1662 = vmatprep.subr.bf16.mxu0 0
    %1663 = vmatpush1.bf16.msra.mxu0 0
    %1664 = vmatprep.subr.bf16.mxu0 0
    %1665 = vmatpush1.bf16.msra.mxu0 0
    %1666 = vmatprep.subr.bf16.mxu0 0
    %1667 = vmatpush1.bf16.msra.mxu0 0
    %1668 = vmatprep.subr.bf16.mxu0 0
    %1669 = vmatpush1.bf16.msra.mxu0 0
    %1670 = vmatprep.subr.bf16.mxu0 0
    %1671 = vmatpush1.bf16.msra.mxu0 0
    %1672 = vmatprep.subr.bf16.mxu0 0
    %1673 = vmatpush1.bf16.msra.mxu0 0
    %1674 = vmatprep.subr.bf16.mxu0 0
    %1675 = vmatpush1.bf16.msra.mxu0 0
    %1676 = vmatprep.subr.bf16.mxu0 0
    %1677 = vmatpush1.bf16.msra.mxu0 0
    %1678 = vmatprep.subr.bf16.mxu0 0
    %1679 = vmatpush1.bf16.msra.mxu0 0
    %1680 = vmatprep.subr.bf16.mxu0 0
    %1681 = vmatpush1.bf16.msra.mxu0 0
    %1682 = vmatprep.subr.bf16.mxu0 0
    %1683 = vmatpush1.bf16.msra.mxu0 0
    %1684 = vmatprep.subr.bf16.mxu0 0
    %1685 = vmatpush1.bf16.msra.mxu0 0
    %1686 = vmatprep.subr.bf16.mxu0 0
    %1687 = vmatpush1.bf16.msra.mxu0 0
    %1688 = vmatprep.subr.bf16.mxu0 0
    %1689 = vmatpush1.bf16.msra.mxu0 0
    %1690 = vmatprep.mubr.bf16.mxu0 0
    %1691 = vmatmul.mubr.bf16.gmra.mrb[0].mxu0 %v1656
    %v1692 = vpop.f32.mrb[0].mxu0
    %v1693 = vadd.f32 %v116, %v1692
    %v1694 = vpop.f32.mrb[0].mxu0
    %v1695 = vpop.f32.mrb[0].mxu0
    %v1696 = vpop.f32.mrb[0].mxu0
    %1697 = vdwg.mxu0
    %s1698 = scalar_lea.vmem [#allocation11], 10
    %1699 = vst.msk [vmem:[%s1698] sm:$0x3] %vm778, %v1693
    %v1700 = vsel %vm778, %v1693, -inf
    %1701 = vmax.xlane.f32.xlu0 %v1700
    %v1702 = vpop.xlane.xlu0 %1701
    %vm1703 = vcmp.eq.f32.partialorder %v1693, %v1702
    %v1704 = vsel %vm1703, %v119, 16
    %v1705 = vsel %vm778, %v1704, 2147483647
    %v1706 = vand.u32 %v1705, 65535
    %v1707 = vshra.s32 %v1705, 16
    %v1708 = vcvt.s32.f32 %v1706
    %v1709 = vcvt.s32.f32 %v1707
    %1710 = vmin.xlane.f32.xlu0 %v1709
    %v1711 = vpop.xlane.xlu0 %1710
    %vm1712 = vcmp.eq.f32.partialorder %v1709, %v1711
    %v1713 = vsel %vm1712, %v1708, inf
    %1714 = vmin.xlane.f32.xlu0 %v1713
    %v1715 = vpop.xlane.xlu0 %1714
    %v1716 = vcvt.f32.s32 %v1715
    %v1717 = vcvt.f32.s32 %v1711
    %v1718 = vshll.u32 %v1717, 16
    %v1719 = vadd.s32 %v1718, %v1716
    %vm1720 = vcmp.eq.s32.totalorder %v119, %v1719
    %v1721 = vsel %vm1720, 1, 0
    %v1722 = vcvt.s32.f32 %v1721
    %v1723 = vpack.c.bf16 %v1722, %v1722
    %v1725 = vsel %vm138, %v1723, 0
    %1727 = vmatprep.subr.bf16.mxu0 0
    %1728 = vmatpush1.bf16.msra.mxu0 %v787
    %1729 = vmatprep.subr.bf16.mxu0 0
    %1730 = vmatpush1.bf16.msra.mxu0 0
    %1731 = vmatprep.subr.bf16.mxu0 0
    %1732 = vmatpush1.bf16.msra.mxu0 0
    %1733 = vmatprep.subr.bf16.mxu0 0
    %1734 = vmatpush1.bf16.msra.mxu0 0
    %1735 = vmatprep.subr.bf16.mxu0 0
    %1736 = vmatpush1.bf16.msra.mxu0 0
    %1737 = vmatprep.subr.bf16.mxu0 0
    %1738 = vmatpush1.bf16.msra.mxu0 0
    %1739 = vmatprep.subr.bf16.mxu0 0
    %1740 = vmatpush1.bf16.msra.mxu0 0
    %1741 = vmatprep.subr.bf16.mxu0 0
    %1742 = vmatpush1.bf16.msra.mxu0 0
    %1743 = vmatprep.subr.bf16.mxu0 0
    %1744 = vmatpush1.bf16.msra.mxu0 0
    %1745 = vmatprep.subr.bf16.mxu0 0
    %1746 = vmatpush1.bf16.msra.mxu0 0
    %1747 = vmatprep.subr.bf16.mxu0 0
    %1748 = vmatpush1.bf16.msra.mxu0 0
    %1749 = vmatprep.subr.bf16.mxu0 0
    %1750 = vmatpush1.bf16.msra.mxu0 0
    %1751 = vmatprep.subr.bf16.mxu0 0
    %1752 = vmatpush1.bf16.msra.mxu0 0
    %1753 = vmatprep.subr.bf16.mxu0 0
    %1754 = vmatpush1.bf16.msra.mxu0 0
    %1755 = vmatprep.subr.bf16.mxu0 0
    %1756 = vmatpush1.bf16.msra.mxu0 0
    %1757 = vmatprep.subr.bf16.mxu0 0
    %1758 = vmatpush1.bf16.msra.mxu0 0
    %1759 = vmatprep.mubr.bf16.mxu0 0
    %1760 = vmatmul.mubr.bf16.gmra.mrb[0].mxu0 %v1725
    %v1761 = vpop.f32.mrb[0].mxu0
    %v1762 = vadd.f32 %v109, %v1761
    %v1763 = vpop.f32.mrb[0].mxu0
    %v1764 = vpop.f32.mrb[0].mxu0
    %v1765 = vpop.f32.mrb[0].mxu0
    %1766 = vdwg.mxu0
    %1767 = vmatprep.subr.bf16.mxu0 0
    %1768 = vmatpush1.bf16.msra.mxu0 %v843
    %1769 = vmatprep.subr.bf16.mxu0 0
    %1770 = vmatpush1.bf16.msra.mxu0 %v844
    %1771 = vmatprep.subr.bf16.mxu0 0
    %1772 = vmatpush1.bf16.msra.mxu0 0
    %1773 = vmatprep.subr.bf16.mxu0 0
    %1774 = vmatpush1.bf16.msra.mxu0 0
    %1775 = vmatprep.subr.bf16.mxu0 0
    %1776 = vmatpush1.bf16.msra.mxu0 0
    %1777 = vmatprep.subr.bf16.mxu0 0
    %1778 = vmatpush1.bf16.msra.mxu0 0
    %1779 = vmatprep.subr.bf16.mxu0 0
    %1780 = vmatpush1.bf16.msra.mxu0 0
    %1781 = vmatprep.subr.bf16.mxu0 0
    %1782 = vmatpush1.bf16.msra.mxu0 0
    %1783 = vmatprep.subr.bf16.mxu0 0
    %1784 = vmatpush1.bf16.msra.mxu0 0
    %1785 = vmatprep.subr.bf16.mxu0 0
    %1786 = vmatpush1.bf16.msra.mxu0 0
    %1787 = vmatprep.subr.bf16.mxu0 0
    %1788 = vmatpush1.bf16.msra.mxu0 0
    %1789 = vmatprep.subr.bf16.mxu0 0
    %1790 = vmatpush1.bf16.msra.mxu0 0
    %1791 = vmatprep.subr.bf16.mxu0 0
    %1792 = vmatpush1.bf16.msra.mxu0 0
    %1793 = vmatprep.subr.bf16.mxu0 0
    %1794 = vmatpush1.bf16.msra.mxu0 0
    %1795 = vmatprep.subr.bf16.mxu0 0
    %1796 = vmatpush1.bf16.msra.mxu0 0
    %1797 = vmatprep.subr.bf16.mxu0 0
    %1798 = vmatpush1.bf16.msra.mxu0 0
    %1799 = vmatprep.mubr.bf16.mxu0 0
    %1800 = vmatmul.mubr.bf16.gmra.mrb[0].mxu0 %v1656
    %v1801 = vpop.f32.mrb[0].mxu0
    %v1802 = vadd.f32 0.0, %v1801
    %v1803 = vpop.f32.mrb[0].mxu0
    %v1804 = vpop.f32.mrb[0].mxu0
    %v1805 = vpop.f32.mrb[0].mxu0
    %1806 = vdwg.mxu0
    %v1807 = vadd.f32 %v1762, %v1802
    %v1808 = vxor.u32 %v1807, 2147483648
    %v1809 = vmul.f32 %v1808, 1.442695
    %v1810 = vpow.pop %v1809
    %v1811 = vadd.f32 %v1810, 1.0
    %v1812 = vrcp.pop %v1811
    %v1813 = vmul.f32 1.0, %v1812
    %v1814 = vtanh.pop %v1807
    %v1815 = vmul.f32 %v1813, %v1644
    %1817 = vrot.lane.b32.xlu0 %v1814, 64
    %v1818 = vpop.permute.xlu0 %1817
    %v1820 = vmul.f32 %v1813, %v1818
    %1822 = vrot.lane.b32.xlu0 %v1820, 32
    %v1823 = vpop.permute.xlu0 %1822
    %v1825 = vadd.f32 %v1815, %v1823
    %v1826 = vtanh.pop %v1825
    %1828 = vrot.lane.b32.xlu0 %v1826, 64
    %v1829 = vpop.permute.xlu0 %1828
    %v1831 = vmul.f32 %v1813, %v1829
    %v1832 = vpack.c.bf16 %v1831, %v1831
    %1834 = vrot.lane.b32.xlu0 %v1832, 32
    %v1835 = vpop.permute.xlu0 %1834
    %v1837 = vsel %vm198, %v1835, 0
    %1839 = vmatprep.subr.bf16.mxu0 0
    %1840 = vmatpush1.bf16.msra.mxu0 %v927
    %1841 = vmatprep.subr.bf16.mxu0 0
    %1842 = vmatpush1.bf16.msra.mxu0 %v928
    %1843 = vmatprep.subr.bf16.mxu0 0
    %1844 = vmatpush1.bf16.msra.mxu0 0
    %1845 = vmatprep.subr.bf16.mxu0 0
    %1846 = vmatpush1.bf16.msra.mxu0 0
    %1847 = vmatprep.subr.bf16.mxu0 0
    %1848 = vmatpush1.bf16.msra.mxu0 0
    %1849 = vmatprep.subr.bf16.mxu0 0
    %1850 = vmatpush1.bf16.msra.mxu0 0
    %1851 = vmatprep.subr.bf16.mxu0 0
    %1852 = vmatpush1.bf16.msra.mxu0 0
    %1853 = vmatprep.subr.bf16.mxu0 0
    %1854 = vmatpush1.bf16.msra.mxu0 0
    %1855 = vmatprep.subr.bf16.mxu0 0
    %1856 = vmatpush1.bf16.msra.mxu0 0
    %1857 = vmatprep.subr.bf16.mxu0 0
    %1858 = vmatpush1.bf16.msra.mxu0 0
    %1859 = vmatprep.subr.bf16.mxu0 0
    %1860 = vmatpush1.bf16.msra.mxu0 0
    %1861 = vmatprep.subr.bf16.mxu0 0
    %1862 = vmatpush1.bf16.msra.mxu0 0
    %1863 = vmatprep.subr.bf16.mxu0 0
    %1864 = vmatpush1.bf16.msra.mxu0 0
    %1865 = vmatprep.subr.bf16.mxu0 0
    %1866 = vmatpush1.bf16.msra.mxu0 0
    %1867 = vmatprep.subr.bf16.mxu0 0
    %1868 = vmatpush1.bf16.msra.mxu0 0
    %1869 = vmatprep.subr.bf16.mxu0 0
    %1870 = vmatpush1.bf16.msra.mxu0 0
    %1871 = vmatprep.mubr.bf16.mxu0 0
    %1872 = vmatmul.mubr.bf16.gmra.mrb[0].mxu0 %v1837
    %v1873 = vpop.f32.mrb[0].mxu0
    %v1874 = vadd.f32 %v116, %v1873
    %v1875 = vpop.f32.mrb[0].mxu0
    %v1876 = vpop.f32.mrb[0].mxu0
    %v1877 = vpop.f32.mrb[0].mxu0
    %1878 = vdwg.mxu0
    %s1879 = scalar_lea.vmem [#allocation11], 12
    %1880 = vst.msk [vmem:[%s1879] sm:$0x3] %vm778, %v1874
    %v1881 = vsel %vm778, %v1874, -inf
    %1882 = vmax.xlane.f32.xlu0 %v1881
    %v1883 = vpop.xlane.xlu0 %1882
    %vm1884 = vcmp.eq.f32.partialorder %v1874, %v1883
    %v1885 = vsel %vm1884, %v119, 16
    %v1886 = vsel %vm778, %v1885, 2147483647
    %v1887 = vand.u32 %v1886, 65535
    %v1888 = vshra.s32 %v1886, 16
    %v1889 = vcvt.s32.f32 %v1887
    %v1890 = vcvt.s32.f32 %v1888
    %1891 = vmin.xlane.f32.xlu0 %v1890
    %v1892 = vpop.xlane.xlu0 %1891
    %vm1893 = vcmp.eq.f32.partialorder %v1890, %v1892
    %v1894 = vsel %vm1893, %v1889, inf
    %1895 = vmin.xlane.f32.xlu0 %v1894
    %v1896 = vpop.xlane.xlu0 %1895
    %v1897 = vcvt.f32.s32 %v1896
    %v1898 = vcvt.f32.s32 %v1892
    %v1899 = vshll.u32 %v1898, 16
    %v1900 = vadd.s32 %v1899, %v1897
    %vm1901 = vcmp.eq.s32.totalorder %v119, %v1900
    %v1902 = vsel %vm1901, 1, 0
    %v1903 = vcvt.s32.f32 %v1902
    %v1904 = vpack.c.bf16 %v1903, %v1903
    %v1906 = vsel %vm138, %v1904, 0
    %1908 = vmatprep.subr.bf16.mxu0 0
    %1909 = vmatpush1.bf16.msra.mxu0 %v787
    %1910 = vmatprep.subr.bf16.mxu0 0
    %1911 = vmatpush1.bf16.msra.mxu0 0
    %1912 = vmatprep.subr.bf16.mxu0 0
    %1913 = vmatpush1.bf16.msra.mxu0 0
    %1914 = vmatprep.subr.bf16.mxu0 0
    %1915 = vmatpush1.bf16.msra.mxu0 0
    %1916 = vmatprep.subr.bf16.mxu0 0
    %1917 = vmatpush1.bf16.msra.mxu0 0
    %1918 = vmatprep.subr.bf16.mxu0 0
    %1919 = vmatpush1.bf16.msra.mxu0 0
    %1920 = vmatprep.subr.bf16.mxu0 0
    %1921 = vmatpush1.bf16.msra.mxu0 0
    %1922 = vmatprep.subr.bf16.mxu0 0
    %1923 = vmatpush1.bf16.msra.mxu0 0
    %1924 = vmatprep.subr.bf16.mxu0 0
    %1925 = vmatpush1.bf16.msra.mxu0 0
    %1926 = vmatprep.subr.bf16.mxu0 0
    %1927 = vmatpush1.bf16.msra.mxu0 0
    %1928 = vmatprep.subr.bf16.mxu0 0
    %1929 = vmatpush1.bf16.msra.mxu0 0
    %1930 = vmatprep.subr.bf16.mxu0 0
    %1931 = vmatpush1.bf16.msra.mxu0 0
    %1932 = vmatprep.subr.bf16.mxu0 0
    %1933 = vmatpush1.bf16.msra.mxu0 0
    %1934 = vmatprep.subr.bf16.mxu0 0
    %1935 = vmatpush1.bf16.msra.mxu0 0
    %1936 = vmatprep.subr.bf16.mxu0 0
    %1937 = vmatpush1.bf16.msra.mxu0 0
    %1938 = vmatprep.subr.bf16.mxu0 0
    %1939 = vmatpush1.bf16.msra.mxu0 0
    %1940 = vmatprep.mubr.bf16.mxu0 0
    %1941 = vmatmul.mubr.bf16.gmra.mrb[0].mxu0 %v1906
    %v1942 = vpop.f32.mrb[0].mxu0
    %v1943 = vadd.f32 %v109, %v1942
    %v1944 = vpop.f32.mrb[0].mxu0
    %v1945 = vpop.f32.mrb[0].mxu0
    %v1946 = vpop.f32.mrb[0].mxu0
    %1947 = vdwg.mxu0
    %1948 = vmatprep.subr.bf16.mxu0 0
    %1949 = vmatpush1.bf16.msra.mxu0 %v843
    %1950 = vmatprep.subr.bf16.mxu0 0
    %1951 = vmatpush1.bf16.msra.mxu0 %v844
    %1952 = vmatprep.subr.bf16.mxu0 0
    %1953 = vmatpush1.bf16.msra.mxu0 0
    %1954 = vmatprep.subr.bf16.mxu0 0
    %1955 = vmatpush1.bf16.msra.mxu0 0
    %1956 = vmatprep.subr.bf16.mxu0 0
    %1957 = vmatpush1.bf16.msra.mxu0 0
    %1958 = vmatprep.subr.bf16.mxu0 0
    %1959 = vmatpush1.bf16.msra.mxu0 0
    %1960 = vmatprep.subr.bf16.mxu0 0
    %1961 = vmatpush1.bf16.msra.mxu0 0
    %1962 = vmatprep.subr.bf16.mxu0 0
    %1963 = vmatpush1.bf16.msra.mxu0 0
    %1964 = vmatprep.subr.bf16.mxu0 0
    %1965 = vmatpush1.bf16.msra.mxu0 0
    %1966 = vmatprep.subr.bf16.mxu0 0
    %1967 = vmatpush1.bf16.msra.mxu0 0
    %1968 = vmatprep.subr.bf16.mxu0 0
    %1969 = vmatpush1.bf16.msra.mxu0 0
    %1970 = vmatprep.subr.bf16.mxu0 0
    %1971 = vmatpush1.bf16.msra.mxu0 0
    %1972 = vmatprep.subr.bf16.mxu0 0
    %1973 = vmatpush1.bf16.msra.mxu0 0
    %1974 = vmatprep.subr.bf16.mxu0 0
    %1975 = vmatpush1.bf16.msra.mxu0 0
    %1976 = vmatprep.subr.bf16.mxu0 0
    %1977 = vmatpush1.bf16.msra.mxu0 0
    %1978 = vmatprep.subr.bf16.mxu0 0
    %1979 = vmatpush1.bf16.msra.mxu0 0
    %1980 = vmatprep.mubr.bf16.mxu0 0
    %1981 = vmatmul.mubr.bf16.gmra.mrb[0].mxu0 %v1837
    %v1982 = vpop.f32.mrb[0].mxu0
    %v1983 = vadd.f32 0.0, %v1982
    %v1984 = vpop.f32.mrb[0].mxu0
    %v1985 = vpop.f32.mrb[0].mxu0
    %v1986 = vpop.f32.mrb[0].mxu0
    %1987 = vdwg.mxu0
    %v1988 = vadd.f32 %v1943, %v1983
    %v1989 = vxor.u32 %v1988, 2147483648
    %v1990 = vmul.f32 %v1989, 1.442695
    %v1991 = vpow.pop %v1990
    %v1992 = vadd.f32 %v1991, 1.0
    %v1993 = vrcp.pop %v1992
    %v1994 = vmul.f32 1.0, %v1993
    %v1995 = vtanh.pop %v1988
    %v1996 = vmul.f32 %v1994, %v1825
    %1998 = vrot.lane.b32.xlu0 %v1995, 64
    %v1999 = vpop.permute.xlu0 %1998
    %v2001 = vmul.f32 %v1994, %v1999
    %2003 = vrot.lane.b32.xlu0 %v2001, 32
    %v2004 = vpop.permute.xlu0 %2003
    %v2006 = vadd.f32 %v1996, %v2004
    %v2007 = vtanh.pop %v2006
    %2009 = vrot.lane.b32.xlu0 %v2007, 64
    %v2010 = vpop.permute.xlu0 %2009
    %v2012 = vmul.f32 %v1994, %v2010
    %v2013 = vpack.c.bf16 %v2012, %v2012
    %2015 = vrot.lane.b32.xlu0 %v2013, 32
    %v2016 = vpop.permute.xlu0 %2015
    %v2018 = vsel %vm198, %v2016, 0
    %2020 = vmatprep.subr.bf16.mxu0 0
    %2021 = vmatpush1.bf16.msra.mxu0 %v927
    %2022 = vmatprep.subr.bf16.mxu0 0
    %2023 = vmatpush1.bf16.msra.mxu0 %v928
    %2024 = vmatprep.subr.bf16.mxu0 0
    %2025 = vmatpush1.bf16.msra.mxu0 0
    %2026 = vmatprep.subr.bf16.mxu0 0
    %2027 = vmatpush1.bf16.msra.mxu0 0
    %2028 = vmatprep.subr.bf16.mxu0 0
    %2029 = vmatpush1.bf16.msra.mxu0 0
    %2030 = vmatprep.subr.bf16.mxu0 0
    %2031 = vmatpush1.bf16.msra.mxu0 0
    %2032 = vmatprep.subr.bf16.mxu0 0
    %2033 = vmatpush1.bf16.msra.mxu0 0
    %2034 = vmatprep.subr.bf16.mxu0 0
    %2035 = vmatpush1.bf16.msra.mxu0 0
    %2036 = vmatprep.subr.bf16.mxu0 0
    %2037 = vmatpush1.bf16.msra.mxu0 0
    %2038 = vmatprep.subr.bf16.mxu0 0
    %2039 = vmatpush1.bf16.msra.mxu0 0
    %2040 = vmatprep.subr.bf16.mxu0 0
    %2041 = vmatpush1.bf16.msra.mxu0 0
    %2042 = vmatprep.subr.bf16.mxu0 0
    %2043 = vmatpush1.bf16.msra.mxu0 0
    %2044 = vmatprep.subr.bf16.mxu0 0
    %2045 = vmatpush1.bf16.msra.mxu0 0
    %2046 = vmatprep.subr.bf16.mxu0 0
    %2047 = vmatpush1.bf16.msra.mxu0 0
    %2048 = vmatprep.subr.bf16.mxu0 0
    %2049 = vmatpush1.bf16.msra.mxu0 0
    %2050 = vmatprep.subr.bf16.mxu0 0
    %2051 = vmatpush1.bf16.msra.mxu0 0
    %2052 = vmatprep.mubr.bf16.mxu0 0
    %2053 = vmatmul.mubr.bf16.gmra.mrb[0].mxu0 %v2018
    %v2054 = vpop.f32.mrb[0].mxu0
    %v2055 = vadd.f32 %v116, %v2054
    %v2056 = vpop.f32.mrb[0].mxu0
    %v2057 = vpop.f32.mrb[0].mxu0
    %v2058 = vpop.f32.mrb[0].mxu0
    %2059 = vdwg.mxu0
    %s2060 = scalar_lea.vmem [#allocation11], 14
    %2061 = vst.msk [vmem:[%s2060] sm:$0x3] %vm778, %v2055
    // Predicated region
    $region58: #{tpu_custom_call.1} parent=1 // pred_check
      _
    $region59: #{tpu_custom_call.1} parent=1 // pred_check_branch
      %2063 = sbr.rel (0) target = $region61
    $region60: #{tpu_custom_call.1} parent=1 // pred_region
      %s2065 = ssub.s32 256, 256
      %2066 = vsyncadd [#allocation5], %s2065
      %s2067 = sshll.u32 [#allocation11], 4
      %s2068 = int_to_ptr.vmem [resolvable:$true] %s2067
      %2073 = dma.vmem_to_hbm [thread:$0]  %s2068, 256, %s10, [#allocation5], 32, 32, 2
    $region61: #{tpu_custom_call.1} parent=1 // pred_fallthru
      _
    // Predicated region
    $region62: #{tpu_custom_call.1} parent=1 // pred_check
      _
    $region63: #{tpu_custom_call.1} parent=1 // pred_check_branch
      %2075 = sbr.rel (0) target = $region65
    $region64: #{tpu_custom_call.1} parent=1 // pred_region
      %2076 = dma.done [#allocation5], 256
    $region65: #{tpu_custom_call.1} parent=1 // pred_fallthru
      _
    %2077 = vsyncpa [#allocation4], 1
    %2078 = vsyncpa [#allocation7], 1
    %2079 = vsyncpa [#allocation10], 1
    %2080 = vsyncpa [#allocation5], 1

</llo_original>
